<compile_context>
chip_gen: v7x
topology: tpu7x:2x2x1
jax: 0.10.0
libtpu: 0.0.40
codegen_flags: <defaults>
</compile_context>

<pallas_src>
import numpy as np
import jax
import jax.numpy as jnp
from jax.experimental import pallas as pl
from jax.experimental.pallas import tpu as pltpu  # noqa: F401  (no scratch/DMA needed at this size)

# Small, module-consistent config
INPUT_DIM = 8    # input_dim
HIDDEN_DIM = 32  # hidden_dim == n_out
N_LAYERS = 2     # n_layers
BATCH = 4        # batch_size
SEQ_LEN = 8      # seq_len


def embedder_kernel(x_ref, h0_ref, wnorm_ref, bnorm_ref, wi_ref, wh_ref,
                    bif_ref, bhn_ref, wfc_ref, bfc_ref, wfin_ref, bfin_ref,
                    out_ref, hout_ref):
    f32 = jnp.float32
    bf16 = jnp.bfloat16

    L, B, H = hout_ref.shape
    TB, D = x_ref.shape
    T = TB // B

    # Fused, padded gate weights (bf16, prepared host-side): (L, H, 128), gate order r|z|n|pad.
    wi = wi_ref[...]
    wh = wh_ref[...]
    bif = bif_ref[...]      # (L, 1, 128): [bi_r + bh_r | bi_z + bh_z | bi_n | 0]
    bhn = bhn_ref[...]      # (L, 1, H):   bh_n (applied inside r * (...))

    # out0 = fc_norm(x); out1 = sigmoid(out0) (== out_copy). x arrives time-major (T*B, D).
    out1 = jax.nn.sigmoid(
        jnp.dot(x_ref[...].astype(bf16), wnorm_ref[...], preferred_element_type=f32)
        + bnorm_ref[...])                                  # (T*B, H) f32

    def gru_stack(x2d, h_init):
        """x2d: (T*B, H) f32 value (time-major rows). h_init: list of L (B, H) values.

        Returns (last_layer_2d, last_layer_per_t_list, per_layer_final_hidden_list)."""
        layer2d = x2d
        h_fin = []
        outs = None
        for l in range(L):
            # Input-side projection for the whole layer: one well-shaped MXU op,
            # folded biases included. Only h @ Wh_fused remains on the serial chain.
            gi = (jnp.dot(layer2d.astype(bf16), wi[l], preferred_element_type=f32)
                  + bif[l]).reshape(T, B, -1)              # (T, B, 128)
            whl = wh[l]                                    # (H, 128) bf16
            bhn_l = bhn[l]                                 # (1, H)
            h = h_init[l]                                  # (B, H) f32
            outs = []
            for t in range(T):                             # static unroll (T known at trace time)
                gh = jnp.dot(h.astype(bf16), whl, preferred_element_type=f32)  # (B, 128)
                rz = jax.nn.sigmoid(gi[t, :, :2 * H] + gh[:, :2 * H])          # fused r|z sigmoid
                r = rz[:, :H]
                z = rz[:, H:2 * H]
                n = jnp.tanh(gi[t, :, 2 * H:3 * H] + r * (gh[:, 2 * H:3 * H] + bhn_l))
                h = (1.0 - z) * n + z * h
                outs.append(h)
            layer2d = jnp.stack(outs, axis=0).reshape(TB, H)   # (T*B, H) for the next layer
            h_fin.append(h)
        return layer2d, outs, h_fin

    h0 = [h0_ref[l] for l in range(L)]

    # out2, h1 = GRU(out1, h0)
    out2_2d, _, h1 = gru_stack(out1, h0)

    # out3 = sigmoid(fc(out2)); out4 = out3 + out_copy
    out3 = jax.nn.sigmoid(
        jnp.dot(out2_2d.astype(bf16), wfc_ref[...], preferred_element_type=f32)
        + bfc_ref[...])
    out4 = out3 + out1
    # TODO(synk): original PyTorch forward feeds undefined `x4` to the second GRU call;
    # implemented as `out4`, the only consistent interpretation.
    _, out5_list, h2 = gru_stack(out4, h1)

    for l in range(L):
        hout_ref[l] = h2[l]

    # out6 = fc_final(tanh(flatten(out5, start_dim=1))) as VPU multiply + lane reduce.
    wfin = wfin_ref[...]                                   # (T, 1, H)
    acc = jnp.zeros((B, H), f32)
    for t in range(T):
        acc = acc + jnp.tanh(out5_list[t]) * wfin[t]
    out_ref[...] = jnp.sum(acc, axis=-1, keepdims=True) + bfin_ref[...]   # out7: (B, 1)


def prepare_fused_params(p):
    """Host-side gate fusion / padding / bias folding / bf16 casts for the kernel."""
    L, _, H, _ = p['wi'].shape
    T = p['w_fin'].shape[0]
    GP = 128  # pad fused 3H gate dim (96) to a full 128-lane tile

    def pad_gates(w):  # (L, 3, H, H) -> (L, H, GP), gate order r|z|n|0
        wcat = jnp.concatenate([w[:, 0], w[:, 1], w[:, 2]], axis=-1)   # (L, H, 3H)
        return jnp.pad(wcat, ((0, 0), (0, 0), (0, GP - 3 * H)))

    bi, bh = p['bi'], p['bh']
    # r/z biases fold (bi+bh); n keeps bi_n here, bh_n is applied inside r*(...).
    b_cat = jnp.concatenate([bi[:, 0] + bh[:, 0], bi[:, 1] + bh[:, 1], bi[:, 2]], axis=-1)
    bif = jnp.pad(b_cat, ((0, 0), (0, GP - 3 * H)))[:, None, :]        # (L, 1, GP)

    return {
        'w_norm': p['w_norm'].astype(jnp.bfloat16),
        'b_norm': p['b_norm'],
        'wi_f': pad_gates(p['wi']).astype(jnp.bfloat16),               # (L, H, GP)
        'wh_f': pad_gates(p['wh']).astype(jnp.bfloat16),               # (L, H, GP)
        'bi_f': bif,
        'bhn': bh[:, 2][:, None, :],                                   # (L, 1, H)
        'w_fc': p['w_fc'].astype(jnp.bfloat16),
        'b_fc': p['b_fc'],
        'w_fin': jnp.transpose(p['w_fin'], (0, 2, 1)),                 # (T, 1, H)
        'b_fin': p['b_fin'],
    }


@jax.jit
def embedder_forward(x, h0, fp):
    B, T, D = x.shape
    L, _, H = h0.shape
    x_tm = jnp.transpose(x, (1, 0, 2)).reshape(T * B, D)   # time-major rows for the kernel
    out, h_out = pl.pallas_call(
        embedder_kernel,
        out_shape=(jax.ShapeDtypeStruct((B, 1), jnp.float32),
                   jax.ShapeDtypeStruct((L, B, H), jnp.float32)),
    )(x_tm, h0,
      fp['w_norm'], fp['b_norm'],
      fp['wi_f'], fp['wh_f'], fp['bi_f'], fp['bhn'],
      fp['w_fc'], fp['b_fc'],
      fp['w_fin'], fp['b_fin'])
    return out, h_out


def reference_forward(x, h0, p):
    """Pure-JAX batch-major f32 reference (HIGHEST precision) mirroring the PyTorch forward."""
    B, T, D = x.shape
    L, _, H = h0.shape
    sig = jax.nn.sigmoid
    hp = jax.lax.Precision.HIGHEST
    out1 = sig(jnp.einsum('btd,dh->bth', x, p['w_norm'], precision=hp) + p['b_norm'])

    def gru(inp, h_init):
        layer_in = inp
        hs = []
        for l in range(L):
            h = h_init[l]
            seq = []
            for t in range(T):
                xt = layer_in[:, t, :]
                r = sig(jnp.dot(xt, p['wi'][l, 0], precision=hp) + p['bi'][l, 0]
                        + jnp.dot(h, p['wh'][l, 0], precision=hp) + p['bh'][l, 0])
                z = sig(jnp.dot(xt, p['wi'][l, 1], precision=hp) + p['bi'][l, 1]
                        + jnp.dot(h, p['wh'][l, 1], precision=hp) + p['bh'][l, 1])
                n = jnp.tanh(jnp.dot(xt, p['wi'][l, 2], precision=hp) + p['bi'][l, 2]
                             + r * (jnp.dot(h, p['wh'][l, 2], precision=hp) + p['bh'][l, 2]))
                h = (1.0 - z) * n + z * h
                seq.append(h)
            layer_in = jnp.stack(seq, axis=1)
            hs.append(h)
        return layer_in, jnp.stack(hs, axis=0)

    out2, h1 = gru(out1, h0)
    out3 = sig(jnp.einsum('bth,hk->btk', out2, p['w_fc'], precision=hp) + p['b_fc'])
    out4 = out3 + out1
    out5, h2 = gru(out4, h1)
    flat = jnp.tanh(out5).reshape(B, T * H)
    out6 = jnp.dot(flat, p['w_fin'].reshape(T * H, 1), precision=hp) + p['b_fin']
    return out6, h2


if __name__ == "__main__":
    key = jax.random.PRNGKey(0)
    ks = jax.random.split(key, 12)

    def u(k_, shape, bound):
        return jax.random.uniform(k_, shape, jnp.float32, -bound, bound)

    kd = 1.0 / float(np.sqrt(INPUT_DIM))
    kh = 1.0 / float(np.sqrt(HIDDEN_DIM))
    kf = 1.0 / float(np.sqrt(HIDDEN_DIM * SEQ_LEN))

    params = {
        'w_norm': u(ks[0], (INPUT_DIM, HIDDEN_DIM), kd),                    # fc_norm
        'b_norm': u(ks[1], (1, HIDDEN_DIM), kd),
        'wi':     u(ks[2], (N_LAYERS, 3, HIDDEN_DIM, HIDDEN_DIM), kh),      # GRU W_i{r,z,n}
        'wh':     u(ks[3], (N_LAYERS, 3, HIDDEN_DIM, HIDDEN_DIM), kh),      # GRU W_h{r,z,n}
        'bi':     u(ks[4], (N_LAYERS, 3, HIDDEN_DIM), kh),
        'bh':     u(ks[5], (N_LAYERS, 3, HIDDEN_DIM), kh),
        'w_fc':   u(ks[6], (HIDDEN_DIM, HIDDEN_DIM), kh),                   # fc
        'b_fc':   u(ks[7], (1, HIDDEN_DIM), kh),
        'w_fin':  u(ks[8], (SEQ_LEN, HIDDEN_DIM, 1), kf),                   # fc_final
        'b_fin':  u(ks[9], (1, 1), kf),
    }

    x = jax.random.normal(ks[10], (BATCH, SEQ_LEN, INPUT_DIM), jnp.float32)
    h0 = jnp.zeros((N_LAYERS, BATCH, HIDDEN_DIM), jnp.float32)              # init_hidden()

    fused = prepare_fused_params(params)
    out, h_out = embedder_forward(x, h0, fused)
    jax.block_until_ready((out, h_out))

    ref_out, ref_h = reference_forward(x, h0, params)
    assert out.shape == (BATCH, 1) and h_out.shape == (N_LAYERS, BATCH, HIDDEN_DIM)
    # Tolerance reflects bf16-operand / f32-accumulate MXU matmuls over the 32-step
    # recurrence vs. the full-f32 (HIGHEST precision) reference.
    np.testing.assert_allclose(np.asarray(out), np.asarray(ref_out), rtol=1e-2, atol=1e-2)
    np.testing.assert_allclose(np.asarray(h_out), np.asarray(ref_h), rtol=1e-2, atol=1e-2)
    print("KERNEL_OK")
</pallas_src>

<mosaic_0001>
module attributes {stable_mosaic.version = 11 : i64} {
  func.func @embedder_kernel(%arg0: memref<32x8xf32, #tpu.memory_space<vmem>>, %arg1: memref<2x4x32xf32, #tpu.memory_space<vmem>>, %arg2: memref<8x32xbf16, #tpu.memory_space<vmem>>, %arg3: memref<1x32xf32, #tpu.memory_space<vmem>>, %arg4: memref<2x32x128xbf16, #tpu.memory_space<vmem>>, %arg5: memref<2x32x128xbf16, #tpu.memory_space<vmem>>, %arg6: memref<2x1x128xf32, #tpu.memory_space<vmem>>, %arg7: memref<2x1x32xf32, #tpu.memory_space<vmem>>, %arg8: memref<32x32xbf16, #tpu.memory_space<vmem>>, %arg9: memref<1x32xf32, #tpu.memory_space<vmem>>, %arg10: memref<8x1x32xf32, #tpu.memory_space<vmem>>, %arg11: memref<1x1xf32, #tpu.memory_space<vmem>>, %arg12: memref<4x1xf32, #tpu.memory_space<vmem>>, %arg13: memref<2x4x32xf32, #tpu.memory_space<vmem>>) attributes {dimension_semantics = [], scalar_prefetch = 0 : i64, scratch_operands = 0 : i64, tpu.core_type = #tpu.core_type<tc>} {
    %c0 = arith.constant 0 : index
    %c0_0 = arith.constant 0 : index
    %c0_1 = arith.constant 0 : index
    %0 = vector.load %arg4[%c0, %c0_0, %c0_1] : memref<2x32x128xbf16, #tpu.memory_space<vmem>>, vector<2x32x128xbf16>
    %c0_2 = arith.constant 0 : index
    %c0_3 = arith.constant 0 : index
    %c0_4 = arith.constant 0 : index
    %1 = vector.load %arg5[%c0_2, %c0_3, %c0_4] : memref<2x32x128xbf16, #tpu.memory_space<vmem>>, vector<2x32x128xbf16>
    %c0_5 = arith.constant 0 : index
    %c0_6 = arith.constant 0 : index
    %c0_7 = arith.constant 0 : index
    %2 = vector.load %arg6[%c0_5, %c0_6, %c0_7] : memref<2x1x128xf32, #tpu.memory_space<vmem>>, vector<2x1x128xf32>
    %c0_8 = arith.constant 0 : index
    %c0_9 = arith.constant 0 : index
    %c0_10 = arith.constant 0 : index
    %3 = vector.load %arg7[%c0_8, %c0_9, %c0_10] : memref<2x1x32xf32, #tpu.memory_space<vmem>>, vector<2x1x32xf32>
    %c0_11 = arith.constant 0 : index
    %c0_12 = arith.constant 0 : index
    %4 = vector.load %arg0[%c0_11, %c0_12] : memref<32x8xf32, #tpu.memory_space<vmem>>, vector<32x8xf32>
    %5 = arith.truncf %4 : vector<32x8xf32> to vector<32x8xbf16>
    %c0_13 = arith.constant 0 : index
    %c0_14 = arith.constant 0 : index
    %6 = vector.load %arg2[%c0_13, %c0_14] : memref<8x32xbf16, #tpu.memory_space<vmem>>, vector<8x32xbf16>
    %cst = arith.constant dense<0.000000e+00> : vector<32x32xf32>
    %7 = tpu.matmul %5, %6, %cst {dimension_numbers = #tpu.dot_dimension_numbers<[1], [0], [0], [1], [0, 0, 1, 1], [], []>} : vector<32x8xbf16>, vector<8x32xbf16>, vector<32x32xf32> -> vector<32x32xf32>
    %c0_15 = arith.constant 0 : index
    %c0_16 = arith.constant 0 : index
    %8 = vector.load %arg3[%c0_15, %c0_16] : memref<1x32xf32, #tpu.memory_space<vmem>>, vector<1x32xf32>
    %9 = vector.broadcast %8 : vector<1x32xf32> to vector<32x32xf32>
    %10 = arith.addf %7, %9 : vector<32x32xf32>
    %11 = arith.negf %10 : vector<32x32xf32>
    %12 = math.exp %11 : vector<32x32xf32>
    %cst_17 = arith.constant 1.000000e+00 : f32
    %13 = vector.broadcast %cst_17 : f32 to vector<32x32xf32>
    %14 = arith.addf %13, %12 : vector<32x32xf32>
    %15 = arith.divf %13, %14 : vector<32x32xf32>
    %c0_18 = arith.constant 0 : index
    %c0_19 = arith.constant 0 : index
    %c0_20 = arith.constant 0 : index
    %16 = vector.load %arg1[%c0_18, %c0_19, %c0_20] : memref<2x4x32xf32, #tpu.memory_space<vmem>>, vector<1x4x32xf32>
    %17 = vector.shape_cast %16 : vector<1x4x32xf32> to vector<4x32xf32>
    %c1 = arith.constant 1 : index
    %c0_21 = arith.constant 0 : index
    %c0_22 = arith.constant 0 : index
    %18 = vector.load %arg1[%c1, %c0_21, %c0_22] : memref<2x4x32xf32, #tpu.memory_space<vmem>>, vector<1x4x32xf32>
    %19 = vector.shape_cast %18 : vector<1x4x32xf32> to vector<4x32xf32>
    %20 = arith.truncf %15 : vector<32x32xf32> to vector<32x32xbf16>
    %21 = vector.extract_strided_slice %0 {offsets = [0, 0, 0], sizes = [1, 32, 128], strides = [1, 1, 1]} : vector<2x32x128xbf16> to vector<1x32x128xbf16>
    %22 = vector.shape_cast %21 : vector<1x32x128xbf16> to vector<32x128xbf16>
    %cst_23 = arith.constant dense<0.000000e+00> : vector<32x128xf32>
    %23 = tpu.matmul %20, %22, %cst_23 {dimension_numbers = #tpu.dot_dimension_numbers<[1], [0], [0], [1], [0, 0, 1, 1], [], []>} : vector<32x32xbf16>, vector<32x128xbf16>, vector<32x128xf32> -> vector<32x128xf32>
    %24 = vector.extract_strided_slice %2 {offsets = [0, 0, 0], sizes = [1, 1, 128], strides = [1, 1, 1]} : vector<2x1x128xf32> to vector<1x1x128xf32>
    %25 = vector.shape_cast %24 : vector<1x1x128xf32> to vector<1x128xf32>
    %26 = vector.broadcast %25 : vector<1x128xf32> to vector<32x128xf32>
    %27 = arith.addf %23, %26 : vector<32x128xf32>
    %28 = vector.shape_cast %27 : vector<32x128xf32> to vector<8x4x128xf32>
    %29 = vector.extract_strided_slice %1 {offsets = [0, 0, 0], sizes = [1, 32, 128], strides = [1, 1, 1]} : vector<2x32x128xbf16> to vector<1x32x128xbf16>
    %30 = vector.shape_cast %29 : vector<1x32x128xbf16> to vector<32x128xbf16>
    %31 = vector.extract_strided_slice %3 {offsets = [0, 0, 0], sizes = [1, 1, 32], strides = [1, 1, 1]} : vector<2x1x32xf32> to vector<1x1x32xf32>
    %32 = vector.shape_cast %31 : vector<1x1x32xf32> to vector<1x32xf32>
    %33 = arith.truncf %17 : vector<4x32xf32> to vector<4x32xbf16>
    %cst_24 = arith.constant dense<0.000000e+00> : vector<4x128xf32>
    %34 = tpu.matmul %33, %30, %cst_24 {dimension_numbers = #tpu.dot_dimension_numbers<[1], [0], [0], [1], [0, 0, 1, 1], [], []>} : vector<4x32xbf16>, vector<32x128xbf16>, vector<4x128xf32> -> vector<4x128xf32>
    %35 = vector.extract_strided_slice %28 {offsets = [0, 0, 0], sizes = [1, 4, 64], strides = [1, 1, 1]} : vector<8x4x128xf32> to vector<1x4x64xf32>
    %36 = vector.shape_cast %35 : vector<1x4x64xf32> to vector<4x64xf32>
    %37 = vector.extract_strided_slice %34 {offsets = [0, 0], sizes = [4, 64], strides = [1, 1]} : vector<4x128xf32> to vector<4x64xf32>
    %38 = arith.addf %36, %37 : vector<4x64xf32>
    %39 = arith.negf %38 : vector<4x64xf32>
    %40 = math.exp %39 : vector<4x64xf32>
    %cst_25 = arith.constant 1.000000e+00 : f32
    %41 = vector.broadcast %cst_25 : f32 to vector<4x64xf32>
    %42 = arith.addf %41, %40 : vector<4x64xf32>
    %43 = arith.divf %41, %42 : vector<4x64xf32>
    %44 = vector.extract_strided_slice %43 {offsets = [0, 0], sizes = [4, 32], strides = [1, 1]} : vector<4x64xf32> to vector<4x32xf32>
    %45 = vector.extract_strided_slice %43 {offsets = [0, 32], sizes = [4, 32], strides = [1, 1]} : vector<4x64xf32> to vector<4x32xf32>
    %46 = vector.extract_strided_slice %28 {offsets = [0, 0, 64], sizes = [1, 4, 32], strides = [1, 1, 1]} : vector<8x4x128xf32> to vector<1x4x32xf32>
    %47 = vector.shape_cast %46 : vector<1x4x32xf32> to vector<4x32xf32>
    %48 = vector.extract_strided_slice %34 {offsets = [0, 64], sizes = [4, 32], strides = [1, 1]} : vector<4x128xf32> to vector<4x32xf32>
    %49 = vector.broadcast %32 : vector<1x32xf32> to vector<4x32xf32>
    %50 = arith.addf %48, %49 : vector<4x32xf32>
    %51 = arith.mulf %44, %50 : vector<4x32xf32>
    %52 = arith.addf %47, %51 : vector<4x32xf32>
    %53 = math.tanh %52 : vector<4x32xf32>
    %cst_26 = arith.constant 1.000000e+00 : f32
    %54 = vector.broadcast %cst_26 : f32 to vector<4x32xf32>
    %55 = arith.subf %54, %45 : vector<4x32xf32>
    %56 = arith.mulf %55, %53 : vector<4x32xf32>
    %57 = arith.mulf %45, %17 : vector<4x32xf32>
    %58 = arith.addf %56, %57 : vector<4x32xf32>
    %59 = arith.truncf %58 : vector<4x32xf32> to vector<4x32xbf16>
    %cst_27 = arith.constant dense<0.000000e+00> : vector<4x128xf32>
    %60 = tpu.matmul %59, %30, %cst_27 {dimension_numbers = #tpu.dot_dimension_numbers<[1], [0], [0], [1], [0, 0, 1, 1], [], []>} : vector<4x32xbf16>, vector<32x128xbf16>, vector<4x128xf32> -> vector<4x128xf32>
    %61 = vector.extract_strided_slice %28 {offsets = [1, 0, 0], sizes = [1, 4, 64], strides = [1, 1, 1]} : vector<8x4x128xf32> to vector<1x4x64xf32>
    %62 = vector.shape_cast %61 : vector<1x4x64xf32> to vector<4x64xf32>
    %63 = vector.extract_strided_slice %60 {offsets = [0, 0], sizes = [4, 64], strides = [1, 1]} : vector<4x128xf32> to vector<4x64xf32>
    %64 = arith.addf %62, %63 : vector<4x64xf32>
    %65 = arith.negf %64 : vector<4x64xf32>
    %66 = math.exp %65 : vector<4x64xf32>
    %cst_28 = arith.constant 1.000000e+00 : f32
    %67 = vector.broadcast %cst_28 : f32 to vector<4x64xf32>
    %68 = arith.addf %67, %66 : vector<4x64xf32>
    %69 = arith.divf %67, %68 : vector<4x64xf32>
    %70 = vector.extract_strided_slice %69 {offsets = [0, 0], sizes = [4, 32], strides = [1, 1]} : vector<4x64xf32> to vector<4x32xf32>
    %71 = vector.extract_strided_slice %69 {offsets = [0, 32], sizes = [4, 32], strides = [1, 1]} : vector<4x64xf32> to vector<4x32xf32>
    %72 = vector.extract_strided_slice %28 {offsets = [1, 0, 64], sizes = [1, 4, 32], strides = [1, 1, 1]} : vector<8x4x128xf32> to vector<1x4x32xf32>
    %73 = vector.shape_cast %72 : vector<1x4x32xf32> to vector<4x32xf32>
    %74 = vector.extract_strided_slice %60 {offsets = [0, 64], sizes = [4, 32], strides = [1, 1]} : vector<4x128xf32> to vector<4x32xf32>
    %75 = vector.broadcast %32 : vector<1x32xf32> to vector<4x32xf32>
    %76 = arith.addf %74, %75 : vector<4x32xf32>
    %77 = arith.mulf %70, %76 : vector<4x32xf32>
    %78 = arith.addf %73, %77 : vector<4x32xf32>
    %79 = math.tanh %78 : vector<4x32xf32>
    %cst_29 = arith.constant 1.000000e+00 : f32
    %80 = vector.broadcast %cst_29 : f32 to vector<4x32xf32>
    %81 = arith.subf %80, %71 : vector<4x32xf32>
    %82 = arith.mulf %81, %79 : vector<4x32xf32>
    %83 = arith.mulf %71, %58 : vector<4x32xf32>
    %84 = arith.addf %82, %83 : vector<4x32xf32>
    %85 = arith.truncf %84 : vector<4x32xf32> to vector<4x32xbf16>
    %cst_30 = arith.constant dense<0.000000e+00> : vector<4x128xf32>
    %86 = tpu.matmul %85, %30, %cst_30 {dimension_numbers = #tpu.dot_dimension_numbers<[1], [0], [0], [1], [0, 0, 1, 1], [], []>} : vector<4x32xbf16>, vector<32x128xbf16>, vector<4x128xf32> -> vector<4x128xf32>
    %87 = vector.extract_strided_slice %28 {offsets = [2, 0, 0], sizes = [1, 4, 64], strides = [1, 1, 1]} : vector<8x4x128xf32> to vector<1x4x64xf32>
    %88 = vector.shape_cast %87 : vector<1x4x64xf32> to vector<4x64xf32>
    %89 = vector.extract_strided_slice %86 {offsets = [0, 0], sizes = [4, 64], strides = [1, 1]} : vector<4x128xf32> to vector<4x64xf32>
    %90 = arith.addf %88, %89 : vector<4x64xf32>
    %91 = arith.negf %90 : vector<4x64xf32>
    %92 = math.exp %91 : vector<4x64xf32>
    %cst_31 = arith.constant 1.000000e+00 : f32
    %93 = vector.broadcast %cst_31 : f32 to vector<4x64xf32>
    %94 = arith.addf %93, %92 : vector<4x64xf32>
    %95 = arith.divf %93, %94 : vector<4x64xf32>
    %96 = vector.extract_strided_slice %95 {offsets = [0, 0], sizes = [4, 32], strides = [1, 1]} : vector<4x64xf32> to vector<4x32xf32>
    %97 = vector.extract_strided_slice %95 {offsets = [0, 32], sizes = [4, 32], strides = [1, 1]} : vector<4x64xf32> to vector<4x32xf32>
    %98 = vector.extract_strided_slice %28 {offsets = [2, 0, 64], sizes = [1, 4, 32], strides = [1, 1, 1]} : vector<8x4x128xf32> to vector<1x4x32xf32>
    %99 = vector.shape_cast %98 : vector<1x4x32xf32> to vector<4x32xf32>
    %100 = vector.extract_strided_slice %86 {offsets = [0, 64], sizes = [4, 32], strides = [1, 1]} : vector<4x128xf32> to vector<4x32xf32>
    %101 = vector.broadcast %32 : vector<1x32xf32> to vector<4x32xf32>
    %102 = arith.addf %100, %101 : vector<4x32xf32>
    %103 = arith.mulf %96, %102 : vector<4x32xf32>
    %104 = arith.addf %99, %103 : vector<4x32xf32>
    %105 = math.tanh %104 : vector<4x32xf32>
    %cst_32 = arith.constant 1.000000e+00 : f32
    %106 = vector.broadcast %cst_32 : f32 to vector<4x32xf32>
    %107 = arith.subf %106, %97 : vector<4x32xf32>
    %108 = arith.mulf %107, %105 : vector<4x32xf32>
    %109 = arith.mulf %97, %84 : vector<4x32xf32>
    %110 = arith.addf %108, %109 : vector<4x32xf32>
    %111 = arith.truncf %110 : vector<4x32xf32> to vector<4x32xbf16>
    %cst_33 = arith.constant dense<0.000000e+00> : vector<4x128xf32>
    %112 = tpu.matmul %111, %30, %cst_33 {dimension_numbers = #tpu.dot_dimension_numbers<[1], [0], [0], [1], [0, 0, 1, 1], [], []>} : vector<4x32xbf16>, vector<32x128xbf16>, vector<4x128xf32> -> vector<4x128xf32>
    %113 = vector.extract_strided_slice %28 {offsets = [3, 0, 0], sizes = [1, 4, 64], strides = [1, 1, 1]} : vector<8x4x128xf32> to vector<1x4x64xf32>
    %114 = vector.shape_cast %113 : vector<1x4x64xf32> to vector<4x64xf32>
    %115 = vector.extract_strided_slice %112 {offsets = [0, 0], sizes = [4, 64], strides = [1, 1]} : vector<4x128xf32> to vector<4x64xf32>
    %116 = arith.addf %114, %115 : vector<4x64xf32>
    %117 = arith.negf %116 : vector<4x64xf32>
    %118 = math.exp %117 : vector<4x64xf32>
    %cst_34 = arith.constant 1.000000e+00 : f32
    %119 = vector.broadcast %cst_34 : f32 to vector<4x64xf32>
    %120 = arith.addf %119, %118 : vector<4x64xf32>
    %121 = arith.divf %119, %120 : vector<4x64xf32>
    %122 = vector.extract_strided_slice %121 {offsets = [0, 0], sizes = [4, 32], strides = [1, 1]} : vector<4x64xf32> to vector<4x32xf32>
    %123 = vector.extract_strided_slice %121 {offsets = [0, 32], sizes = [4, 32], strides = [1, 1]} : vector<4x64xf32> to vector<4x32xf32>
    %124 = vector.extract_strided_slice %28 {offsets = [3, 0, 64], sizes = [1, 4, 32], strides = [1, 1, 1]} : vector<8x4x128xf32> to vector<1x4x32xf32>
    %125 = vector.shape_cast %124 : vector<1x4x32xf32> to vector<4x32xf32>
    %126 = vector.extract_strided_slice %112 {offsets = [0, 64], sizes = [4, 32], strides = [1, 1]} : vector<4x128xf32> to vector<4x32xf32>
    %127 = vector.broadcast %32 : vector<1x32xf32> to vector<4x32xf32>
    %128 = arith.addf %126, %127 : vector<4x32xf32>
    %129 = arith.mulf %122, %128 : vector<4x32xf32>
    %130 = arith.addf %125, %129 : vector<4x32xf32>
    %131 = math.tanh %130 : vector<4x32xf32>
    %cst_35 = arith.constant 1.000000e+00 : f32
    %132 = vector.broadcast %cst_35 : f32 to vector<4x32xf32>
    %133 = arith.subf %132, %123 : vector<4x32xf32>
    %134 = arith.mulf %133, %131 : vector<4x32xf32>
    %135 = arith.mulf %123, %110 : vector<4x32xf32>
    %136 = arith.addf %134, %135 : vector<4x32xf32>
    %137 = arith.truncf %136 : vector<4x32xf32> to vector<4x32xbf16>
    %cst_36 = arith.constant dense<0.000000e+00> : vector<4x128xf32>
    %138 = tpu.matmul %137, %30, %cst_36 {dimension_numbers = #tpu.dot_dimension_numbers<[1], [0], [0], [1], [0, 0, 1, 1], [], []>} : vector<4x32xbf16>, vector<32x128xbf16>, vector<4x128xf32> -> vector<4x128xf32>
    %139 = vector.extract_strided_slice %28 {offsets = [4, 0, 0], sizes = [1, 4, 64], strides = [1, 1, 1]} : vector<8x4x128xf32> to vector<1x4x64xf32>
    %140 = vector.shape_cast %139 : vector<1x4x64xf32> to vector<4x64xf32>
    %141 = vector.extract_strided_slice %138 {offsets = [0, 0], sizes = [4, 64], strides = [1, 1]} : vector<4x128xf32> to vector<4x64xf32>
    %142 = arith.addf %140, %141 : vector<4x64xf32>
    %143 = arith.negf %142 : vector<4x64xf32>
    %144 = math.exp %143 : vector<4x64xf32>
    %cst_37 = arith.constant 1.000000e+00 : f32
    %145 = vector.broadcast %cst_37 : f32 to vector<4x64xf32>
    %146 = arith.addf %145, %144 : vector<4x64xf32>
    %147 = arith.divf %145, %146 : vector<4x64xf32>
    %148 = vector.extract_strided_slice %147 {offsets = [0, 0], sizes = [4, 32], strides = [1, 1]} : vector<4x64xf32> to vector<4x32xf32>
    %149 = vector.extract_strided_slice %147 {offsets = [0, 32], sizes = [4, 32], strides = [1, 1]} : vector<4x64xf32> to vector<4x32xf32>
    %150 = vector.extract_strided_slice %28 {offsets = [4, 0, 64], sizes = [1, 4, 32], strides = [1, 1, 1]} : vector<8x4x128xf32> to vector<1x4x32xf32>
    %151 = vector.shape_cast %150 : vector<1x4x32xf32> to vector<4x32xf32>
    %152 = vector.extract_strided_slice %138 {offsets = [0, 64], sizes = [4, 32], strides = [1, 1]} : vector<4x128xf32> to vector<4x32xf32>
    %153 = vector.broadcast %32 : vector<1x32xf32> to vector<4x32xf32>
    %154 = arith.addf %152, %153 : vector<4x32xf32>
    %155 = arith.mulf %148, %154 : vector<4x32xf32>
    %156 = arith.addf %151, %155 : vector<4x32xf32>
    %157 = math.tanh %156 : vector<4x32xf32>
    %cst_38 = arith.constant 1.000000e+00 : f32
    %158 = vector.broadcast %cst_38 : f32 to vector<4x32xf32>
    %159 = arith.subf %158, %149 : vector<4x32xf32>
    %160 = arith.mulf %159, %157 : vector<4x32xf32>
    %161 = arith.mulf %149, %136 : vector<4x32xf32>
    %162 = arith.addf %160, %161 : vector<4x32xf32>
    %163 = arith.truncf %162 : vector<4x32xf32> to vector<4x32xbf16>
    %cst_39 = arith.constant dense<0.000000e+00> : vector<4x128xf32>
    %164 = tpu.matmul %163, %30, %cst_39 {dimension_numbers = #tpu.dot_dimension_numbers<[1], [0], [0], [1], [0, 0, 1, 1], [], []>} : vector<4x32xbf16>, vector<32x128xbf16>, vector<4x128xf32> -> vector<4x128xf32>
    %165 = vector.extract_strided_slice %28 {offsets = [5, 0, 0], sizes = [1, 4, 64], strides = [1, 1, 1]} : vector<8x4x128xf32> to vector<1x4x64xf32>
    %166 = vector.shape_cast %165 : vector<1x4x64xf32> to vector<4x64xf32>
    %167 = vector.extract_strided_slice %164 {offsets = [0, 0], sizes = [4, 64], strides = [1, 1]} : vector<4x128xf32> to vector<4x64xf32>
    %168 = arith.addf %166, %167 : vector<4x64xf32>
    %169 = arith.negf %168 : vector<4x64xf32>
    %170 = math.exp %169 : vector<4x64xf32>
    %cst_40 = arith.constant 1.000000e+00 : f32
    %171 = vector.broadcast %cst_40 : f32 to vector<4x64xf32>
    %172 = arith.addf %171, %170 : vector<4x64xf32>
    %173 = arith.divf %171, %172 : vector<4x64xf32>
    %174 = vector.extract_strided_slice %173 {offsets = [0, 0], sizes = [4, 32], strides = [1, 1]} : vector<4x64xf32> to vector<4x32xf32>
    %175 = vector.extract_strided_slice %173 {offsets = [0, 32], sizes = [4, 32], strides = [1, 1]} : vector<4x64xf32> to vector<4x32xf32>
    %176 = vector.extract_strided_slice %28 {offsets = [5, 0, 64], sizes = [1, 4, 32], strides = [1, 1, 1]} : vector<8x4x128xf32> to vector<1x4x32xf32>
    %177 = vector.shape_cast %176 : vector<1x4x32xf32> to vector<4x32xf32>
    %178 = vector.extract_strided_slice %164 {offsets = [0, 64], sizes = [4, 32], strides = [1, 1]} : vector<4x128xf32> to vector<4x32xf32>
    %179 = vector.broadcast %32 : vector<1x32xf32> to vector<4x32xf32>
    %180 = arith.addf %178, %179 : vector<4x32xf32>
    %181 = arith.mulf %174, %180 : vector<4x32xf32>
    %182 = arith.addf %177, %181 : vector<4x32xf32>
    %183 = math.tanh %182 : vector<4x32xf32>
    %cst_41 = arith.constant 1.000000e+00 : f32
    %184 = vector.broadcast %cst_41 : f32 to vector<4x32xf32>
    %185 = arith.subf %184, %175 : vector<4x32xf32>
    %186 = arith.mulf %185, %183 : vector<4x32xf32>
    %187 = arith.mulf %175, %162 : vector<4x32xf32>
    %188 = arith.addf %186, %187 : vector<4x32xf32>
    %189 = arith.truncf %188 : vector<4x32xf32> to vector<4x32xbf16>
    %cst_42 = arith.constant dense<0.000000e+00> : vector<4x128xf32>
    %190 = tpu.matmul %189, %30, %cst_42 {dimension_numbers = #tpu.dot_dimension_numbers<[1], [0], [0], [1], [0, 0, 1, 1], [], []>} : vector<4x32xbf16>, vector<32x128xbf16>, vector<4x128xf32> -> vector<4x128xf32>
    %191 = vector.extract_strided_slice %28 {offsets = [6, 0, 0], sizes = [1, 4, 64], strides = [1, 1, 1]} : vector<8x4x128xf32> to vector<1x4x64xf32>
    %192 = vector.shape_cast %191 : vector<1x4x64xf32> to vector<4x64xf32>
    %193 = vector.extract_strided_slice %190 {offsets = [0, 0], sizes = [4, 64], strides = [1, 1]} : vector<4x128xf32> to vector<4x64xf32>
    %194 = arith.addf %192, %193 : vector<4x64xf32>
    %195 = arith.negf %194 : vector<4x64xf32>
    %196 = math.exp %195 : vector<4x64xf32>
    %cst_43 = arith.constant 1.000000e+00 : f32
    %197 = vector.broadcast %cst_43 : f32 to vector<4x64xf32>
    %198 = arith.addf %197, %196 : vector<4x64xf32>
    %199 = arith.divf %197, %198 : vector<4x64xf32>
    %200 = vector.extract_strided_slice %199 {offsets = [0, 0], sizes = [4, 32], strides = [1, 1]} : vector<4x64xf32> to vector<4x32xf32>
    %201 = vector.extract_strided_slice %199 {offsets = [0, 32], sizes = [4, 32], strides = [1, 1]} : vector<4x64xf32> to vector<4x32xf32>
    %202 = vector.extract_strided_slice %28 {offsets = [6, 0, 64], sizes = [1, 4, 32], strides = [1, 1, 1]} : vector<8x4x128xf32> to vector<1x4x32xf32>
    %203 = vector.shape_cast %202 : vector<1x4x32xf32> to vector<4x32xf32>
    %204 = vector.extract_strided_slice %190 {offsets = [0, 64], sizes = [4, 32], strides = [1, 1]} : vector<4x128xf32> to vector<4x32xf32>
    %205 = vector.broadcast %32 : vector<1x32xf32> to vector<4x32xf32>
    %206 = arith.addf %204, %205 : vector<4x32xf32>
    %207 = arith.mulf %200, %206 : vector<4x32xf32>
    %208 = arith.addf %203, %207 : vector<4x32xf32>
    %209 = math.tanh %208 : vector<4x32xf32>
    %cst_44 = arith.constant 1.000000e+00 : f32
    %210 = vector.broadcast %cst_44 : f32 to vector<4x32xf32>
    %211 = arith.subf %210, %201 : vector<4x32xf32>
    %212 = arith.mulf %211, %209 : vector<4x32xf32>
    %213 = arith.mulf %201, %188 : vector<4x32xf32>
    %214 = arith.addf %212, %213 : vector<4x32xf32>
    %215 = arith.truncf %214 : vector<4x32xf32> to vector<4x32xbf16>
    %cst_45 = arith.constant dense<0.000000e+00> : vector<4x128xf32>
    %216 = tpu.matmul %215, %30, %cst_45 {dimension_numbers = #tpu.dot_dimension_numbers<[1], [0], [0], [1], [0, 0, 1, 1], [], []>} : vector<4x32xbf16>, vector<32x128xbf16>, vector<4x128xf32> -> vector<4x128xf32>
    %217 = vector.extract_strided_slice %28 {offsets = [7, 0, 0], sizes = [1, 4, 64], strides = [1, 1, 1]} : vector<8x4x128xf32> to vector<1x4x64xf32>
    %218 = vector.shape_cast %217 : vector<1x4x64xf32> to vector<4x64xf32>
    %219 = vector.extract_strided_slice %216 {offsets = [0, 0], sizes = [4, 64], strides = [1, 1]} : vector<4x128xf32> to vector<4x64xf32>
    %220 = arith.addf %218, %219 : vector<4x64xf32>
    %221 = arith.negf %220 : vector<4x64xf32>
    %222 = math.exp %221 : vector<4x64xf32>
    %cst_46 = arith.constant 1.000000e+00 : f32
    %223 = vector.broadcast %cst_46 : f32 to vector<4x64xf32>
    %224 = arith.addf %223, %222 : vector<4x64xf32>
    %225 = arith.divf %223, %224 : vector<4x64xf32>
    %226 = vector.extract_strided_slice %225 {offsets = [0, 0], sizes = [4, 32], strides = [1, 1]} : vector<4x64xf32> to vector<4x32xf32>
    %227 = vector.extract_strided_slice %225 {offsets = [0, 32], sizes = [4, 32], strides = [1, 1]} : vector<4x64xf32> to vector<4x32xf32>
    %228 = vector.extract_strided_slice %28 {offsets = [7, 0, 64], sizes = [1, 4, 32], strides = [1, 1, 1]} : vector<8x4x128xf32> to vector<1x4x32xf32>
    %229 = vector.shape_cast %228 : vector<1x4x32xf32> to vector<4x32xf32>
    %230 = vector.extract_strided_slice %216 {offsets = [0, 64], sizes = [4, 32], strides = [1, 1]} : vector<4x128xf32> to vector<4x32xf32>
    %231 = vector.broadcast %32 : vector<1x32xf32> to vector<4x32xf32>
    %232 = arith.addf %230, %231 : vector<4x32xf32>
    %233 = arith.mulf %226, %232 : vector<4x32xf32>
    %234 = arith.addf %229, %233 : vector<4x32xf32>
    %235 = math.tanh %234 : vector<4x32xf32>
    %cst_47 = arith.constant 1.000000e+00 : f32
    %236 = vector.broadcast %cst_47 : f32 to vector<4x32xf32>
    %237 = arith.subf %236, %227 : vector<4x32xf32>
    %238 = arith.mulf %237, %235 : vector<4x32xf32>
    %239 = arith.mulf %227, %214 : vector<4x32xf32>
    %240 = arith.addf %238, %239 : vector<4x32xf32>
    %241 = vector.shape_cast %58 : vector<4x32xf32> to vector<1x4x32xf32>
    %242 = vector.shape_cast %84 : vector<4x32xf32> to vector<1x4x32xf32>
    %243 = vector.shape_cast %110 : vector<4x32xf32> to vector<1x4x32xf32>
    %244 = vector.shape_cast %136 : vector<4x32xf32> to vector<1x4x32xf32>
    %245 = vector.shape_cast %162 : vector<4x32xf32> to vector<1x4x32xf32>
    %246 = vector.shape_cast %188 : vector<4x32xf32> to vector<1x4x32xf32>
    %247 = vector.shape_cast %214 : vector<4x32xf32> to vector<1x4x32xf32>
    %248 = vector.shape_cast %240 : vector<4x32xf32> to vector<1x4x32xf32>
    %249 = tpu.concatenate %241, %242, %243, %244, %245, %246, %247, %248 in 0 : vector<1x4x32xf32>, vector<1x4x32xf32>, vector<1x4x32xf32>, vector<1x4x32xf32>, vector<1x4x32xf32>, vector<1x4x32xf32>, vector<1x4x32xf32>, vector<1x4x32xf32> -> vector<8x4x32xf32>
    %250 = vector.shape_cast %249 : vector<8x4x32xf32> to vector<32x32xf32>
    %251 = arith.truncf %250 : vector<32x32xf32> to vector<32x32xbf16>
    %252 = vector.extract_strided_slice %0 {offsets = [1, 0, 0], sizes = [1, 32, 128], strides = [1, 1, 1]} : vector<2x32x128xbf16> to vector<1x32x128xbf16>
    %253 = vector.shape_cast %252 : vector<1x32x128xbf16> to vector<32x128xbf16>
    %cst_48 = arith.constant dense<0.000000e+00> : vector<32x128xf32>
    %254 = tpu.matmul %251, %253, %cst_48 {dimension_numbers = #tpu.dot_dimension_numbers<[1], [0], [0], [1], [0, 0, 1, 1], [], []>} : vector<32x32xbf16>, vector<32x128xbf16>, vector<32x128xf32> -> vector<32x128xf32>
    %255 = vector.extract_strided_slice %2 {offsets = [1, 0, 0], sizes = [1, 1, 128], strides = [1, 1, 1]} : vector<2x1x128xf32> to vector<1x1x128xf32>
    %256 = vector.shape_cast %255 : vector<1x1x128xf32> to vector<1x128xf32>
    %257 = vector.broadcast %256 : vector<1x128xf32> to vector<32x128xf32>
    %258 = arith.addf %254, %257 : vector<32x128xf32>
    %259 = vector.shape_cast %258 : vector<32x128xf32> to vector<8x4x128xf32>
    %260 = vector.extract_strided_slice %1 {offsets = [1, 0, 0], sizes = [1, 32, 128], strides = [1, 1, 1]} : vector<2x32x128xbf16> to vector<1x32x128xbf16>
    %261 = vector.shape_cast %260 : vector<1x32x128xbf16> to vector<32x128xbf16>
    %262 = vector.extract_strided_slice %3 {offsets = [1, 0, 0], sizes = [1, 1, 32], strides = [1, 1, 1]} : vector<2x1x32xf32> to vector<1x1x32xf32>
    %263 = vector.shape_cast %262 : vector<1x1x32xf32> to vector<1x32xf32>
    %264 = arith.truncf %19 : vector<4x32xf32> to vector<4x32xbf16>
    %cst_49 = arith.constant dense<0.000000e+00> : vector<4x128xf32>
    %265 = tpu.matmul %264, %261, %cst_49 {dimension_numbers = #tpu.dot_dimension_numbers<[1], [0], [0], [1], [0, 0, 1, 1], [], []>} : vector<4x32xbf16>, vector<32x128xbf16>, vector<4x128xf32> -> vector<4x128xf32>
    %266 = vector.extract_strided_slice %259 {offsets = [0, 0, 0], sizes = [1, 4, 64], strides = [1, 1, 1]} : vector<8x4x128xf32> to vector<1x4x64xf32>
    %267 = vector.shape_cast %266 : vector<1x4x64xf32> to vector<4x64xf32>
    %268 = vector.extract_strided_slice %265 {offsets = [0, 0], sizes = [4, 64], strides = [1, 1]} : vector<4x128xf32> to vector<4x64xf32>
    %269 = arith.addf %267, %268 : vector<4x64xf32>
    %270 = arith.negf %269 : vector<4x64xf32>
    %271 = math.exp %270 : vector<4x64xf32>
    %cst_50 = arith.constant 1.000000e+00 : f32
    %272 = vector.broadcast %cst_50 : f32 to vector<4x64xf32>
    %273 = arith.addf %272, %271 : vector<4x64xf32>
    %274 = arith.divf %272, %273 : vector<4x64xf32>
    %275 = vector.extract_strided_slice %274 {offsets = [0, 0], sizes = [4, 32], strides = [1, 1]} : vector<4x64xf32> to vector<4x32xf32>
    %276 = vector.extract_strided_slice %274 {offsets = [0, 32], sizes = [4, 32], strides = [1, 1]} : vector<4x64xf32> to vector<4x32xf32>
    %277 = vector.extract_strided_slice %259 {offsets = [0, 0, 64], sizes = [1, 4, 32], strides = [1, 1, 1]} : vector<8x4x128xf32> to vector<1x4x32xf32>
    %278 = vector.shape_cast %277 : vector<1x4x32xf32> to vector<4x32xf32>
    %279 = vector.extract_strided_slice %265 {offsets = [0, 64], sizes = [4, 32], strides = [1, 1]} : vector<4x128xf32> to vector<4x32xf32>
    %280 = vector.broadcast %263 : vector<1x32xf32> to vector<4x32xf32>
    %281 = arith.addf %279, %280 : vector<4x32xf32>
    %282 = arith.mulf %275, %281 : vector<4x32xf32>
    %283 = arith.addf %278, %282 : vector<4x32xf32>
    %284 = math.tanh %283 : vector<4x32xf32>
    %cst_51 = arith.constant 1.000000e+00 : f32
    %285 = vector.broadcast %cst_51 : f32 to vector<4x32xf32>
    %286 = arith.subf %285, %276 : vector<4x32xf32>
    %287 = arith.mulf %286, %284 : vector<4x32xf32>
    %288 = arith.mulf %276, %19 : vector<4x32xf32>
    %289 = arith.addf %287, %288 : vector<4x32xf32>
    %290 = arith.truncf %289 : vector<4x32xf32> to vector<4x32xbf16>
    %cst_52 = arith.constant dense<0.000000e+00> : vector<4x128xf32>
    %291 = tpu.matmul %290, %261, %cst_52 {dimension_numbers = #tpu.dot_dimension_numbers<[1], [0], [0], [1], [0, 0, 1, 1], [], []>} : vector<4x32xbf16>, vector<32x128xbf16>, vector<4x128xf32> -> vector<4x128xf32>
    %292 = vector.extract_strided_slice %259 {offsets = [1, 0, 0], sizes = [1, 4, 64], strides = [1, 1, 1]} : vector<8x4x128xf32> to vector<1x4x64xf32>
    %293 = vector.shape_cast %292 : vector<1x4x64xf32> to vector<4x64xf32>
    %294 = vector.extract_strided_slice %291 {offsets = [0, 0], sizes = [4, 64], strides = [1, 1]} : vector<4x128xf32> to vector<4x64xf32>
    %295 = arith.addf %293, %294 : vector<4x64xf32>
    %296 = arith.negf %295 : vector<4x64xf32>
    %297 = math.exp %296 : vector<4x64xf32>
    %cst_53 = arith.constant 1.000000e+00 : f32
    %298 = vector.broadcast %cst_53 : f32 to vector<4x64xf32>
    %299 = arith.addf %298, %297 : vector<4x64xf32>
    %300 = arith.divf %298, %299 : vector<4x64xf32>
    %301 = vector.extract_strided_slice %300 {offsets = [0, 0], sizes = [4, 32], strides = [1, 1]} : vector<4x64xf32> to vector<4x32xf32>
    %302 = vector.extract_strided_slice %300 {offsets = [0, 32], sizes = [4, 32], strides = [1, 1]} : vector<4x64xf32> to vector<4x32xf32>
    %303 = vector.extract_strided_slice %259 {offsets = [1, 0, 64], sizes = [1, 4, 32], strides = [1, 1, 1]} : vector<8x4x128xf32> to vector<1x4x32xf32>
    %304 = vector.shape_cast %303 : vector<1x4x32xf32> to vector<4x32xf32>
    %305 = vector.extract_strided_slice %291 {offsets = [0, 64], sizes = [4, 32], strides = [1, 1]} : vector<4x128xf32> to vector<4x32xf32>
    %306 = vector.broadcast %263 : vector<1x32xf32> to vector<4x32xf32>
    %307 = arith.addf %305, %306 : vector<4x32xf32>
    %308 = arith.mulf %301, %307 : vector<4x32xf32>
    %309 = arith.addf %304, %308 : vector<4x32xf32>
    %310 = math.tanh %309 : vector<4x32xf32>
    %cst_54 = arith.constant 1.000000e+00 : f32
    %311 = vector.broadcast %cst_54 : f32 to vector<4x32xf32>
    %312 = arith.subf %311, %302 : vector<4x32xf32>
    %313 = arith.mulf %312, %310 : vector<4x32xf32>
    %314 = arith.mulf %302, %289 : vector<4x32xf32>
    %315 = arith.addf %313, %314 : vector<4x32xf32>
    %316 = arith.truncf %315 : vector<4x32xf32> to vector<4x32xbf16>
    %cst_55 = arith.constant dense<0.000000e+00> : vector<4x128xf32>
    %317 = tpu.matmul %316, %261, %cst_55 {dimension_numbers = #tpu.dot_dimension_numbers<[1], [0], [0], [1], [0, 0, 1, 1], [], []>} : vector<4x32xbf16>, vector<32x128xbf16>, vector<4x128xf32> -> vector<4x128xf32>
    %318 = vector.extract_strided_slice %259 {offsets = [2, 0, 0], sizes = [1, 4, 64], strides = [1, 1, 1]} : vector<8x4x128xf32> to vector<1x4x64xf32>
    %319 = vector.shape_cast %318 : vector<1x4x64xf32> to vector<4x64xf32>
    %320 = vector.extract_strided_slice %317 {offsets = [0, 0], sizes = [4, 64], strides = [1, 1]} : vector<4x128xf32> to vector<4x64xf32>
    %321 = arith.addf %319, %320 : vector<4x64xf32>
    %322 = arith.negf %321 : vector<4x64xf32>
    %323 = math.exp %322 : vector<4x64xf32>
    %cst_56 = arith.constant 1.000000e+00 : f32
    %324 = vector.broadcast %cst_56 : f32 to vector<4x64xf32>
    %325 = arith.addf %324, %323 : vector<4x64xf32>
    %326 = arith.divf %324, %325 : vector<4x64xf32>
    %327 = vector.extract_strided_slice %326 {offsets = [0, 0], sizes = [4, 32], strides = [1, 1]} : vector<4x64xf32> to vector<4x32xf32>
    %328 = vector.extract_strided_slice %326 {offsets = [0, 32], sizes = [4, 32], strides = [1, 1]} : vector<4x64xf32> to vector<4x32xf32>
    %329 = vector.extract_strided_slice %259 {offsets = [2, 0, 64], sizes = [1, 4, 32], strides = [1, 1, 1]} : vector<8x4x128xf32> to vector<1x4x32xf32>
    %330 = vector.shape_cast %329 : vector<1x4x32xf32> to vector<4x32xf32>
    %331 = vector.extract_strided_slice %317 {offsets = [0, 64], sizes = [4, 32], strides = [1, 1]} : vector<4x128xf32> to vector<4x32xf32>
    %332 = vector.broadcast %263 : vector<1x32xf32> to vector<4x32xf32>
    %333 = arith.addf %331, %332 : vector<4x32xf32>
    %334 = arith.mulf %327, %333 : vector<4x32xf32>
    %335 = arith.addf %330, %334 : vector<4x32xf32>
    %336 = math.tanh %335 : vector<4x32xf32>
    %cst_57 = arith.constant 1.000000e+00 : f32
    %337 = vector.broadcast %cst_57 : f32 to vector<4x32xf32>
    %338 = arith.subf %337, %328 : vector<4x32xf32>
    %339 = arith.mulf %338, %336 : vector<4x32xf32>
    %340 = arith.mulf %328, %315 : vector<4x32xf32>
    %341 = arith.addf %339, %340 : vector<4x32xf32>
    %342 = arith.truncf %341 : vector<4x32xf32> to vector<4x32xbf16>
    %cst_58 = arith.constant dense<0.000000e+00> : vector<4x128xf32>
    %343 = tpu.matmul %342, %261, %cst_58 {dimension_numbers = #tpu.dot_dimension_numbers<[1], [0], [0], [1], [0, 0, 1, 1], [], []>} : vector<4x32xbf16>, vector<32x128xbf16>, vector<4x128xf32> -> vector<4x128xf32>
    %344 = vector.extract_strided_slice %259 {offsets = [3, 0, 0], sizes = [1, 4, 64], strides = [1, 1, 1]} : vector<8x4x128xf32> to vector<1x4x64xf32>
    %345 = vector.shape_cast %344 : vector<1x4x64xf32> to vector<4x64xf32>
    %346 = vector.extract_strided_slice %343 {offsets = [0, 0], sizes = [4, 64], strides = [1, 1]} : vector<4x128xf32> to vector<4x64xf32>
    %347 = arith.addf %345, %346 : vector<4x64xf32>
    %348 = arith.negf %347 : vector<4x64xf32>
    %349 = math.exp %348 : vector<4x64xf32>
    %cst_59 = arith.constant 1.000000e+00 : f32
    %350 = vector.broadcast %cst_59 : f32 to vector<4x64xf32>
    %351 = arith.addf %350, %349 : vector<4x64xf32>
    %352 = arith.divf %350, %351 : vector<4x64xf32>
    %353 = vector.extract_strided_slice %352 {offsets = [0, 0], sizes = [4, 32], strides = [1, 1]} : vector<4x64xf32> to vector<4x32xf32>
    %354 = vector.extract_strided_slice %352 {offsets = [0, 32], sizes = [4, 32], strides = [1, 1]} : vector<4x64xf32> to vector<4x32xf32>
    %355 = vector.extract_strided_slice %259 {offsets = [3, 0, 64], sizes = [1, 4, 32], strides = [1, 1, 1]} : vector<8x4x128xf32> to vector<1x4x32xf32>
    %356 = vector.shape_cast %355 : vector<1x4x32xf32> to vector<4x32xf32>
    %357 = vector.extract_strided_slice %343 {offsets = [0, 64], sizes = [4, 32], strides = [1, 1]} : vector<4x128xf32> to vector<4x32xf32>
    %358 = vector.broadcast %263 : vector<1x32xf32> to vector<4x32xf32>
    %359 = arith.addf %357, %358 : vector<4x32xf32>
    %360 = arith.mulf %353, %359 : vector<4x32xf32>
    %361 = arith.addf %356, %360 : vector<4x32xf32>
    %362 = math.tanh %361 : vector<4x32xf32>
    %cst_60 = arith.constant 1.000000e+00 : f32
    %363 = vector.broadcast %cst_60 : f32 to vector<4x32xf32>
    %364 = arith.subf %363, %354 : vector<4x32xf32>
    %365 = arith.mulf %364, %362 : vector<4x32xf32>
    %366 = arith.mulf %354, %341 : vector<4x32xf32>
    %367 = arith.addf %365, %366 : vector<4x32xf32>
    %368 = arith.truncf %367 : vector<4x32xf32> to vector<4x32xbf16>
    %cst_61 = arith.constant dense<0.000000e+00> : vector<4x128xf32>
    %369 = tpu.matmul %368, %261, %cst_61 {dimension_numbers = #tpu.dot_dimension_numbers<[1], [0], [0], [1], [0, 0, 1, 1], [], []>} : vector<4x32xbf16>, vector<32x128xbf16>, vector<4x128xf32> -> vector<4x128xf32>
    %370 = vector.extract_strided_slice %259 {offsets = [4, 0, 0], sizes = [1, 4, 64], strides = [1, 1, 1]} : vector<8x4x128xf32> to vector<1x4x64xf32>
    %371 = vector.shape_cast %370 : vector<1x4x64xf32> to vector<4x64xf32>
    %372 = vector.extract_strided_slice %369 {offsets = [0, 0], sizes = [4, 64], strides = [1, 1]} : vector<4x128xf32> to vector<4x64xf32>
    %373 = arith.addf %371, %372 : vector<4x64xf32>
    %374 = arith.negf %373 : vector<4x64xf32>
    %375 = math.exp %374 : vector<4x64xf32>
    %cst_62 = arith.constant 1.000000e+00 : f32
    %376 = vector.broadcast %cst_62 : f32 to vector<4x64xf32>
    %377 = arith.addf %376, %375 : vector<4x64xf32>
    %378 = arith.divf %376, %377 : vector<4x64xf32>
    %379 = vector.extract_strided_slice %378 {offsets = [0, 0], sizes = [4, 32], strides = [1, 1]} : vector<4x64xf32> to vector<4x32xf32>
    %380 = vector.extract_strided_slice %378 {offsets = [0, 32], sizes = [4, 32], strides = [1, 1]} : vector<4x64xf32> to vector<4x32xf32>
    %381 = vector.extract_strided_slice %259 {offsets = [4, 0, 64], sizes = [1, 4, 32], strides = [1, 1, 1]} : vector<8x4x128xf32> to vector<1x4x32xf32>
    %382 = vector.shape_cast %381 : vector<1x4x32xf32> to vector<4x32xf32>
    %383 = vector.extract_strided_slice %369 {offsets = [0, 64], sizes = [4, 32], strides = [1, 1]} : vector<4x128xf32> to vector<4x32xf32>
    %384 = vector.broadcast %263 : vector<1x32xf32> to vector<4x32xf32>
    %385 = arith.addf %383, %384 : vector<4x32xf32>
    %386 = arith.mulf %379, %385 : vector<4x32xf32>
    %387 = arith.addf %382, %386 : vector<4x32xf32>
    %388 = math.tanh %387 : vector<4x32xf32>
    %cst_63 = arith.constant 1.000000e+00 : f32
    %389 = vector.broadcast %cst_63 : f32 to vector<4x32xf32>
    %390 = arith.subf %389, %380 : vector<4x32xf32>
    %391 = arith.mulf %390, %388 : vector<4x32xf32>
    %392 = arith.mulf %380, %367 : vector<4x32xf32>
    %393 = arith.addf %391, %392 : vector<4x32xf32>
    %394 = arith.truncf %393 : vector<4x32xf32> to vector<4x32xbf16>
    %cst_64 = arith.constant dense<0.000000e+00> : vector<4x128xf32>
    %395 = tpu.matmul %394, %261, %cst_64 {dimension_numbers = #tpu.dot_dimension_numbers<[1], [0], [0], [1], [0, 0, 1, 1], [], []>} : vector<4x32xbf16>, vector<32x128xbf16>, vector<4x128xf32> -> vector<4x128xf32>
    %396 = vector.extract_strided_slice %259 {offsets = [5, 0, 0], sizes = [1, 4, 64], strides = [1, 1, 1]} : vector<8x4x128xf32> to vector<1x4x64xf32>
    %397 = vector.shape_cast %396 : vector<1x4x64xf32> to vector<4x64xf32>
    %398 = vector.extract_strided_slice %395 {offsets = [0, 0], sizes = [4, 64], strides = [1, 1]} : vector<4x128xf32> to vector<4x64xf32>
    %399 = arith.addf %397, %398 : vector<4x64xf32>
    %400 = arith.negf %399 : vector<4x64xf32>
    %401 = math.exp %400 : vector<4x64xf32>
    %cst_65 = arith.constant 1.000000e+00 : f32
    %402 = vector.broadcast %cst_65 : f32 to vector<4x64xf32>
    %403 = arith.addf %402, %401 : vector<4x64xf32>
    %404 = arith.divf %402, %403 : vector<4x64xf32>
    %405 = vector.extract_strided_slice %404 {offsets = [0, 0], sizes = [4, 32], strides = [1, 1]} : vector<4x64xf32> to vector<4x32xf32>
    %406 = vector.extract_strided_slice %404 {offsets = [0, 32], sizes = [4, 32], strides = [1, 1]} : vector<4x64xf32> to vector<4x32xf32>
    %407 = vector.extract_strided_slice %259 {offsets = [5, 0, 64], sizes = [1, 4, 32], strides = [1, 1, 1]} : vector<8x4x128xf32> to vector<1x4x32xf32>
    %408 = vector.shape_cast %407 : vector<1x4x32xf32> to vector<4x32xf32>
    %409 = vector.extract_strided_slice %395 {offsets = [0, 64], sizes = [4, 32], strides = [1, 1]} : vector<4x128xf32> to vector<4x32xf32>
    %410 = vector.broadcast %263 : vector<1x32xf32> to vector<4x32xf32>
    %411 = arith.addf %409, %410 : vector<4x32xf32>
    %412 = arith.mulf %405, %411 : vector<4x32xf32>
    %413 = arith.addf %408, %412 : vector<4x32xf32>
    %414 = math.tanh %413 : vector<4x32xf32>
    %cst_66 = arith.constant 1.000000e+00 : f32
    %415 = vector.broadcast %cst_66 : f32 to vector<4x32xf32>
    %416 = arith.subf %415, %406 : vector<4x32xf32>
    %417 = arith.mulf %416, %414 : vector<4x32xf32>
    %418 = arith.mulf %406, %393 : vector<4x32xf32>
    %419 = arith.addf %417, %418 : vector<4x32xf32>
    %420 = arith.truncf %419 : vector<4x32xf32> to vector<4x32xbf16>
    %cst_67 = arith.constant dense<0.000000e+00> : vector<4x128xf32>
    %421 = tpu.matmul %420, %261, %cst_67 {dimension_numbers = #tpu.dot_dimension_numbers<[1], [0], [0], [1], [0, 0, 1, 1], [], []>} : vector<4x32xbf16>, vector<32x128xbf16>, vector<4x128xf32> -> vector<4x128xf32>
    %422 = vector.extract_strided_slice %259 {offsets = [6, 0, 0], sizes = [1, 4, 64], strides = [1, 1, 1]} : vector<8x4x128xf32> to vector<1x4x64xf32>
    %423 = vector.shape_cast %422 : vector<1x4x64xf32> to vector<4x64xf32>
    %424 = vector.extract_strided_slice %421 {offsets = [0, 0], sizes = [4, 64], strides = [1, 1]} : vector<4x128xf32> to vector<4x64xf32>
    %425 = arith.addf %423, %424 : vector<4x64xf32>
    %426 = arith.negf %425 : vector<4x64xf32>
    %427 = math.exp %426 : vector<4x64xf32>
    %cst_68 = arith.constant 1.000000e+00 : f32
    %428 = vector.broadcast %cst_68 : f32 to vector<4x64xf32>
    %429 = arith.addf %428, %427 : vector<4x64xf32>
    %430 = arith.divf %428, %429 : vector<4x64xf32>
    %431 = vector.extract_strided_slice %430 {offsets = [0, 0], sizes = [4, 32], strides = [1, 1]} : vector<4x64xf32> to vector<4x32xf32>
    %432 = vector.extract_strided_slice %430 {offsets = [0, 32], sizes = [4, 32], strides = [1, 1]} : vector<4x64xf32> to vector<4x32xf32>
    %433 = vector.extract_strided_slice %259 {offsets = [6, 0, 64], sizes = [1, 4, 32], strides = [1, 1, 1]} : vector<8x4x128xf32> to vector<1x4x32xf32>
    %434 = vector.shape_cast %433 : vector<1x4x32xf32> to vector<4x32xf32>
    %435 = vector.extract_strided_slice %421 {offsets = [0, 64], sizes = [4, 32], strides = [1, 1]} : vector<4x128xf32> to vector<4x32xf32>
    %436 = vector.broadcast %263 : vector<1x32xf32> to vector<4x32xf32>
    %437 = arith.addf %435, %436 : vector<4x32xf32>
    %438 = arith.mulf %431, %437 : vector<4x32xf32>
    %439 = arith.addf %434, %438 : vector<4x32xf32>
    %440 = math.tanh %439 : vector<4x32xf32>
    %cst_69 = arith.constant 1.000000e+00 : f32
    %441 = vector.broadcast %cst_69 : f32 to vector<4x32xf32>
    %442 = arith.subf %441, %432 : vector<4x32xf32>
    %443 = arith.mulf %442, %440 : vector<4x32xf32>
    %444 = arith.mulf %432, %419 : vector<4x32xf32>
    %445 = arith.addf %443, %444 : vector<4x32xf32>
    %446 = arith.truncf %445 : vector<4x32xf32> to vector<4x32xbf16>
    %cst_70 = arith.constant dense<0.000000e+00> : vector<4x128xf32>
    %447 = tpu.matmul %446, %261, %cst_70 {dimension_numbers = #tpu.dot_dimension_numbers<[1], [0], [0], [1], [0, 0, 1, 1], [], []>} : vector<4x32xbf16>, vector<32x128xbf16>, vector<4x128xf32> -> vector<4x128xf32>
    %448 = vector.extract_strided_slice %259 {offsets = [7, 0, 0], sizes = [1, 4, 64], strides = [1, 1, 1]} : vector<8x4x128xf32> to vector<1x4x64xf32>
    %449 = vector.shape_cast %448 : vector<1x4x64xf32> to vector<4x64xf32>
    %450 = vector.extract_strided_slice %447 {offsets = [0, 0], sizes = [4, 64], strides = [1, 1]} : vector<4x128xf32> to vector<4x64xf32>
    %451 = arith.addf %449, %450 : vector<4x64xf32>
    %452 = arith.negf %451 : vector<4x64xf32>
    %453 = math.exp %452 : vector<4x64xf32>
    %cst_71 = arith.constant 1.000000e+00 : f32
    %454 = vector.broadcast %cst_71 : f32 to vector<4x64xf32>
    %455 = arith.addf %454, %453 : vector<4x64xf32>
    %456 = arith.divf %454, %455 : vector<4x64xf32>
    %457 = vector.extract_strided_slice %456 {offsets = [0, 0], sizes = [4, 32], strides = [1, 1]} : vector<4x64xf32> to vector<4x32xf32>
    %458 = vector.extract_strided_slice %456 {offsets = [0, 32], sizes = [4, 32], strides = [1, 1]} : vector<4x64xf32> to vector<4x32xf32>
    %459 = vector.extract_strided_slice %259 {offsets = [7, 0, 64], sizes = [1, 4, 32], strides = [1, 1, 1]} : vector<8x4x128xf32> to vector<1x4x32xf32>
    %460 = vector.shape_cast %459 : vector<1x4x32xf32> to vector<4x32xf32>
    %461 = vector.extract_strided_slice %447 {offsets = [0, 64], sizes = [4, 32], strides = [1, 1]} : vector<4x128xf32> to vector<4x32xf32>
    %462 = vector.broadcast %263 : vector<1x32xf32> to vector<4x32xf32>
    %463 = arith.addf %461, %462 : vector<4x32xf32>
    %464 = arith.mulf %457, %463 : vector<4x32xf32>
    %465 = arith.addf %460, %464 : vector<4x32xf32>
    %466 = math.tanh %465 : vector<4x32xf32>
    %cst_72 = arith.constant 1.000000e+00 : f32
    %467 = vector.broadcast %cst_72 : f32 to vector<4x32xf32>
    %468 = arith.subf %467, %458 : vector<4x32xf32>
    %469 = arith.mulf %468, %466 : vector<4x32xf32>
    %470 = arith.mulf %458, %445 : vector<4x32xf32>
    %471 = arith.addf %469, %470 : vector<4x32xf32>
    %472 = vector.shape_cast %289 : vector<4x32xf32> to vector<1x4x32xf32>
    %473 = vector.shape_cast %315 : vector<4x32xf32> to vector<1x4x32xf32>
    %474 = vector.shape_cast %341 : vector<4x32xf32> to vector<1x4x32xf32>
    %475 = vector.shape_cast %367 : vector<4x32xf32> to vector<1x4x32xf32>
    %476 = vector.shape_cast %393 : vector<4x32xf32> to vector<1x4x32xf32>
    %477 = vector.shape_cast %419 : vector<4x32xf32> to vector<1x4x32xf32>
    %478 = vector.shape_cast %445 : vector<4x32xf32> to vector<1x4x32xf32>
    %479 = vector.shape_cast %471 : vector<4x32xf32> to vector<1x4x32xf32>
    %480 = tpu.concatenate %472, %473, %474, %475, %476, %477, %478, %479 in 0 : vector<1x4x32xf32>, vector<1x4x32xf32>, vector<1x4x32xf32>, vector<1x4x32xf32>, vector<1x4x32xf32>, vector<1x4x32xf32>, vector<1x4x32xf32>, vector<1x4x32xf32> -> vector<8x4x32xf32>
    %481 = vector.shape_cast %480 : vector<8x4x32xf32> to vector<32x32xf32>
    %482 = arith.truncf %481 : vector<32x32xf32> to vector<32x32xbf16>
    %c0_73 = arith.constant 0 : index
    %c0_74 = arith.constant 0 : index
    %483 = vector.load %arg8[%c0_73, %c0_74] : memref<32x32xbf16, #tpu.memory_space<vmem>>, vector<32x32xbf16>
    %cst_75 = arith.constant dense<0.000000e+00> : vector<32x32xf32>
    %484 = tpu.matmul %482, %483, %cst_75 {dimension_numbers = #tpu.dot_dimension_numbers<[1], [0], [0], [1], [0, 0, 1, 1], [], []>} : vector<32x32xbf16>, vector<32x32xbf16>, vector<32x32xf32> -> vector<32x32xf32>
    %c0_76 = arith.constant 0 : index
    %c0_77 = arith.constant 0 : index
    %485 = vector.load %arg9[%c0_76, %c0_77] : memref<1x32xf32, #tpu.memory_space<vmem>>, vector<1x32xf32>
    %486 = vector.broadcast %485 : vector<1x32xf32> to vector<32x32xf32>
    %487 = arith.addf %484, %486 : vector<32x32xf32>
    %488 = arith.negf %487 : vector<32x32xf32>
    %489 = math.exp %488 : vector<32x32xf32>
    %cst_78 = arith.constant 1.000000e+00 : f32
    %490 = vector.broadcast %cst_78 : f32 to vector<32x32xf32>
    %491 = arith.addf %490, %489 : vector<32x32xf32>
    %492 = arith.divf %490, %491 : vector<32x32xf32>
    %493 = arith.addf %492, %15 : vector<32x32xf32>
    %494 = arith.truncf %493 : vector<32x32xf32> to vector<32x32xbf16>
    %495 = vector.extract_strided_slice %0 {offsets = [0, 0, 0], sizes = [1, 32, 128], strides = [1, 1, 1]} : vector<2x32x128xbf16> to vector<1x32x128xbf16>
    %496 = vector.shape_cast %495 : vector<1x32x128xbf16> to vector<32x128xbf16>
    %cst_79 = arith.constant dense<0.000000e+00> : vector<32x128xf32>
    %497 = tpu.matmul %494, %496, %cst_79 {dimension_numbers = #tpu.dot_dimension_numbers<[1], [0], [0], [1], [0, 0, 1, 1], [], []>} : vector<32x32xbf16>, vector<32x128xbf16>, vector<32x128xf32> -> vector<32x128xf32>
    %498 = vector.extract_strided_slice %2 {offsets = [0, 0, 0], sizes = [1, 1, 128], strides = [1, 1, 1]} : vector<2x1x128xf32> to vector<1x1x128xf32>
    %499 = vector.shape_cast %498 : vector<1x1x128xf32> to vector<1x128xf32>
    %500 = vector.broadcast %499 : vector<1x128xf32> to vector<32x128xf32>
    %501 = arith.addf %497, %500 : vector<32x128xf32>
    %502 = vector.shape_cast %501 : vector<32x128xf32> to vector<8x4x128xf32>
    %503 = vector.extract_strided_slice %1 {offsets = [0, 0, 0], sizes = [1, 32, 128], strides = [1, 1, 1]} : vector<2x32x128xbf16> to vector<1x32x128xbf16>
    %504 = vector.shape_cast %503 : vector<1x32x128xbf16> to vector<32x128xbf16>
    %505 = vector.extract_strided_slice %3 {offsets = [0, 0, 0], sizes = [1, 1, 32], strides = [1, 1, 1]} : vector<2x1x32xf32> to vector<1x1x32xf32>
    %506 = vector.shape_cast %505 : vector<1x1x32xf32> to vector<1x32xf32>
    %507 = arith.truncf %240 : vector<4x32xf32> to vector<4x32xbf16>
    %cst_80 = arith.constant dense<0.000000e+00> : vector<4x128xf32>
    %508 = tpu.matmul %507, %504, %cst_80 {dimension_numbers = #tpu.dot_dimension_numbers<[1], [0], [0], [1], [0, 0, 1, 1], [], []>} : vector<4x32xbf16>, vector<32x128xbf16>, vector<4x128xf32> -> vector<4x128xf32>
    %509 = vector.extract_strided_slice %502 {offsets = [0, 0, 0], sizes = [1, 4, 64], strides = [1, 1, 1]} : vector<8x4x128xf32> to vector<1x4x64xf32>
    %510 = vector.shape_cast %509 : vector<1x4x64xf32> to vector<4x64xf32>
    %511 = vector.extract_strided_slice %508 {offsets = [0, 0], sizes = [4, 64], strides = [1, 1]} : vector<4x128xf32> to vector<4x64xf32>
    %512 = arith.addf %510, %511 : vector<4x64xf32>
    %513 = arith.negf %512 : vector<4x64xf32>
    %514 = math.exp %513 : vector<4x64xf32>
    %cst_81 = arith.constant 1.000000e+00 : f32
    %515 = vector.broadcast %cst_81 : f32 to vector<4x64xf32>
    %516 = arith.addf %515, %514 : vector<4x64xf32>
    %517 = arith.divf %515, %516 : vector<4x64xf32>
    %518 = vector.extract_strided_slice %517 {offsets = [0, 0], sizes = [4, 32], strides = [1, 1]} : vector<4x64xf32> to vector<4x32xf32>
    %519 = vector.extract_strided_slice %517 {offsets = [0, 32], sizes = [4, 32], strides = [1, 1]} : vector<4x64xf32> to vector<4x32xf32>
    %520 = vector.extract_strided_slice %502 {offsets = [0, 0, 64], sizes = [1, 4, 32], strides = [1, 1, 1]} : vector<8x4x128xf32> to vector<1x4x32xf32>
    %521 = vector.shape_cast %520 : vector<1x4x32xf32> to vector<4x32xf32>
    %522 = vector.extract_strided_slice %508 {offsets = [0, 64], sizes = [4, 32], strides = [1, 1]} : vector<4x128xf32> to vector<4x32xf32>
    %523 = vector.broadcast %506 : vector<1x32xf32> to vector<4x32xf32>
    %524 = arith.addf %522, %523 : vector<4x32xf32>
    %525 = arith.mulf %518, %524 : vector<4x32xf32>
    %526 = arith.addf %521, %525 : vector<4x32xf32>
    %527 = math.tanh %526 : vector<4x32xf32>
    %cst_82 = arith.constant 1.000000e+00 : f32
    %528 = vector.broadcast %cst_82 : f32 to vector<4x32xf32>
    %529 = arith.subf %528, %519 : vector<4x32xf32>
    %530 = arith.mulf %529, %527 : vector<4x32xf32>
    %531 = arith.mulf %519, %240 : vector<4x32xf32>
    %532 = arith.addf %530, %531 : vector<4x32xf32>
    %533 = arith.truncf %532 : vector<4x32xf32> to vector<4x32xbf16>
    %cst_83 = arith.constant dense<0.000000e+00> : vector<4x128xf32>
    %534 = tpu.matmul %533, %504, %cst_83 {dimension_numbers = #tpu.dot_dimension_numbers<[1], [0], [0], [1], [0, 0, 1, 1], [], []>} : vector<4x32xbf16>, vector<32x128xbf16>, vector<4x128xf32> -> vector<4x128xf32>
    %535 = vector.extract_strided_slice %502 {offsets = [1, 0, 0], sizes = [1, 4, 64], strides = [1, 1, 1]} : vector<8x4x128xf32> to vector<1x4x64xf32>
    %536 = vector.shape_cast %535 : vector<1x4x64xf32> to vector<4x64xf32>
    %537 = vector.extract_strided_slice %534 {offsets = [0, 0], sizes = [4, 64], strides = [1, 1]} : vector<4x128xf32> to vector<4x64xf32>
    %538 = arith.addf %536, %537 : vector<4x64xf32>
    %539 = arith.negf %538 : vector<4x64xf32>
    %540 = math.exp %539 : vector<4x64xf32>
    %cst_84 = arith.constant 1.000000e+00 : f32
    %541 = vector.broadcast %cst_84 : f32 to vector<4x64xf32>
    %542 = arith.addf %541, %540 : vector<4x64xf32>
    %543 = arith.divf %541, %542 : vector<4x64xf32>
    %544 = vector.extract_strided_slice %543 {offsets = [0, 0], sizes = [4, 32], strides = [1, 1]} : vector<4x64xf32> to vector<4x32xf32>
    %545 = vector.extract_strided_slice %543 {offsets = [0, 32], sizes = [4, 32], strides = [1, 1]} : vector<4x64xf32> to vector<4x32xf32>
    %546 = vector.extract_strided_slice %502 {offsets = [1, 0, 64], sizes = [1, 4, 32], strides = [1, 1, 1]} : vector<8x4x128xf32> to vector<1x4x32xf32>
    %547 = vector.shape_cast %546 : vector<1x4x32xf32> to vector<4x32xf32>
    %548 = vector.extract_strided_slice %534 {offsets = [0, 64], sizes = [4, 32], strides = [1, 1]} : vector<4x128xf32> to vector<4x32xf32>
    %549 = vector.broadcast %506 : vector<1x32xf32> to vector<4x32xf32>
    %550 = arith.addf %548, %549 : vector<4x32xf32>
    %551 = arith.mulf %544, %550 : vector<4x32xf32>
    %552 = arith.addf %547, %551 : vector<4x32xf32>
    %553 = math.tanh %552 : vector<4x32xf32>
    %cst_85 = arith.constant 1.000000e+00 : f32
    %554 = vector.broadcast %cst_85 : f32 to vector<4x32xf32>
    %555 = arith.subf %554, %545 : vector<4x32xf32>
    %556 = arith.mulf %555, %553 : vector<4x32xf32>
    %557 = arith.mulf %545, %532 : vector<4x32xf32>
    %558 = arith.addf %556, %557 : vector<4x32xf32>
    %559 = arith.truncf %558 : vector<4x32xf32> to vector<4x32xbf16>
    %cst_86 = arith.constant dense<0.000000e+00> : vector<4x128xf32>
    %560 = tpu.matmul %559, %504, %cst_86 {dimension_numbers = #tpu.dot_dimension_numbers<[1], [0], [0], [1], [0, 0, 1, 1], [], []>} : vector<4x32xbf16>, vector<32x128xbf16>, vector<4x128xf32> -> vector<4x128xf32>
    %561 = vector.extract_strided_slice %502 {offsets = [2, 0, 0], sizes = [1, 4, 64], strides = [1, 1, 1]} : vector<8x4x128xf32> to vector<1x4x64xf32>
    %562 = vector.shape_cast %561 : vector<1x4x64xf32> to vector<4x64xf32>
    %563 = vector.extract_strided_slice %560 {offsets = [0, 0], sizes = [4, 64], strides = [1, 1]} : vector<4x128xf32> to vector<4x64xf32>
    %564 = arith.addf %562, %563 : vector<4x64xf32>
    %565 = arith.negf %564 : vector<4x64xf32>
    %566 = math.exp %565 : vector<4x64xf32>
    %cst_87 = arith.constant 1.000000e+00 : f32
    %567 = vector.broadcast %cst_87 : f32 to vector<4x64xf32>
    %568 = arith.addf %567, %566 : vector<4x64xf32>
    %569 = arith.divf %567, %568 : vector<4x64xf32>
    %570 = vector.extract_strided_slice %569 {offsets = [0, 0], sizes = [4, 32], strides = [1, 1]} : vector<4x64xf32> to vector<4x32xf32>
    %571 = vector.extract_strided_slice %569 {offsets = [0, 32], sizes = [4, 32], strides = [1, 1]} : vector<4x64xf32> to vector<4x32xf32>
    %572 = vector.extract_strided_slice %502 {offsets = [2, 0, 64], sizes = [1, 4, 32], strides = [1, 1, 1]} : vector<8x4x128xf32> to vector<1x4x32xf32>
    %573 = vector.shape_cast %572 : vector<1x4x32xf32> to vector<4x32xf32>
    %574 = vector.extract_strided_slice %560 {offsets = [0, 64], sizes = [4, 32], strides = [1, 1]} : vector<4x128xf32> to vector<4x32xf32>
    %575 = vector.broadcast %506 : vector<1x32xf32> to vector<4x32xf32>
    %576 = arith.addf %574, %575 : vector<4x32xf32>
    %577 = arith.mulf %570, %576 : vector<4x32xf32>
    %578 = arith.addf %573, %577 : vector<4x32xf32>
    %579 = math.tanh %578 : vector<4x32xf32>
    %cst_88 = arith.constant 1.000000e+00 : f32
    %580 = vector.broadcast %cst_88 : f32 to vector<4x32xf32>
    %581 = arith.subf %580, %571 : vector<4x32xf32>
    %582 = arith.mulf %581, %579 : vector<4x32xf32>
    %583 = arith.mulf %571, %558 : vector<4x32xf32>
    %584 = arith.addf %582, %583 : vector<4x32xf32>
    %585 = arith.truncf %584 : vector<4x32xf32> to vector<4x32xbf16>
    %cst_89 = arith.constant dense<0.000000e+00> : vector<4x128xf32>
    %586 = tpu.matmul %585, %504, %cst_89 {dimension_numbers = #tpu.dot_dimension_numbers<[1], [0], [0], [1], [0, 0, 1, 1], [], []>} : vector<4x32xbf16>, vector<32x128xbf16>, vector<4x128xf32> -> vector<4x128xf32>
    %587 = vector.extract_strided_slice %502 {offsets = [3, 0, 0], sizes = [1, 4, 64], strides = [1, 1, 1]} : vector<8x4x128xf32> to vector<1x4x64xf32>
    %588 = vector.shape_cast %587 : vector<1x4x64xf32> to vector<4x64xf32>
    %589 = vector.extract_strided_slice %586 {offsets = [0, 0], sizes = [4, 64], strides = [1, 1]} : vector<4x128xf32> to vector<4x64xf32>
    %590 = arith.addf %588, %589 : vector<4x64xf32>
    %591 = arith.negf %590 : vector<4x64xf32>
    %592 = math.exp %591 : vector<4x64xf32>
    %cst_90 = arith.constant 1.000000e+00 : f32
    %593 = vector.broadcast %cst_90 : f32 to vector<4x64xf32>
    %594 = arith.addf %593, %592 : vector<4x64xf32>
    %595 = arith.divf %593, %594 : vector<4x64xf32>
    %596 = vector.extract_strided_slice %595 {offsets = [0, 0], sizes = [4, 32], strides = [1, 1]} : vector<4x64xf32> to vector<4x32xf32>
    %597 = vector.extract_strided_slice %595 {offsets = [0, 32], sizes = [4, 32], strides = [1, 1]} : vector<4x64xf32> to vector<4x32xf32>
    %598 = vector.extract_strided_slice %502 {offsets = [3, 0, 64], sizes = [1, 4, 32], strides = [1, 1, 1]} : vector<8x4x128xf32> to vector<1x4x32xf32>
    %599 = vector.shape_cast %598 : vector<1x4x32xf32> to vector<4x32xf32>
    %600 = vector.extract_strided_slice %586 {offsets = [0, 64], sizes = [4, 32], strides = [1, 1]} : vector<4x128xf32> to vector<4x32xf32>
    %601 = vector.broadcast %506 : vector<1x32xf32> to vector<4x32xf32>
    %602 = arith.addf %600, %601 : vector<4x32xf32>
    %603 = arith.mulf %596, %602 : vector<4x32xf32>
    %604 = arith.addf %599, %603 : vector<4x32xf32>
    %605 = math.tanh %604 : vector<4x32xf32>
    %cst_91 = arith.constant 1.000000e+00 : f32
    %606 = vector.broadcast %cst_91 : f32 to vector<4x32xf32>
    %607 = arith.subf %606, %597 : vector<4x32xf32>
    %608 = arith.mulf %607, %605 : vector<4x32xf32>
    %609 = arith.mulf %597, %584 : vector<4x32xf32>
    %610 = arith.addf %608, %609 : vector<4x32xf32>
    %611 = arith.truncf %610 : vector<4x32xf32> to vector<4x32xbf16>
    %cst_92 = arith.constant dense<0.000000e+00> : vector<4x128xf32>
    %612 = tpu.matmul %611, %504, %cst_92 {dimension_numbers = #tpu.dot_dimension_numbers<[1], [0], [0], [1], [0, 0, 1, 1], [], []>} : vector<4x32xbf16>, vector<32x128xbf16>, vector<4x128xf32> -> vector<4x128xf32>
    %613 = vector.extract_strided_slice %502 {offsets = [4, 0, 0], sizes = [1, 4, 64], strides = [1, 1, 1]} : vector<8x4x128xf32> to vector<1x4x64xf32>
    %614 = vector.shape_cast %613 : vector<1x4x64xf32> to vector<4x64xf32>
    %615 = vector.extract_strided_slice %612 {offsets = [0, 0], sizes = [4, 64], strides = [1, 1]} : vector<4x128xf32> to vector<4x64xf32>
    %616 = arith.addf %614, %615 : vector<4x64xf32>
    %617 = arith.negf %616 : vector<4x64xf32>
    %618 = math.exp %617 : vector<4x64xf32>
    %cst_93 = arith.constant 1.000000e+00 : f32
    %619 = vector.broadcast %cst_93 : f32 to vector<4x64xf32>
    %620 = arith.addf %619, %618 : vector<4x64xf32>
    %621 = arith.divf %619, %620 : vector<4x64xf32>
    %622 = vector.extract_strided_slice %621 {offsets = [0, 0], sizes = [4, 32], strides = [1, 1]} : vector<4x64xf32> to vector<4x32xf32>
    %623 = vector.extract_strided_slice %621 {offsets = [0, 32], sizes = [4, 32], strides = [1, 1]} : vector<4x64xf32> to vector<4x32xf32>
    %624 = vector.extract_strided_slice %502 {offsets = [4, 0, 64], sizes = [1, 4, 32], strides = [1, 1, 1]} : vector<8x4x128xf32> to vector<1x4x32xf32>
    %625 = vector.shape_cast %624 : vector<1x4x32xf32> to vector<4x32xf32>
    %626 = vector.extract_strided_slice %612 {offsets = [0, 64], sizes = [4, 32], strides = [1, 1]} : vector<4x128xf32> to vector<4x32xf32>
    %627 = vector.broadcast %506 : vector<1x32xf32> to vector<4x32xf32>
    %628 = arith.addf %626, %627 : vector<4x32xf32>
    %629 = arith.mulf %622, %628 : vector<4x32xf32>
    %630 = arith.addf %625, %629 : vector<4x32xf32>
    %631 = math.tanh %630 : vector<4x32xf32>
    %cst_94 = arith.constant 1.000000e+00 : f32
    %632 = vector.broadcast %cst_94 : f32 to vector<4x32xf32>
    %633 = arith.subf %632, %623 : vector<4x32xf32>
    %634 = arith.mulf %633, %631 : vector<4x32xf32>
    %635 = arith.mulf %623, %610 : vector<4x32xf32>
    %636 = arith.addf %634, %635 : vector<4x32xf32>
    %637 = arith.truncf %636 : vector<4x32xf32> to vector<4x32xbf16>
    %cst_95 = arith.constant dense<0.000000e+00> : vector<4x128xf32>
    %638 = tpu.matmul %637, %504, %cst_95 {dimension_numbers = #tpu.dot_dimension_numbers<[1], [0], [0], [1], [0, 0, 1, 1], [], []>} : vector<4x32xbf16>, vector<32x128xbf16>, vector<4x128xf32> -> vector<4x128xf32>
    %639 = vector.extract_strided_slice %502 {offsets = [5, 0, 0], sizes = [1, 4, 64], strides = [1, 1, 1]} : vector<8x4x128xf32> to vector<1x4x64xf32>
    %640 = vector.shape_cast %639 : vector<1x4x64xf32> to vector<4x64xf32>
    %641 = vector.extract_strided_slice %638 {offsets = [0, 0], sizes = [4, 64], strides = [1, 1]} : vector<4x128xf32> to vector<4x64xf32>
    %642 = arith.addf %640, %641 : vector<4x64xf32>
    %643 = arith.negf %642 : vector<4x64xf32>
    %644 = math.exp %643 : vector<4x64xf32>
    %cst_96 = arith.constant 1.000000e+00 : f32
    %645 = vector.broadcast %cst_96 : f32 to vector<4x64xf32>
    %646 = arith.addf %645, %644 : vector<4x64xf32>
    %647 = arith.divf %645, %646 : vector<4x64xf32>
    %648 = vector.extract_strided_slice %647 {offsets = [0, 0], sizes = [4, 32], strides = [1, 1]} : vector<4x64xf32> to vector<4x32xf32>
    %649 = vector.extract_strided_slice %647 {offsets = [0, 32], sizes = [4, 32], strides = [1, 1]} : vector<4x64xf32> to vector<4x32xf32>
    %650 = vector.extract_strided_slice %502 {offsets = [5, 0, 64], sizes = [1, 4, 32], strides = [1, 1, 1]} : vector<8x4x128xf32> to vector<1x4x32xf32>
    %651 = vector.shape_cast %650 : vector<1x4x32xf32> to vector<4x32xf32>
    %652 = vector.extract_strided_slice %638 {offsets = [0, 64], sizes = [4, 32], strides = [1, 1]} : vector<4x128xf32> to vector<4x32xf32>
    %653 = vector.broadcast %506 : vector<1x32xf32> to vector<4x32xf32>
    %654 = arith.addf %652, %653 : vector<4x32xf32>
    %655 = arith.mulf %648, %654 : vector<4x32xf32>
    %656 = arith.addf %651, %655 : vector<4x32xf32>
    %657 = math.tanh %656 : vector<4x32xf32>
    %cst_97 = arith.constant 1.000000e+00 : f32
    %658 = vector.broadcast %cst_97 : f32 to vector<4x32xf32>
    %659 = arith.subf %658, %649 : vector<4x32xf32>
    %660 = arith.mulf %659, %657 : vector<4x32xf32>
    %661 = arith.mulf %649, %636 : vector<4x32xf32>
    %662 = arith.addf %660, %661 : vector<4x32xf32>
    %663 = arith.truncf %662 : vector<4x32xf32> to vector<4x32xbf16>
    %cst_98 = arith.constant dense<0.000000e+00> : vector<4x128xf32>
    %664 = tpu.matmul %663, %504, %cst_98 {dimension_numbers = #tpu.dot_dimension_numbers<[1], [0], [0], [1], [0, 0, 1, 1], [], []>} : vector<4x32xbf16>, vector<32x128xbf16>, vector<4x128xf32> -> vector<4x128xf32>
    %665 = vector.extract_strided_slice %502 {offsets = [6, 0, 0], sizes = [1, 4, 64], strides = [1, 1, 1]} : vector<8x4x128xf32> to vector<1x4x64xf32>
    %666 = vector.shape_cast %665 : vector<1x4x64xf32> to vector<4x64xf32>
    %667 = vector.extract_strided_slice %664 {offsets = [0, 0], sizes = [4, 64], strides = [1, 1]} : vector<4x128xf32> to vector<4x64xf32>
    %668 = arith.addf %666, %667 : vector<4x64xf32>
    %669 = arith.negf %668 : vector<4x64xf32>
    %670 = math.exp %669 : vector<4x64xf32>
    %cst_99 = arith.constant 1.000000e+00 : f32
    %671 = vector.broadcast %cst_99 : f32 to vector<4x64xf32>
    %672 = arith.addf %671, %670 : vector<4x64xf32>
    %673 = arith.divf %671, %672 : vector<4x64xf32>
    %674 = vector.extract_strided_slice %673 {offsets = [0, 0], sizes = [4, 32], strides = [1, 1]} : vector<4x64xf32> to vector<4x32xf32>
    %675 = vector.extract_strided_slice %673 {offsets = [0, 32], sizes = [4, 32], strides = [1, 1]} : vector<4x64xf32> to vector<4x32xf32>
    %676 = vector.extract_strided_slice %502 {offsets = [6, 0, 64], sizes = [1, 4, 32], strides = [1, 1, 1]} : vector<8x4x128xf32> to vector<1x4x32xf32>
    %677 = vector.shape_cast %676 : vector<1x4x32xf32> to vector<4x32xf32>
    %678 = vector.extract_strided_slice %664 {offsets = [0, 64], sizes = [4, 32], strides = [1, 1]} : vector<4x128xf32> to vector<4x32xf32>
    %679 = vector.broadcast %506 : vector<1x32xf32> to vector<4x32xf32>
    %680 = arith.addf %678, %679 : vector<4x32xf32>
    %681 = arith.mulf %674, %680 : vector<4x32xf32>
    %682 = arith.addf %677, %681 : vector<4x32xf32>
    %683 = math.tanh %682 : vector<4x32xf32>
    %cst_100 = arith.constant 1.000000e+00 : f32
    %684 = vector.broadcast %cst_100 : f32 to vector<4x32xf32>
    %685 = arith.subf %684, %675 : vector<4x32xf32>
    %686 = arith.mulf %685, %683 : vector<4x32xf32>
    %687 = arith.mulf %675, %662 : vector<4x32xf32>
    %688 = arith.addf %686, %687 : vector<4x32xf32>
    %689 = arith.truncf %688 : vector<4x32xf32> to vector<4x32xbf16>
    %cst_101 = arith.constant dense<0.000000e+00> : vector<4x128xf32>
    %690 = tpu.matmul %689, %504, %cst_101 {dimension_numbers = #tpu.dot_dimension_numbers<[1], [0], [0], [1], [0, 0, 1, 1], [], []>} : vector<4x32xbf16>, vector<32x128xbf16>, vector<4x128xf32> -> vector<4x128xf32>
    %691 = vector.extract_strided_slice %502 {offsets = [7, 0, 0], sizes = [1, 4, 64], strides = [1, 1, 1]} : vector<8x4x128xf32> to vector<1x4x64xf32>
    %692 = vector.shape_cast %691 : vector<1x4x64xf32> to vector<4x64xf32>
    %693 = vector.extract_strided_slice %690 {offsets = [0, 0], sizes = [4, 64], strides = [1, 1]} : vector<4x128xf32> to vector<4x64xf32>
    %694 = arith.addf %692, %693 : vector<4x64xf32>
    %695 = arith.negf %694 : vector<4x64xf32>
    %696 = math.exp %695 : vector<4x64xf32>
    %cst_102 = arith.constant 1.000000e+00 : f32
    %697 = vector.broadcast %cst_102 : f32 to vector<4x64xf32>
    %698 = arith.addf %697, %696 : vector<4x64xf32>
    %699 = arith.divf %697, %698 : vector<4x64xf32>
    %700 = vector.extract_strided_slice %699 {offsets = [0, 0], sizes = [4, 32], strides = [1, 1]} : vector<4x64xf32> to vector<4x32xf32>
    %701 = vector.extract_strided_slice %699 {offsets = [0, 32], sizes = [4, 32], strides = [1, 1]} : vector<4x64xf32> to vector<4x32xf32>
    %702 = vector.extract_strided_slice %502 {offsets = [7, 0, 64], sizes = [1, 4, 32], strides = [1, 1, 1]} : vector<8x4x128xf32> to vector<1x4x32xf32>
    %703 = vector.shape_cast %702 : vector<1x4x32xf32> to vector<4x32xf32>
    %704 = vector.extract_strided_slice %690 {offsets = [0, 64], sizes = [4, 32], strides = [1, 1]} : vector<4x128xf32> to vector<4x32xf32>
    %705 = vector.broadcast %506 : vector<1x32xf32> to vector<4x32xf32>
    %706 = arith.addf %704, %705 : vector<4x32xf32>
    %707 = arith.mulf %700, %706 : vector<4x32xf32>
    %708 = arith.addf %703, %707 : vector<4x32xf32>
    %709 = math.tanh %708 : vector<4x32xf32>
    %cst_103 = arith.constant 1.000000e+00 : f32
    %710 = vector.broadcast %cst_103 : f32 to vector<4x32xf32>
    %711 = arith.subf %710, %701 : vector<4x32xf32>
    %712 = arith.mulf %711, %709 : vector<4x32xf32>
    %713 = arith.mulf %701, %688 : vector<4x32xf32>
    %714 = arith.addf %712, %713 : vector<4x32xf32>
    %715 = vector.shape_cast %532 : vector<4x32xf32> to vector<1x4x32xf32>
    %716 = vector.shape_cast %558 : vector<4x32xf32> to vector<1x4x32xf32>
    %717 = vector.shape_cast %584 : vector<4x32xf32> to vector<1x4x32xf32>
    %718 = vector.shape_cast %610 : vector<4x32xf32> to vector<1x4x32xf32>
    %719 = vector.shape_cast %636 : vector<4x32xf32> to vector<1x4x32xf32>
    %720 = vector.shape_cast %662 : vector<4x32xf32> to vector<1x4x32xf32>
    %721 = vector.shape_cast %688 : vector<4x32xf32> to vector<1x4x32xf32>
    %722 = vector.shape_cast %714 : vector<4x32xf32> to vector<1x4x32xf32>
    %723 = tpu.concatenate %715, %716, %717, %718, %719, %720, %721, %722 in 0 : vector<1x4x32xf32>, vector<1x4x32xf32>, vector<1x4x32xf32>, vector<1x4x32xf32>, vector<1x4x32xf32>, vector<1x4x32xf32>, vector<1x4x32xf32>, vector<1x4x32xf32> -> vector<8x4x32xf32>
    %724 = vector.shape_cast %723 : vector<8x4x32xf32> to vector<32x32xf32>
    %725 = arith.truncf %724 : vector<32x32xf32> to vector<32x32xbf16>
    %726 = vector.extract_strided_slice %0 {offsets = [1, 0, 0], sizes = [1, 32, 128], strides = [1, 1, 1]} : vector<2x32x128xbf16> to vector<1x32x128xbf16>
    %727 = vector.shape_cast %726 : vector<1x32x128xbf16> to vector<32x128xbf16>
    %cst_104 = arith.constant dense<0.000000e+00> : vector<32x128xf32>
    %728 = tpu.matmul %725, %727, %cst_104 {dimension_numbers = #tpu.dot_dimension_numbers<[1], [0], [0], [1], [0, 0, 1, 1], [], []>} : vector<32x32xbf16>, vector<32x128xbf16>, vector<32x128xf32> -> vector<32x128xf32>
    %729 = vector.extract_strided_slice %2 {offsets = [1, 0, 0], sizes = [1, 1, 128], strides = [1, 1, 1]} : vector<2x1x128xf32> to vector<1x1x128xf32>
    %730 = vector.shape_cast %729 : vector<1x1x128xf32> to vector<1x128xf32>
    %731 = vector.broadcast %730 : vector<1x128xf32> to vector<32x128xf32>
    %732 = arith.addf %728, %731 : vector<32x128xf32>
    %733 = vector.shape_cast %732 : vector<32x128xf32> to vector<8x4x128xf32>
    %734 = vector.extract_strided_slice %1 {offsets = [1, 0, 0], sizes = [1, 32, 128], strides = [1, 1, 1]} : vector<2x32x128xbf16> to vector<1x32x128xbf16>
    %735 = vector.shape_cast %734 : vector<1x32x128xbf16> to vector<32x128xbf16>
    %736 = vector.extract_strided_slice %3 {offsets = [1, 0, 0], sizes = [1, 1, 32], strides = [1, 1, 1]} : vector<2x1x32xf32> to vector<1x1x32xf32>
    %737 = vector.shape_cast %736 : vector<1x1x32xf32> to vector<1x32xf32>
    %738 = arith.truncf %471 : vector<4x32xf32> to vector<4x32xbf16>
    %cst_105 = arith.constant dense<0.000000e+00> : vector<4x128xf32>
    %739 = tpu.matmul %738, %735, %cst_105 {dimension_numbers = #tpu.dot_dimension_numbers<[1], [0], [0], [1], [0, 0, 1, 1], [], []>} : vector<4x32xbf16>, vector<32x128xbf16>, vector<4x128xf32> -> vector<4x128xf32>
    %740 = vector.extract_strided_slice %733 {offsets = [0, 0, 0], sizes = [1, 4, 64], strides = [1, 1, 1]} : vector<8x4x128xf32> to vector<1x4x64xf32>
    %741 = vector.shape_cast %740 : vector<1x4x64xf32> to vector<4x64xf32>
    %742 = vector.extract_strided_slice %739 {offsets = [0, 0], sizes = [4, 64], strides = [1, 1]} : vector<4x128xf32> to vector<4x64xf32>
    %743 = arith.addf %741, %742 : vector<4x64xf32>
    %744 = arith.negf %743 : vector<4x64xf32>
    %745 = math.exp %744 : vector<4x64xf32>
    %cst_106 = arith.constant 1.000000e+00 : f32
    %746 = vector.broadcast %cst_106 : f32 to vector<4x64xf32>
    %747 = arith.addf %746, %745 : vector<4x64xf32>
    %748 = arith.divf %746, %747 : vector<4x64xf32>
    %749 = vector.extract_strided_slice %748 {offsets = [0, 0], sizes = [4, 32], strides = [1, 1]} : vector<4x64xf32> to vector<4x32xf32>
    %750 = vector.extract_strided_slice %748 {offsets = [0, 32], sizes = [4, 32], strides = [1, 1]} : vector<4x64xf32> to vector<4x32xf32>
    %751 = vector.extract_strided_slice %733 {offsets = [0, 0, 64], sizes = [1, 4, 32], strides = [1, 1, 1]} : vector<8x4x128xf32> to vector<1x4x32xf32>
    %752 = vector.shape_cast %751 : vector<1x4x32xf32> to vector<4x32xf32>
    %753 = vector.extract_strided_slice %739 {offsets = [0, 64], sizes = [4, 32], strides = [1, 1]} : vector<4x128xf32> to vector<4x32xf32>
    %754 = vector.broadcast %737 : vector<1x32xf32> to vector<4x32xf32>
    %755 = arith.addf %753, %754 : vector<4x32xf32>
    %756 = arith.mulf %749, %755 : vector<4x32xf32>
    %757 = arith.addf %752, %756 : vector<4x32xf32>
    %758 = math.tanh %757 : vector<4x32xf32>
    %cst_107 = arith.constant 1.000000e+00 : f32
    %759 = vector.broadcast %cst_107 : f32 to vector<4x32xf32>
    %760 = arith.subf %759, %750 : vector<4x32xf32>
    %761 = arith.mulf %760, %758 : vector<4x32xf32>
    %762 = arith.mulf %750, %471 : vector<4x32xf32>
    %763 = arith.addf %761, %762 : vector<4x32xf32>
    %764 = arith.truncf %763 : vector<4x32xf32> to vector<4x32xbf16>
    %cst_108 = arith.constant dense<0.000000e+00> : vector<4x128xf32>
    %765 = tpu.matmul %764, %735, %cst_108 {dimension_numbers = #tpu.dot_dimension_numbers<[1], [0], [0], [1], [0, 0, 1, 1], [], []>} : vector<4x32xbf16>, vector<32x128xbf16>, vector<4x128xf32> -> vector<4x128xf32>
    %766 = vector.extract_strided_slice %733 {offsets = [1, 0, 0], sizes = [1, 4, 64], strides = [1, 1, 1]} : vector<8x4x128xf32> to vector<1x4x64xf32>
    %767 = vector.shape_cast %766 : vector<1x4x64xf32> to vector<4x64xf32>
    %768 = vector.extract_strided_slice %765 {offsets = [0, 0], sizes = [4, 64], strides = [1, 1]} : vector<4x128xf32> to vector<4x64xf32>
    %769 = arith.addf %767, %768 : vector<4x64xf32>
    %770 = arith.negf %769 : vector<4x64xf32>
    %771 = math.exp %770 : vector<4x64xf32>
    %cst_109 = arith.constant 1.000000e+00 : f32
    %772 = vector.broadcast %cst_109 : f32 to vector<4x64xf32>
    %773 = arith.addf %772, %771 : vector<4x64xf32>
    %774 = arith.divf %772, %773 : vector<4x64xf32>
    %775 = vector.extract_strided_slice %774 {offsets = [0, 0], sizes = [4, 32], strides = [1, 1]} : vector<4x64xf32> to vector<4x32xf32>
    %776 = vector.extract_strided_slice %774 {offsets = [0, 32], sizes = [4, 32], strides = [1, 1]} : vector<4x64xf32> to vector<4x32xf32>
    %777 = vector.extract_strided_slice %733 {offsets = [1, 0, 64], sizes = [1, 4, 32], strides = [1, 1, 1]} : vector<8x4x128xf32> to vector<1x4x32xf32>
    %778 = vector.shape_cast %777 : vector<1x4x32xf32> to vector<4x32xf32>
    %779 = vector.extract_strided_slice %765 {offsets = [0, 64], sizes = [4, 32], strides = [1, 1]} : vector<4x128xf32> to vector<4x32xf32>
    %780 = vector.broadcast %737 : vector<1x32xf32> to vector<4x32xf32>
    %781 = arith.addf %779, %780 : vector<4x32xf32>
    %782 = arith.mulf %775, %781 : vector<4x32xf32>
    %783 = arith.addf %778, %782 : vector<4x32xf32>
    %784 = math.tanh %783 : vector<4x32xf32>
    %cst_110 = arith.constant 1.000000e+00 : f32
    %785 = vector.broadcast %cst_110 : f32 to vector<4x32xf32>
    %786 = arith.subf %785, %776 : vector<4x32xf32>
    %787 = arith.mulf %786, %784 : vector<4x32xf32>
    %788 = arith.mulf %776, %763 : vector<4x32xf32>
    %789 = arith.addf %787, %788 : vector<4x32xf32>
    %790 = arith.truncf %789 : vector<4x32xf32> to vector<4x32xbf16>
    %cst_111 = arith.constant dense<0.000000e+00> : vector<4x128xf32>
    %791 = tpu.matmul %790, %735, %cst_111 {dimension_numbers = #tpu.dot_dimension_numbers<[1], [0], [0], [1], [0, 0, 1, 1], [], []>} : vector<4x32xbf16>, vector<32x128xbf16>, vector<4x128xf32> -> vector<4x128xf32>
    %792 = vector.extract_strided_slice %733 {offsets = [2, 0, 0], sizes = [1, 4, 64], strides = [1, 1, 1]} : vector<8x4x128xf32> to vector<1x4x64xf32>
    %793 = vector.shape_cast %792 : vector<1x4x64xf32> to vector<4x64xf32>
    %794 = vector.extract_strided_slice %791 {offsets = [0, 0], sizes = [4, 64], strides = [1, 1]} : vector<4x128xf32> to vector<4x64xf32>
    %795 = arith.addf %793, %794 : vector<4x64xf32>
    %796 = arith.negf %795 : vector<4x64xf32>
    %797 = math.exp %796 : vector<4x64xf32>
    %cst_112 = arith.constant 1.000000e+00 : f32
    %798 = vector.broadcast %cst_112 : f32 to vector<4x64xf32>
    %799 = arith.addf %798, %797 : vector<4x64xf32>
    %800 = arith.divf %798, %799 : vector<4x64xf32>
    %801 = vector.extract_strided_slice %800 {offsets = [0, 0], sizes = [4, 32], strides = [1, 1]} : vector<4x64xf32> to vector<4x32xf32>
    %802 = vector.extract_strided_slice %800 {offsets = [0, 32], sizes = [4, 32], strides = [1, 1]} : vector<4x64xf32> to vector<4x32xf32>
    %803 = vector.extract_strided_slice %733 {offsets = [2, 0, 64], sizes = [1, 4, 32], strides = [1, 1, 1]} : vector<8x4x128xf32> to vector<1x4x32xf32>
    %804 = vector.shape_cast %803 : vector<1x4x32xf32> to vector<4x32xf32>
    %805 = vector.extract_strided_slice %791 {offsets = [0, 64], sizes = [4, 32], strides = [1, 1]} : vector<4x128xf32> to vector<4x32xf32>
    %806 = vector.broadcast %737 : vector<1x32xf32> to vector<4x32xf32>
    %807 = arith.addf %805, %806 : vector<4x32xf32>
    %808 = arith.mulf %801, %807 : vector<4x32xf32>
    %809 = arith.addf %804, %808 : vector<4x32xf32>
    %810 = math.tanh %809 : vector<4x32xf32>
    %cst_113 = arith.constant 1.000000e+00 : f32
    %811 = vector.broadcast %cst_113 : f32 to vector<4x32xf32>
    %812 = arith.subf %811, %802 : vector<4x32xf32>
    %813 = arith.mulf %812, %810 : vector<4x32xf32>
    %814 = arith.mulf %802, %789 : vector<4x32xf32>
    %815 = arith.addf %813, %814 : vector<4x32xf32>
    %816 = arith.truncf %815 : vector<4x32xf32> to vector<4x32xbf16>
    %cst_114 = arith.constant dense<0.000000e+00> : vector<4x128xf32>
    %817 = tpu.matmul %816, %735, %cst_114 {dimension_numbers = #tpu.dot_dimension_numbers<[1], [0], [0], [1], [0, 0, 1, 1], [], []>} : vector<4x32xbf16>, vector<32x128xbf16>, vector<4x128xf32> -> vector<4x128xf32>
    %818 = vector.extract_strided_slice %733 {offsets = [3, 0, 0], sizes = [1, 4, 64], strides = [1, 1, 1]} : vector<8x4x128xf32> to vector<1x4x64xf32>
    %819 = vector.shape_cast %818 : vector<1x4x64xf32> to vector<4x64xf32>
    %820 = vector.extract_strided_slice %817 {offsets = [0, 0], sizes = [4, 64], strides = [1, 1]} : vector<4x128xf32> to vector<4x64xf32>
    %821 = arith.addf %819, %820 : vector<4x64xf32>
    %822 = arith.negf %821 : vector<4x64xf32>
    %823 = math.exp %822 : vector<4x64xf32>
    %cst_115 = arith.constant 1.000000e+00 : f32
    %824 = vector.broadcast %cst_115 : f32 to vector<4x64xf32>
    %825 = arith.addf %824, %823 : vector<4x64xf32>
    %826 = arith.divf %824, %825 : vector<4x64xf32>
    %827 = vector.extract_strided_slice %826 {offsets = [0, 0], sizes = [4, 32], strides = [1, 1]} : vector<4x64xf32> to vector<4x32xf32>
    %828 = vector.extract_strided_slice %826 {offsets = [0, 32], sizes = [4, 32], strides = [1, 1]} : vector<4x64xf32> to vector<4x32xf32>
    %829 = vector.extract_strided_slice %733 {offsets = [3, 0, 64], sizes = [1, 4, 32], strides = [1, 1, 1]} : vector<8x4x128xf32> to vector<1x4x32xf32>
    %830 = vector.shape_cast %829 : vector<1x4x32xf32> to vector<4x32xf32>
    %831 = vector.extract_strided_slice %817 {offsets = [0, 64], sizes = [4, 32], strides = [1, 1]} : vector<4x128xf32> to vector<4x32xf32>
    %832 = vector.broadcast %737 : vector<1x32xf32> to vector<4x32xf32>
    %833 = arith.addf %831, %832 : vector<4x32xf32>
    %834 = arith.mulf %827, %833 : vector<4x32xf32>
    %835 = arith.addf %830, %834 : vector<4x32xf32>
    %836 = math.tanh %835 : vector<4x32xf32>
    %cst_116 = arith.constant 1.000000e+00 : f32
    %837 = vector.broadcast %cst_116 : f32 to vector<4x32xf32>
    %838 = arith.subf %837, %828 : vector<4x32xf32>
    %839 = arith.mulf %838, %836 : vector<4x32xf32>
    %840 = arith.mulf %828, %815 : vector<4x32xf32>
    %841 = arith.addf %839, %840 : vector<4x32xf32>
    %842 = arith.truncf %841 : vector<4x32xf32> to vector<4x32xbf16>
    %cst_117 = arith.constant dense<0.000000e+00> : vector<4x128xf32>
    %843 = tpu.matmul %842, %735, %cst_117 {dimension_numbers = #tpu.dot_dimension_numbers<[1], [0], [0], [1], [0, 0, 1, 1], [], []>} : vector<4x32xbf16>, vector<32x128xbf16>, vector<4x128xf32> -> vector<4x128xf32>
    %844 = vector.extract_strided_slice %733 {offsets = [4, 0, 0], sizes = [1, 4, 64], strides = [1, 1, 1]} : vector<8x4x128xf32> to vector<1x4x64xf32>
    %845 = vector.shape_cast %844 : vector<1x4x64xf32> to vector<4x64xf32>
    %846 = vector.extract_strided_slice %843 {offsets = [0, 0], sizes = [4, 64], strides = [1, 1]} : vector<4x128xf32> to vector<4x64xf32>
    %847 = arith.addf %845, %846 : vector<4x64xf32>
    %848 = arith.negf %847 : vector<4x64xf32>
    %849 = math.exp %848 : vector<4x64xf32>
    %cst_118 = arith.constant 1.000000e+00 : f32
    %850 = vector.broadcast %cst_118 : f32 to vector<4x64xf32>
    %851 = arith.addf %850, %849 : vector<4x64xf32>
    %852 = arith.divf %850, %851 : vector<4x64xf32>
    %853 = vector.extract_strided_slice %852 {offsets = [0, 0], sizes = [4, 32], strides = [1, 1]} : vector<4x64xf32> to vector<4x32xf32>
    %854 = vector.extract_strided_slice %852 {offsets = [0, 32], sizes = [4, 32], strides = [1, 1]} : vector<4x64xf32> to vector<4x32xf32>
    %855 = vector.extract_strided_slice %733 {offsets = [4, 0, 64], sizes = [1, 4, 32], strides = [1, 1, 1]} : vector<8x4x128xf32> to vector<1x4x32xf32>
    %856 = vector.shape_cast %855 : vector<1x4x32xf32> to vector<4x32xf32>
    %857 = vector.extract_strided_slice %843 {offsets = [0, 64], sizes = [4, 32], strides = [1, 1]} : vector<4x128xf32> to vector<4x32xf32>
    %858 = vector.broadcast %737 : vector<1x32xf32> to vector<4x32xf32>
    %859 = arith.addf %857, %858 : vector<4x32xf32>
    %860 = arith.mulf %853, %859 : vector<4x32xf32>
    %861 = arith.addf %856, %860 : vector<4x32xf32>
    %862 = math.tanh %861 : vector<4x32xf32>
    %cst_119 = arith.constant 1.000000e+00 : f32
    %863 = vector.broadcast %cst_119 : f32 to vector<4x32xf32>
    %864 = arith.subf %863, %854 : vector<4x32xf32>
    %865 = arith.mulf %864, %862 : vector<4x32xf32>
    %866 = arith.mulf %854, %841 : vector<4x32xf32>
    %867 = arith.addf %865, %866 : vector<4x32xf32>
    %868 = arith.truncf %867 : vector<4x32xf32> to vector<4x32xbf16>
    %cst_120 = arith.constant dense<0.000000e+00> : vector<4x128xf32>
    %869 = tpu.matmul %868, %735, %cst_120 {dimension_numbers = #tpu.dot_dimension_numbers<[1], [0], [0], [1], [0, 0, 1, 1], [], []>} : vector<4x32xbf16>, vector<32x128xbf16>, vector<4x128xf32> -> vector<4x128xf32>
    %870 = vector.extract_strided_slice %733 {offsets = [5, 0, 0], sizes = [1, 4, 64], strides = [1, 1, 1]} : vector<8x4x128xf32> to vector<1x4x64xf32>
    %871 = vector.shape_cast %870 : vector<1x4x64xf32> to vector<4x64xf32>
    %872 = vector.extract_strided_slice %869 {offsets = [0, 0], sizes = [4, 64], strides = [1, 1]} : vector<4x128xf32> to vector<4x64xf32>
    %873 = arith.addf %871, %872 : vector<4x64xf32>
    %874 = arith.negf %873 : vector<4x64xf32>
    %875 = math.exp %874 : vector<4x64xf32>
    %cst_121 = arith.constant 1.000000e+00 : f32
    %876 = vector.broadcast %cst_121 : f32 to vector<4x64xf32>
    %877 = arith.addf %876, %875 : vector<4x64xf32>
    %878 = arith.divf %876, %877 : vector<4x64xf32>
    %879 = vector.extract_strided_slice %878 {offsets = [0, 0], sizes = [4, 32], strides = [1, 1]} : vector<4x64xf32> to vector<4x32xf32>
    %880 = vector.extract_strided_slice %878 {offsets = [0, 32], sizes = [4, 32], strides = [1, 1]} : vector<4x64xf32> to vector<4x32xf32>
    %881 = vector.extract_strided_slice %733 {offsets = [5, 0, 64], sizes = [1, 4, 32], strides = [1, 1, 1]} : vector<8x4x128xf32> to vector<1x4x32xf32>
    %882 = vector.shape_cast %881 : vector<1x4x32xf32> to vector<4x32xf32>
    %883 = vector.extract_strided_slice %869 {offsets = [0, 64], sizes = [4, 32], strides = [1, 1]} : vector<4x128xf32> to vector<4x32xf32>
    %884 = vector.broadcast %737 : vector<1x32xf32> to vector<4x32xf32>
    %885 = arith.addf %883, %884 : vector<4x32xf32>
    %886 = arith.mulf %879, %885 : vector<4x32xf32>
    %887 = arith.addf %882, %886 : vector<4x32xf32>
    %888 = math.tanh %887 : vector<4x32xf32>
    %cst_122 = arith.constant 1.000000e+00 : f32
    %889 = vector.broadcast %cst_122 : f32 to vector<4x32xf32>
    %890 = arith.subf %889, %880 : vector<4x32xf32>
    %891 = arith.mulf %890, %888 : vector<4x32xf32>
    %892 = arith.mulf %880, %867 : vector<4x32xf32>
    %893 = arith.addf %891, %892 : vector<4x32xf32>
    %894 = arith.truncf %893 : vector<4x32xf32> to vector<4x32xbf16>
    %cst_123 = arith.constant dense<0.000000e+00> : vector<4x128xf32>
    %895 = tpu.matmul %894, %735, %cst_123 {dimension_numbers = #tpu.dot_dimension_numbers<[1], [0], [0], [1], [0, 0, 1, 1], [], []>} : vector<4x32xbf16>, vector<32x128xbf16>, vector<4x128xf32> -> vector<4x128xf32>
    %896 = vector.extract_strided_slice %733 {offsets = [6, 0, 0], sizes = [1, 4, 64], strides = [1, 1, 1]} : vector<8x4x128xf32> to vector<1x4x64xf32>
    %897 = vector.shape_cast %896 : vector<1x4x64xf32> to vector<4x64xf32>
    %898 = vector.extract_strided_slice %895 {offsets = [0, 0], sizes = [4, 64], strides = [1, 1]} : vector<4x128xf32> to vector<4x64xf32>
    %899 = arith.addf %897, %898 : vector<4x64xf32>
    %900 = arith.negf %899 : vector<4x64xf32>
    %901 = math.exp %900 : vector<4x64xf32>
    %cst_124 = arith.constant 1.000000e+00 : f32
    %902 = vector.broadcast %cst_124 : f32 to vector<4x64xf32>
    %903 = arith.addf %902, %901 : vector<4x64xf32>
    %904 = arith.divf %902, %903 : vector<4x64xf32>
    %905 = vector.extract_strided_slice %904 {offsets = [0, 0], sizes = [4, 32], strides = [1, 1]} : vector<4x64xf32> to vector<4x32xf32>
    %906 = vector.extract_strided_slice %904 {offsets = [0, 32], sizes = [4, 32], strides = [1, 1]} : vector<4x64xf32> to vector<4x32xf32>
    %907 = vector.extract_strided_slice %733 {offsets = [6, 0, 64], sizes = [1, 4, 32], strides = [1, 1, 1]} : vector<8x4x128xf32> to vector<1x4x32xf32>
    %908 = vector.shape_cast %907 : vector<1x4x32xf32> to vector<4x32xf32>
    %909 = vector.extract_strided_slice %895 {offsets = [0, 64], sizes = [4, 32], strides = [1, 1]} : vector<4x128xf32> to vector<4x32xf32>
    %910 = vector.broadcast %737 : vector<1x32xf32> to vector<4x32xf32>
    %911 = arith.addf %909, %910 : vector<4x32xf32>
    %912 = arith.mulf %905, %911 : vector<4x32xf32>
    %913 = arith.addf %908, %912 : vector<4x32xf32>
    %914 = math.tanh %913 : vector<4x32xf32>
    %cst_125 = arith.constant 1.000000e+00 : f32
    %915 = vector.broadcast %cst_125 : f32 to vector<4x32xf32>
    %916 = arith.subf %915, %906 : vector<4x32xf32>
    %917 = arith.mulf %916, %914 : vector<4x32xf32>
    %918 = arith.mulf %906, %893 : vector<4x32xf32>
    %919 = arith.addf %917, %918 : vector<4x32xf32>
    %920 = arith.truncf %919 : vector<4x32xf32> to vector<4x32xbf16>
    %cst_126 = arith.constant dense<0.000000e+00> : vector<4x128xf32>
    %921 = tpu.matmul %920, %735, %cst_126 {dimension_numbers = #tpu.dot_dimension_numbers<[1], [0], [0], [1], [0, 0, 1, 1], [], []>} : vector<4x32xbf16>, vector<32x128xbf16>, vector<4x128xf32> -> vector<4x128xf32>
    %922 = vector.extract_strided_slice %733 {offsets = [7, 0, 0], sizes = [1, 4, 64], strides = [1, 1, 1]} : vector<8x4x128xf32> to vector<1x4x64xf32>
    %923 = vector.shape_cast %922 : vector<1x4x64xf32> to vector<4x64xf32>
    %924 = vector.extract_strided_slice %921 {offsets = [0, 0], sizes = [4, 64], strides = [1, 1]} : vector<4x128xf32> to vector<4x64xf32>
    %925 = arith.addf %923, %924 : vector<4x64xf32>
    %926 = arith.negf %925 : vector<4x64xf32>
    %927 = math.exp %926 : vector<4x64xf32>
    %cst_127 = arith.constant 1.000000e+00 : f32
    %928 = vector.broadcast %cst_127 : f32 to vector<4x64xf32>
    %929 = arith.addf %928, %927 : vector<4x64xf32>
    %930 = arith.divf %928, %929 : vector<4x64xf32>
    %931 = vector.extract_strided_slice %930 {offsets = [0, 0], sizes = [4, 32], strides = [1, 1]} : vector<4x64xf32> to vector<4x32xf32>
    %932 = vector.extract_strided_slice %930 {offsets = [0, 32], sizes = [4, 32], strides = [1, 1]} : vector<4x64xf32> to vector<4x32xf32>
    %933 = vector.extract_strided_slice %733 {offsets = [7, 0, 64], sizes = [1, 4, 32], strides = [1, 1, 1]} : vector<8x4x128xf32> to vector<1x4x32xf32>
    %934 = vector.shape_cast %933 : vector<1x4x32xf32> to vector<4x32xf32>
    %935 = vector.extract_strided_slice %921 {offsets = [0, 64], sizes = [4, 32], strides = [1, 1]} : vector<4x128xf32> to vector<4x32xf32>
    %936 = vector.broadcast %737 : vector<1x32xf32> to vector<4x32xf32>
    %937 = arith.addf %935, %936 : vector<4x32xf32>
    %938 = arith.mulf %931, %937 : vector<4x32xf32>
    %939 = arith.addf %934, %938 : vector<4x32xf32>
    %940 = math.tanh %939 : vector<4x32xf32>
    %cst_128 = arith.constant 1.000000e+00 : f32
    %941 = vector.broadcast %cst_128 : f32 to vector<4x32xf32>
    %942 = arith.subf %941, %932 : vector<4x32xf32>
    %943 = arith.mulf %942, %940 : vector<4x32xf32>
    %944 = arith.mulf %932, %919 : vector<4x32xf32>
    %945 = arith.addf %943, %944 : vector<4x32xf32>
    %c0_129 = arith.constant 0 : index
    %c0_130 = arith.constant 0 : index
    %c0_131 = arith.constant 0 : index
    %946 = vector.load %arg13[%c0_129, %c0_130, %c0_131] : memref<2x4x32xf32, #tpu.memory_space<vmem>>, vector<1x4x32xf32>
    %947 = vector.shape_cast %946 : vector<1x4x32xf32> to vector<4x32xf32>
    %948 = vector.shape_cast %714 : vector<4x32xf32> to vector<1x4x32xf32>
    tpu.vector_store %arg13[%c0_129, %c0_130, %c0_131], %948 {strides = array<i32>} : memref<2x4x32xf32, #tpu.memory_space<vmem>>, vector<1x4x32xf32>,
    %c1_132 = arith.constant 1 : index
    %c0_133 = arith.constant 0 : index
    %c0_134 = arith.constant 0 : index
    %949 = vector.load %arg13[%c1_132, %c0_133, %c0_134] : memref<2x4x32xf32, #tpu.memory_space<vmem>>, vector<1x4x32xf32>
    %950 = vector.shape_cast %949 : vector<1x4x32xf32> to vector<4x32xf32>
    %951 = vector.shape_cast %945 : vector<4x32xf32> to vector<1x4x32xf32>
    tpu.vector_store %arg13[%c1_132, %c0_133, %c0_134], %951 {strides = array<i32>} : memref<2x4x32xf32, #tpu.memory_space<vmem>>, vector<1x4x32xf32>,
    %c0_135 = arith.constant 0 : index
    %c0_136 = arith.constant 0 : index
    %c0_137 = arith.constant 0 : index
    %952 = vector.load %arg10[%c0_135, %c0_136, %c0_137] : memref<8x1x32xf32, #tpu.memory_space<vmem>>, vector<8x1x32xf32>
    %cst_138 = arith.constant 0.000000e+00 : f32
    %953 = vector.broadcast %cst_138 : f32 to vector<4x32xf32>
    %954 = math.tanh %763 : vector<4x32xf32>
    %955 = vector.extract_strided_slice %952 {offsets = [0, 0, 0], sizes = [1, 1, 32], strides = [1, 1, 1]} : vector<8x1x32xf32> to vector<1x1x32xf32>
    %956 = vector.shape_cast %955 : vector<1x1x32xf32> to vector<1x32xf32>
    %957 = vector.broadcast %956 : vector<1x32xf32> to vector<4x32xf32>
    %958 = arith.mulf %954, %957 : vector<4x32xf32>
    %959 = arith.addf %953, %958 : vector<4x32xf32>
    %960 = math.tanh %789 : vector<4x32xf32>
    %961 = vector.extract_strided_slice %952 {offsets = [1, 0, 0], sizes = [1, 1, 32], strides = [1, 1, 1]} : vector<8x1x32xf32> to vector<1x1x32xf32>
    %962 = vector.shape_cast %961 : vector<1x1x32xf32> to vector<1x32xf32>
    %963 = vector.broadcast %962 : vector<1x32xf32> to vector<4x32xf32>
    %964 = arith.mulf %960, %963 : vector<4x32xf32>
    %965 = arith.addf %959, %964 : vector<4x32xf32>
    %966 = math.tanh %815 : vector<4x32xf32>
    %967 = vector.extract_strided_slice %952 {offsets = [2, 0, 0], sizes = [1, 1, 32], strides = [1, 1, 1]} : vector<8x1x32xf32> to vector<1x1x32xf32>
    %968 = vector.shape_cast %967 : vector<1x1x32xf32> to vector<1x32xf32>
    %969 = vector.broadcast %968 : vector<1x32xf32> to vector<4x32xf32>
    %970 = arith.mulf %966, %969 : vector<4x32xf32>
    %971 = arith.addf %965, %970 : vector<4x32xf32>
    %972 = math.tanh %841 : vector<4x32xf32>
    %973 = vector.extract_strided_slice %952 {offsets = [3, 0, 0], sizes = [1, 1, 32], strides = [1, 1, 1]} : vector<8x1x32xf32> to vector<1x1x32xf32>
    %974 = vector.shape_cast %973 : vector<1x1x32xf32> to vector<1x32xf32>
    %975 = vector.broadcast %974 : vector<1x32xf32> to vector<4x32xf32>
    %976 = arith.mulf %972, %975 : vector<4x32xf32>
    %977 = arith.addf %971, %976 : vector<4x32xf32>
    %978 = math.tanh %867 : vector<4x32xf32>
    %979 = vector.extract_strided_slice %952 {offsets = [4, 0, 0], sizes = [1, 1, 32], strides = [1, 1, 1]} : vector<8x1x32xf32> to vector<1x1x32xf32>
    %980 = vector.shape_cast %979 : vector<1x1x32xf32> to vector<1x32xf32>
    %981 = vector.broadcast %980 : vector<1x32xf32> to vector<4x32xf32>
    %982 = arith.mulf %978, %981 : vector<4x32xf32>
    %983 = arith.addf %977, %982 : vector<4x32xf32>
    %984 = math.tanh %893 : vector<4x32xf32>
    %985 = vector.extract_strided_slice %952 {offsets = [5, 0, 0], sizes = [1, 1, 32], strides = [1, 1, 1]} : vector<8x1x32xf32> to vector<1x1x32xf32>
    %986 = vector.shape_cast %985 : vector<1x1x32xf32> to vector<1x32xf32>
    %987 = vector.broadcast %986 : vector<1x32xf32> to vector<4x32xf32>
    %988 = arith.mulf %984, %987 : vector<4x32xf32>
    %989 = arith.addf %983, %988 : vector<4x32xf32>
    %990 = math.tanh %919 : vector<4x32xf32>
    %991 = vector.extract_strided_slice %952 {offsets = [6, 0, 0], sizes = [1, 1, 32], strides = [1, 1, 1]} : vector<8x1x32xf32> to vector<1x1x32xf32>
    %992 = vector.shape_cast %991 : vector<1x1x32xf32> to vector<1x32xf32>
    %993 = vector.broadcast %992 : vector<1x32xf32> to vector<4x32xf32>
    %994 = arith.mulf %990, %993 : vector<4x32xf32>
    %995 = arith.addf %989, %994 : vector<4x32xf32>
    %996 = math.tanh %945 : vector<4x32xf32>
    %997 = vector.extract_strided_slice %952 {offsets = [7, 0, 0], sizes = [1, 1, 32], strides = [1, 1, 1]} : vector<8x1x32xf32> to vector<1x1x32xf32>
    %998 = vector.shape_cast %997 : vector<1x1x32xf32> to vector<1x32xf32>
    %999 = vector.broadcast %998 : vector<1x32xf32> to vector<4x32xf32>
    %1000 = arith.mulf %996, %999 : vector<4x32xf32>
    %1001 = arith.addf %995, %1000 : vector<4x32xf32>
    %cst_139 = arith.constant dense<0.000000e+00> : vector<4xf32>
    %1002 = vector.multi_reduction <add>, %1001, %cst_139 [1] : vector<4x32xf32> to vector<4xf32>
    %1003 = vector.shape_cast %1002 : vector<4xf32> to vector<4x1xf32>
    %c0_140 = arith.constant 0 : index
    %c0_141 = arith.constant 0 : index
    %1004 = vector.load %arg11[%c0_140, %c0_141] : memref<1x1xf32, #tpu.memory_space<vmem>>, vector<1x1xf32>
    %1005 = vector.broadcast %1004 : vector<1x1xf32> to vector<4x1xf32>
    %1006 = arith.addf %1003, %1005 : vector<4x1xf32>
    %c0_142 = arith.constant 0 : index
    %c0_143 = arith.constant 0 : index
    %1007 = vector.load %arg12[%c0_142, %c0_143] : memref<4x1xf32, #tpu.memory_space<vmem>>, vector<4x1xf32>
    tpu.vector_store %arg12[%c0_142, %c0_143], %1006 {strides = array<i32>} : memref<4x1xf32, #tpu.memory_space<vmem>>, vector<4x1xf32>,
    return
  }
}

</mosaic_0001>

<llo_original>
// kernel: embedder_forward.1
$region0: #{embedder_forward.1}
  #allocation0 [shape = 'u32[]', space=smem, size = 0x4, offset = 0x4, fixed_abs, tag = 'smem constant byte address 0x4 - core index']
  #allocation1 [shape = 'u32[144,128]{1,0:T(1,128)}', space=vmem, size = 0x12000, scoped, tag = 'internal scratch']
  #allocation2 [shape = 'f32[1,1]{1,0:T(1,128)S(1)}', space=vmem, size = 0x200, scoped, tag = 'scoped memory for embedder_forward.1']
  %s0 = inlined_call_operand.vmem [shape: f32[32,8], index: 0, kind: input, shape index: {}]
  %s1 = inlined_call_operand.hbm [shape: f32[2,4,32], index: 1, kind: input, shape index: {}]
  %s2 = inlined_call_operand.vmem [shape: bf16[8,32], index: 2, kind: input, shape index: {}]
  %s3 = inlined_call_operand.hbm [shape: f32[1,32], index: 3, kind: input, shape index: {}]
  %s4 = inlined_call_operand.vmem [shape: bf16[2,32,128], index: 4, kind: input, shape index: {}]
  %s5 = inlined_call_operand.vmem [shape: bf16[2,32,128], index: 5, kind: input, shape index: {}]
  %s6 = inlined_call_operand.vmem [shape: f32[2,1,128], index: 6, kind: input, shape index: {}]
  %s7 = inlined_call_operand.hbm [shape: f32[2,1,32], index: 7, kind: input, shape index: {}]
  %s8 = inlined_call_operand.vmem [shape: bf16[32,32], index: 8, kind: input, shape index: {}]
  %s9 = inlined_call_operand.hbm [shape: f32[1,32], index: 9, kind: input, shape index: {}]
  %s10 = inlined_call_operand.vmem [shape: f32[8,1,32], index: 10, kind: input, shape index: {}]
  %s11 = inlined_call_operand.<no memory space> [shape: f32[1,1], index: 11, kind: input, shape index: {}]
  %s12 = inlined_call_operand.vmem [shape: f32[4,1], index: 12, kind: output, shape index: {0}]
  %s13 = inlined_call_operand.hbm [shape: f32[2,4,32], index: 13, kind: output, shape index: {1}]
  %14 = xla_tuple %s12, %s13
  %s15 = sld [smem:[#allocation0]]
  $region82: #{embedder_forward.1} parent=0
    _
  %s17 = ssub.s32 1, %s15
  %s18 = scalar_select 0, %s17, %s15
  %v19 = vstv %s11
  %20 = vst [vmem:[#allocation2] sm:$0x1] %v19
  $region1: #{embedder_forward.1} parent=0
    #allocation3 [shape = 'u8[4096]{0}', space=vmem, size = 0x1000, scoped, tag = 'input window, operand 1, single buffered']
    #allocation4 [shape = 's32[1]{0}', space=sflag, size = 0x4, scoped, tag = 'scoped memory for embedder_forward.1']
    #allocation5 [shape = 's32[1]{0}', space=sflag, size = 0x4, scoped, tag = 'scoped memory for embedder_forward.1']
    #allocation6 [shape = 'u8[512]{0}', space=vmem, size = 0x400, scoped, tag = 'input window, operand 3, single buffered']
    #allocation7 [shape = 's32[1]{0}', space=sflag, size = 0x4, scoped, tag = 'scoped memory for embedder_forward.1']
    #allocation8 [shape = 'u8[1024]{0}', space=vmem, size = 0x400, scoped, tag = 'input window, operand 7, single buffered']
    #allocation9 [shape = 'u8[512]{0}', space=vmem, size = 0x400, scoped, tag = 'input window, operand 9, single buffered']
    #allocation10 [shape = 's32[1]{0}', space=sflag, size = 0x4, scoped, tag = 'scoped memory for embedder_forward.1']
    #allocation11 [shape = 'u8[4096]{0}', space=vmem, size = 0x1000, scoped, tag = 'output window, operand 1, single buffered']
    %21 = vsyncpa [#allocation4], 0
    %22 = vsyncpa [#allocation7], 0
    %23 = vsyncpa [#allocation10], 0
    %24 = vsyncpa [#allocation5], 0
    // Predicated region
    $region2: #{embedder_forward.1} parent=1 // pred_check
      _
    $region3: #{embedder_forward.1} parent=1 // pred_check_branch
      %26 = sbr.rel (0) target = $region5
    $region4: #{embedder_forward.1} parent=1 // pred_region
      _
    $region5: #{embedder_forward.1} parent=1 // pred_fallthru
      _
    // Predicated region
    $region6: #{embedder_forward.1} parent=1 // pred_check
      _
    $region7: #{embedder_forward.1} parent=1 // pred_check_branch
      %28 = sbr.rel (0) target = $region9
    $region8: #{embedder_forward.1} parent=1 // pred_region
      %s30 = ssub.s32 128, 128
      %31 = vsyncadd [#allocation4], %s30
      %s32 = sshll.u32 [#allocation3], 4
      %s33 = int_to_ptr.vmem [resolvable:$true] %s32
      %38 = dma.hbm_to_vmem [thread:$0]  %s1, 128, %s33, [#allocation4], 64, 64, 4
    $region9: #{embedder_forward.1} parent=1 // pred_fallthru
      _
    // Predicated region
    $region10: #{embedder_forward.1} parent=1 // pred_check
      _
    $region11: #{embedder_forward.1} parent=1 // pred_check_branch
      %40 = sbr.rel (0) target = $region13
    $region12: #{embedder_forward.1} parent=1 // pred_region
      _
    $region13: #{embedder_forward.1} parent=1 // pred_fallthru
      _
    // Predicated region
    $region14: #{embedder_forward.1} parent=1 // pred_check
      _
    $region15: #{embedder_forward.1} parent=1 // pred_check_branch
      %42 = sbr.rel (0) target = $region17
    $region16: #{embedder_forward.1} parent=1 // pred_region
      %s44 = ssub.s32 16, 16
      %45 = vsyncadd [#allocation7], %s44
      %s47 = sshll.u32 [#allocation6], 4
      %s48 = int_to_ptr.vmem [resolvable:$true] %s47
      %50 = dma.hbm_to_vmem [thread:$0]  %s3, 16, %s48, [#allocation7]
    $region17: #{embedder_forward.1} parent=1 // pred_fallthru
      _
    // Predicated region
    $region18: #{embedder_forward.1} parent=1 // pred_check
      _
    $region19: #{embedder_forward.1} parent=1 // pred_check_branch
      %52 = sbr.rel (0) target = $region21
    $region20: #{embedder_forward.1} parent=1 // pred_region
      _
    $region21: #{embedder_forward.1} parent=1 // pred_fallthru
      _
    // Predicated region
    $region22: #{embedder_forward.1} parent=1 // pred_check
      _
    $region23: #{embedder_forward.1} parent=1 // pred_check_branch
      %54 = sbr.rel (0) target = $region25
    $region24: #{embedder_forward.1} parent=1 // pred_region
      _
    $region25: #{embedder_forward.1} parent=1 // pred_fallthru
      _
    // Predicated region
    $region26: #{embedder_forward.1} parent=1 // pred_check
      _
    $region27: #{embedder_forward.1} parent=1 // pred_check_branch
      %56 = sbr.rel (0) target = $region29
    $region28: #{embedder_forward.1} parent=1 // pred_region
      _
    $region29: #{embedder_forward.1} parent=1 // pred_fallthru
      _
    // Predicated region
    $region30: #{embedder_forward.1} parent=1 // pred_check
      _
    $region31: #{embedder_forward.1} parent=1 // pred_check_branch
      %58 = sbr.rel (0) target = $region33
    $region32: #{embedder_forward.1} parent=1 // pred_region
      %s60 = ssub.s32 32, 32
      %61 = vsyncadd [#allocation7], %s60
      %s62 = sshll.u32 [#allocation8], 4
      %s63 = int_to_ptr.vmem [resolvable:$true] %s62
      %68 = dma.hbm_to_vmem [thread:$0]  %s7, 32, %s63, [#allocation7], 16, 16, 1
    $region33: #{embedder_forward.1} parent=1 // pred_fallthru
      _
    // Predicated region
    $region34: #{embedder_forward.1} parent=1 // pred_check
      _
    $region35: #{embedder_forward.1} parent=1 // pred_check_branch
      %70 = sbr.rel (0) target = $region37
    $region36: #{embedder_forward.1} parent=1 // pred_region
      _
    $region37: #{embedder_forward.1} parent=1 // pred_fallthru
      _
    // Predicated region
    $region38: #{embedder_forward.1} parent=1 // pred_check
      _
    $region39: #{embedder_forward.1} parent=1 // pred_check_branch
      %72 = sbr.rel (0) target = $region41
    $region40: #{embedder_forward.1} parent=1 // pred_region
      %s74 = ssub.s32 16, 16
      %75 = vsyncadd [#allocation10], %s74
      %s77 = sshll.u32 [#allocation9], 4
      %s78 = int_to_ptr.vmem [resolvable:$true] %s77
      %80 = dma.hbm_to_vmem [thread:$0]  %s9, 16, %s78, [#allocation10]
    $region41: #{embedder_forward.1} parent=1 // pred_fallthru
      _
    // Predicated region
    $region42: #{embedder_forward.1} parent=1 // pred_check
      _
    $region43: #{embedder_forward.1} parent=1 // pred_check_branch
      %82 = sbr.rel (0) target = $region45
    $region44: #{embedder_forward.1} parent=1 // pred_region
      _
    $region45: #{embedder_forward.1} parent=1 // pred_fallthru
      _
    // Predicated region
    $region46: #{embedder_forward.1} parent=1 // pred_check
      _
    $region47: #{embedder_forward.1} parent=1 // pred_check_branch
      %84 = sbr.rel (0) target = $region49
    $region48: #{embedder_forward.1} parent=1 // pred_region
      _
    $region49: #{embedder_forward.1} parent=1 // pred_fallthru
      _
    // Predicated region
    $region50: #{embedder_forward.1} parent=1 // pred_check
      _
    $region51: #{embedder_forward.1} parent=1 // pred_check_branch
      %86 = sbr.rel (0) target = $region53
    $region52: #{embedder_forward.1} parent=1 // pred_region
      %87 = dma.done [#allocation4], 128
    $region53: #{embedder_forward.1} parent=1 // pred_fallthru
      _
    // Predicated region
    $region54: #{embedder_forward.1} parent=1 // pred_check
      _
    $region55: #{embedder_forward.1} parent=1 // pred_check_branch
      %89 = sbr.rel (0) target = $region57
    $region56: #{embedder_forward.1} parent=1 // pred_region
      %90 = dma.done [#allocation7], 16
    $region57: #{embedder_forward.1} parent=1 // pred_fallthru
      _
    // Predicated region
    $region58: #{embedder_forward.1} parent=1 // pred_check
      _
    $region59: #{embedder_forward.1} parent=1 // pred_check_branch
      %92 = sbr.rel (0) target = $region61
    $region60: #{embedder_forward.1} parent=1 // pred_region
      %93 = dma.done [#allocation7], 32
    $region61: #{embedder_forward.1} parent=1 // pred_fallthru
      _
    // Predicated region
    $region62: #{embedder_forward.1} parent=1 // pred_check
      _
    $region63: #{embedder_forward.1} parent=1 // pred_check_branch
      %95 = sbr.rel (0) target = $region65
    $region64: #{embedder_forward.1} parent=1 // pred_region
      %96 = dma.done [#allocation10], 16
    $region65: #{embedder_forward.1} parent=1 // pred_fallthru
      _
    %v98 = vld [vmem:[%s4] sm:$0xf]
    %v99 = vld [vmem:[%s4 + $0x4] sm:$0xf]
    %v100 = vld [vmem:[%s4 + $0x8] sm:$0xf]
    %v101 = vld [vmem:[%s4 + $0xc] sm:$0xf]
    %v102 = vld [vmem:[%s4 + $0x10] sm:$0xf]
    %v103 = vld [vmem:[%s4 + $0x14] sm:$0xf]
    %v104 = vld [vmem:[%s4 + $0x18] sm:$0xf]
    %v105 = vld [vmem:[%s4 + $0x1c] sm:$0xf]
    %v106 = vld [vmem:[%s5] sm:$0xf]
    %v107 = vld [vmem:[%s5 + $0x4] sm:$0xf]
    %v108 = vld [vmem:[%s5 + $0x8] sm:$0xf]
    %v109 = vld [vmem:[%s5 + $0xc] sm:$0xf]
    %v110 = vld [vmem:[%s5 + $0x10] sm:$0xf]
    %v111 = vld [vmem:[%s5 + $0x14] sm:$0xf]
    %v112 = vld [vmem:[%s5 + $0x18] sm:$0xf]
    %v113 = vld [vmem:[%s5 + $0x1c] sm:$0xf]
    %v114 = vld [vmem:[%s6] sm:$0x1]
    %v115 = vld [vmem:[%s6 + $0x1] sm:$0x1]
    %v116 = vld [vmem:[#allocation8] sm:$0x1]
    %v117 = vld [vmem:[#allocation8 + $0x1] sm:$0x1]
    %v118 = vld [vmem:[%s0] sm:$0xff]
    %v119 = vld [vmem:[%s0 + $0x8] sm:$0xff]
    %v120 = vld [vmem:[%s0 + $0x10] sm:$0xff]
    %v121 = vld [vmem:[%s0 + $0x18] sm:$0xff]
    %v122 = vpack.c.bf16 %v119, %v118
    %v123 = vpack.c.bf16 %v121, %v120
    %v124 = vld [vmem:[%s2] sm:$0xf]
    %v125 = vld [vmem:[#allocation6] sm:$0x1]
    %v127 = vlaneseq
    %v128 = vshrl.u32 %v127, 7
    %v129 = vsub.s32 0, %v128
    %v130 = vrot.slane %v125, %v129
    %vm132 = vcmask 64512
    %v134 = vsel %vm132, %v122, 0
    %v137 = vsel %vm132, %v123, 0
    %vm139 = vcmask 1043456
    %v141 = vsel %vm139, %v124, 0
    %143 = vmatprep.subr.bf16.mxu0 0
    %144 = vmatpush1.bf16.msra.mxu0 %v141
    %145 = vmatprep.subr.bf16.mxu0 0
    %146 = vmatpush1.bf16.msra.mxu0 0
    %147 = vmatprep.subr.bf16.mxu0 0
    %148 = vmatpush1.bf16.msra.mxu0 0
    %149 = vmatprep.subr.bf16.mxu0 0
    %150 = vmatpush1.bf16.msra.mxu0 0
    %151 = vmatprep.subr.bf16.mxu0 0
    %152 = vmatpush1.bf16.msra.mxu0 0
    %153 = vmatprep.subr.bf16.mxu0 0
    %154 = vmatpush1.bf16.msra.mxu0 0
    %155 = vmatprep.subr.bf16.mxu0 0
    %156 = vmatpush1.bf16.msra.mxu0 0
    %157 = vmatprep.subr.bf16.mxu0 0
    %158 = vmatpush1.bf16.msra.mxu0 0
    %159 = vmatprep.subr.bf16.mxu0 0
    %160 = vmatpush1.bf16.msra.mxu0 0
    %161 = vmatprep.subr.bf16.mxu0 0
    %162 = vmatpush1.bf16.msra.mxu0 0
    %163 = vmatprep.subr.bf16.mxu0 0
    %164 = vmatpush1.bf16.msra.mxu0 0
    %165 = vmatprep.subr.bf16.mxu0 0
    %166 = vmatpush1.bf16.msra.mxu0 0
    %167 = vmatprep.subr.bf16.mxu0 0
    %168 = vmatpush1.bf16.msra.mxu0 0
    %169 = vmatprep.subr.bf16.mxu0 0
    %170 = vmatpush1.bf16.msra.mxu0 0
    %171 = vmatprep.subr.bf16.mxu0 0
    %172 = vmatpush1.bf16.msra.mxu0 0
    %173 = vmatprep.subr.bf16.mxu0 0
    %174 = vmatpush1.bf16.msra.mxu0 0
    %175 = vmatprep.mubr.bf16.mxu0 0
    %176 = vmatmul.mubr.bf16.gmra.mrb[0].mxu0 %v134
    %v177 = vpop.f32.mrb[0].mxu0
    %v178 = vadd.f32 %v130, %v177
    %v179 = vpop.f32.mrb[0].mxu0
    %v180 = vpop.f32.mrb[0].mxu0
    %v181 = vadd.f32 %v130, %v180
    %v182 = vpop.f32.mrb[0].mxu0
    %183 = vmatprep.mubr.bf16.mxu0 0
    %184 = vmatmul.mubr.bf16.gmra.mrb[0].mxu0 %v137
    %v185 = vpop.f32.mrb[0].mxu0
    %v186 = vadd.f32 %v130, %v185
    %v187 = vpop.f32.mrb[0].mxu0
    %v188 = vpop.f32.mrb[0].mxu0
    %v189 = vadd.f32 %v130, %v188
    %v190 = vpop.f32.mrb[0].mxu0
    %191 = vdwg.mxu0
    %v192 = vxor.u32 %v178, 2147483648
    %v193 = vxor.u32 %v181, 2147483648
    %v194 = vxor.u32 %v186, 2147483648
    %v195 = vxor.u32 %v189, 2147483648
    %v196 = vmul.f32 %v192, 1.442695
    %v197 = vpow.pop %v196
    %v198 = vmul.f32 %v193, 1.442695
    %v199 = vpow.pop %v198
    %v200 = vmul.f32 %v194, 1.442695
    %v201 = vpow.pop %v200
    %v202 = vmul.f32 %v195, 1.442695
    %v203 = vpow.pop %v202
    %v204 = vadd.f32 %v197, 1.0
    %v205 = vadd.f32 %v199, 1.0
    %v206 = vadd.f32 %v201, 1.0
    %v207 = vadd.f32 %v203, 1.0
    %v208 = vrcp.pop %v204
    %v209 = vmul.f32 1.0, %v208
    %v210 = vrcp.pop %v205
    %v211 = vmul.f32 1.0, %v210
    %v212 = vrcp.pop %v206
    %v213 = vmul.f32 1.0, %v212
    %v214 = vrcp.pop %v207
    %v215 = vmul.f32 1.0, %v214
    %v216 = vld [vmem:[#allocation3] sm:$0xf]
    %s217 = scalar_lea.vmem [#allocation3], 4
    %v218 = vld [vmem:[%s217] sm:$0xf]
    %v219 = vpack.c.bf16 %v211, %v209
    %v220 = vpack.c.bf16 %v215, %v213
    %v222 = vlaneseq
    %v223 = vshrl.u32 %v222, 7
    %v224 = vsub.s32 0, %v223
    %v225 = vrot.slane %v114, %v224
    %v231 = vunpack.c.l.b16 %v98
    %v232 = vunpack.c.l.b16 %v99
    %v233 = vunpack.c.l.b16 %v100
    %v234 = vunpack.c.l.b16 %v101
    %v235 = vpack.c.b16 %v232, %v231
    %v236 = vpack.c.b16 %v234, %v233
    %vm239 = vcmask 261120
    %v241 = vsel %vm239, %v219, 0
    %v244 = vsel %vm239, %v220, 0
    %246 = vmatprep.subr.bf16.mxu0 0
    %247 = vmatpush1.bf16.msra.mxu0 %v235
    %248 = vmatprep.subr.bf16.mxu0 0
    %249 = vmatpush1.bf16.msra.mxu0 %v236
    %250 = vmatprep.subr.bf16.mxu0 0
    %251 = vmatpush1.bf16.msra.mxu0 0
    %252 = vmatprep.subr.bf16.mxu0 0
    %253 = vmatpush1.bf16.msra.mxu0 0
    %254 = vmatprep.subr.bf16.mxu0 0
    %255 = vmatpush1.bf16.msra.mxu0 0
    %256 = vmatprep.subr.bf16.mxu0 0
    %257 = vmatpush1.bf16.msra.mxu0 0
    %258 = vmatprep.subr.bf16.mxu0 0
    %259 = vmatpush1.bf16.msra.mxu0 0
    %260 = vmatprep.subr.bf16.mxu0 0
    %261 = vmatpush1.bf16.msra.mxu0 0
    %262 = vmatprep.subr.bf16.mxu0 0
    %263 = vmatpush1.bf16.msra.mxu0 0
    %264 = vmatprep.subr.bf16.mxu0 0
    %265 = vmatpush1.bf16.msra.mxu0 0
    %266 = vmatprep.subr.bf16.mxu0 0
    %267 = vmatpush1.bf16.msra.mxu0 0
    %268 = vmatprep.subr.bf16.mxu0 0
    %269 = vmatpush1.bf16.msra.mxu0 0
    %270 = vmatprep.subr.bf16.mxu0 0
    %271 = vmatpush1.bf16.msra.mxu0 0
    %272 = vmatprep.subr.bf16.mxu0 0
    %273 = vmatpush1.bf16.msra.mxu0 0
    %274 = vmatprep.subr.bf16.mxu0 0
    %275 = vmatpush1.bf16.msra.mxu0 0
    %276 = vmatprep.subr.bf16.mxu0 0
    %277 = vmatpush1.bf16.msra.mxu0 0
    %278 = vmatprep.mubr.bf16.mxu0 0
    %279 = vmatmul.mubr.bf16.gmra.mrb[0].mxu0 %v241
    %v280 = vpop.f32.mrb[0].mxu0
    %v281 = vadd.f32 %v225, %v280
    %v282 = vpop.f32.mrb[0].mxu0
    %v283 = vpop.f32.mrb[0].mxu0
    %v284 = vadd.f32 %v225, %v283
    %v285 = vpop.f32.mrb[0].mxu0
    %286 = vmatprep.mubr.bf16.mxu0 0
    %287 = vmatmul.mubr.bf16.gmra.mrb[0].mxu0 %v244
    %v288 = vpop.f32.mrb[0].mxu0
    %v289 = vadd.f32 %v225, %v288
    %v290 = vpop.f32.mrb[0].mxu0
    %v291 = vpop.f32.mrb[0].mxu0
    %v292 = vadd.f32 %v225, %v291
    %v293 = vpop.f32.mrb[0].mxu0
    %294 = vdwg.mxu0
    %v299 = vcombine.high %v281, %v281
    %v300 = vcombine.high %v284, %v284
    %v301 = vcombine.high %v289, %v289
    %v302 = vcombine.high %v292, %v292
    %v307 = vpack.c.bf16 %v216, %v216
    %v312 = vunpack.c.l.b16 %v106
    %v313 = vunpack.c.l.b16 %v107
    %v314 = vunpack.c.l.b16 %v108
    %v315 = vunpack.c.l.b16 %v109
    %v316 = vpack.c.b16 %v313, %v312
    %v317 = vpack.c.b16 %v315, %v314
    %v321 = vsel %vm239, %v307, 0
    %323 = vmatprep.subr.bf16.mxu0 0
    %324 = vmatpush1.bf16.msra.mxu0 %v316
    %325 = vmatprep.subr.bf16.mxu0 0
    %326 = vmatpush1.bf16.msra.mxu0 %v317
    %327 = vmatprep.subr.bf16.mxu0 0
    %328 = vmatpush1.bf16.msra.mxu0 0
    %329 = vmatprep.subr.bf16.mxu0 0
    %330 = vmatpush1.bf16.msra.mxu0 0
    %331 = vmatprep.subr.bf16.mxu0 0
    %332 = vmatpush1.bf16.msra.mxu0 0
    %333 = vmatprep.subr.bf16.mxu0 0
    %334 = vmatpush1.bf16.msra.mxu0 0
    %335 = vmatprep.subr.bf16.mxu0 0
    %336 = vmatpush1.bf16.msra.mxu0 0
    %337 = vmatprep.subr.bf16.mxu0 0
    %338 = vmatpush1.bf16.msra.mxu0 0
    %339 = vmatprep.subr.bf16.mxu0 0
    %340 = vmatpush1.bf16.msra.mxu0 0
    %341 = vmatprep.subr.bf16.mxu0 0
    %342 = vmatpush1.bf16.msra.mxu0 0
    %343 = vmatprep.subr.bf16.mxu0 0
    %344 = vmatpush1.bf16.msra.mxu0 0
    %345 = vmatprep.subr.bf16.mxu0 0
    %346 = vmatpush1.bf16.msra.mxu0 0
    %347 = vmatprep.subr.bf16.mxu0 0
    %348 = vmatpush1.bf16.msra.mxu0 0
    %349 = vmatprep.subr.bf16.mxu0 0
    %350 = vmatpush1.bf16.msra.mxu0 0
    %351 = vmatprep.subr.bf16.mxu0 0
    %352 = vmatpush1.bf16.msra.mxu0 0
    %353 = vmatprep.subr.bf16.mxu0 0
    %354 = vmatpush1.bf16.msra.mxu0 0
    %355 = vmatprep.mubr.bf16.mxu0 0
    %356 = vmatmul.mubr.bf16.gmra.mrb[0].mxu0 %v321
    %v357 = vpop.f32.mrb[0].mxu0
    %v358 = vadd.f32 0.0, %v357
    %v359 = vpop.f32.mrb[0].mxu0
    %v360 = vpop.f32.mrb[0].mxu0
    %v361 = vpop.f32.mrb[0].mxu0
    %362 = vdwg.mxu0
    %v363 = vadd.f32 %v281, %v358
    %v364 = vxor.u32 %v363, 2147483648
    %v365 = vmul.f32 %v364, 1.442695
    %v366 = vpow.pop %v365
    %v367 = vadd.f32 %v366, 1.0
    %v368 = vrcp.pop %v367
    %v369 = vmul.f32 1.0, %v368
    %v371 = vlaneseq
    %v372 = vshrl.u32 %v371, 7
    %v373 = vsub.s32 0, %v372
    %v374 = vrot.slane %v116, %v373
    %375 = vrot.lane.b32.xlu0 %v374, 64
    %v376 = vpop.permute.xlu0 %375
    %v378 = vadd.f32 %v358, %v376
    %380 = vrot.lane.b32.xlu0 %v378, 64
    %v381 = vpop.permute.xlu0 %380
    %v383 = vmul.f32 %v369, %v381
    %385 = vrot.lane.b32.xlu0 %v383, 64
    %v386 = vpop.permute.xlu0 %385
    %v388 = vadd.f32 %v281, %v386
    %v389 = vtanh.pop %v388
    %v390 = vsub.f32 1.0, %v369
    %392 = vrot.lane.b32.xlu0 %v389, 96
    %v393 = vpop.permute.xlu0 %392
    %v395 = vmul.f32 %v390, %v393
    %397 = vrot.lane.b32.xlu0 %v216, 32
    %v398 = vpop.permute.xlu0 %397
    %v400 = vmul.f32 %v369, %v398
    %v401 = vadd.f32 %v395, %v400
    %v402 = vpack.c.bf16 %v401, %v401
    %404 = vrot.lane.b32.xlu0 %v402, 96
    %v405 = vpop.permute.xlu0 %404
    %v407 = vsel %vm239, %v405, 0
    %409 = vmatprep.subr.bf16.mxu0 0
    %410 = vmatpush1.bf16.msra.mxu0 %v316
    %411 = vmatprep.subr.bf16.mxu0 0
    %412 = vmatpush1.bf16.msra.mxu0 %v317
    %413 = vmatprep.subr.bf16.mxu0 0
    %414 = vmatpush1.bf16.msra.mxu0 0
    %415 = vmatprep.subr.bf16.mxu0 0
    %416 = vmatpush1.bf16.msra.mxu0 0
    %417 = vmatprep.subr.bf16.mxu0 0
    %418 = vmatpush1.bf16.msra.mxu0 0
    %419 = vmatprep.subr.bf16.mxu0 0
    %420 = vmatpush1.bf16.msra.mxu0 0
    %421 = vmatprep.subr.bf16.mxu0 0
    %422 = vmatpush1.bf16.msra.mxu0 0
    %423 = vmatprep.subr.bf16.mxu0 0
    %424 = vmatpush1.bf16.msra.mxu0 0
    %425 = vmatprep.subr.bf16.mxu0 0
    %426 = vmatpush1.bf16.msra.mxu0 0
    %427 = vmatprep.subr.bf16.mxu0 0
    %428 = vmatpush1.bf16.msra.mxu0 0
    %429 = vmatprep.subr.bf16.mxu0 0
    %430 = vmatpush1.bf16.msra.mxu0 0
    %431 = vmatprep.subr.bf16.mxu0 0
    %432 = vmatpush1.bf16.msra.mxu0 0
    %433 = vmatprep.subr.bf16.mxu0 0
    %434 = vmatpush1.bf16.msra.mxu0 0
    %435 = vmatprep.subr.bf16.mxu0 0
    %436 = vmatpush1.bf16.msra.mxu0 0
    %437 = vmatprep.subr.bf16.mxu0 0
    %438 = vmatpush1.bf16.msra.mxu0 0
    %439 = vmatprep.subr.bf16.mxu0 0
    %440 = vmatpush1.bf16.msra.mxu0 0
    %441 = vmatprep.mubr.bf16.mxu0 0
    %442 = vmatmul.mubr.bf16.gmra.mrb[0].mxu0 %v407
    %v443 = vpop.f32.mrb[0].mxu0
    %v444 = vadd.f32 0.0, %v443
    %v445 = vpop.f32.mrb[0].mxu0
    %v446 = vpop.f32.mrb[0].mxu0
    %v447 = vpop.f32.mrb[0].mxu0
    %448 = vdwg.mxu0
    %v449 = vadd.f32 %v299, %v444
    %v450 = vxor.u32 %v449, 2147483648
    %v451 = vmul.f32 %v450, 1.442695
    %v452 = vpow.pop %v451
    %v453 = vadd.f32 %v452, 1.0
    %v454 = vrcp.pop %v453
    %v455 = vmul.f32 1.0, %v454
    %v456 = vadd.f32 %v444, %v376
    %458 = vrot.lane.b32.xlu0 %v456, 64
    %v459 = vpop.permute.xlu0 %458
    %v461 = vmul.f32 %v455, %v459
    %463 = vrot.lane.b32.xlu0 %v461, 64
    %v464 = vpop.permute.xlu0 %463
    %v466 = vadd.f32 %v299, %v464
    %v467 = vtanh.pop %v466
    %v468 = vsub.f32 1.0, %v455
    %470 = vrot.lane.b32.xlu0 %v467, 96
    %v471 = vpop.permute.xlu0 %470
    %v473 = vmul.f32 %v468, %v471
    %v474 = vmul.f32 %v455, %v401
    %v475 = vadd.f32 %v473, %v474
    %v476 = vpack.c.bf16 %v475, %v475
    %478 = vrot.lane.b32.xlu0 %v476, 96
    %v479 = vpop.permute.xlu0 %478
    %v481 = vsel %vm239, %v479, 0
    %483 = vmatprep.subr.bf16.mxu0 0
    %484 = vmatpush1.bf16.msra.mxu0 %v316
    %485 = vmatprep.subr.bf16.mxu0 0
    %486 = vmatpush1.bf16.msra.mxu0 %v317
    %487 = vmatprep.subr.bf16.mxu0 0
    %488 = vmatpush1.bf16.msra.mxu0 0
    %489 = vmatprep.subr.bf16.mxu0 0
    %490 = vmatpush1.bf16.msra.mxu0 0
    %491 = vmatprep.subr.bf16.mxu0 0
    %492 = vmatpush1.bf16.msra.mxu0 0
    %493 = vmatprep.subr.bf16.mxu0 0
    %494 = vmatpush1.bf16.msra.mxu0 0
    %495 = vmatprep.subr.bf16.mxu0 0
    %496 = vmatpush1.bf16.msra.mxu0 0
    %497 = vmatprep.subr.bf16.mxu0 0
    %498 = vmatpush1.bf16.msra.mxu0 0
    %499 = vmatprep.subr.bf16.mxu0 0
    %500 = vmatpush1.bf16.msra.mxu0 0
    %501 = vmatprep.subr.bf16.mxu0 0
    %502 = vmatpush1.bf16.msra.mxu0 0
    %503 = vmatprep.subr.bf16.mxu0 0
    %504 = vmatpush1.bf16.msra.mxu0 0
    %505 = vmatprep.subr.bf16.mxu0 0
    %506 = vmatpush1.bf16.msra.mxu0 0
    %507 = vmatprep.subr.bf16.mxu0 0
    %508 = vmatpush1.bf16.msra.mxu0 0
    %509 = vmatprep.subr.bf16.mxu0 0
    %510 = vmatpush1.bf16.msra.mxu0 0
    %511 = vmatprep.subr.bf16.mxu0 0
    %512 = vmatpush1.bf16.msra.mxu0 0
    %513 = vmatprep.subr.bf16.mxu0 0
    %514 = vmatpush1.bf16.msra.mxu0 0
    %515 = vmatprep.mubr.bf16.mxu0 0
    %516 = vmatmul.mubr.bf16.gmra.mrb[0].mxu0 %v481
    %v517 = vpop.f32.mrb[0].mxu0
    %v518 = vadd.f32 0.0, %v517
    %v519 = vpop.f32.mrb[0].mxu0
    %v520 = vpop.f32.mrb[0].mxu0
    %v521 = vpop.f32.mrb[0].mxu0
    %522 = vdwg.mxu0
    %v523 = vadd.f32 %v284, %v518
    %v524 = vxor.u32 %v523, 2147483648
    %v525 = vmul.f32 %v524, 1.442695
    %v526 = vpow.pop %v525
    %v527 = vadd.f32 %v526, 1.0
    %v528 = vrcp.pop %v527
    %v529 = vmul.f32 1.0, %v528
    %v530 = vadd.f32 %v518, %v376
    %532 = vrot.lane.b32.xlu0 %v530, 64
    %v533 = vpop.permute.xlu0 %532
    %v535 = vmul.f32 %v529, %v533
    %537 = vrot.lane.b32.xlu0 %v535, 64
    %v538 = vpop.permute.xlu0 %537
    %v540 = vadd.f32 %v284, %v538
    %v541 = vtanh.pop %v540
    %v542 = vsub.f32 1.0, %v529
    %544 = vrot.lane.b32.xlu0 %v541, 96
    %v545 = vpop.permute.xlu0 %544
    %v547 = vmul.f32 %v542, %v545
    %v548 = vmul.f32 %v529, %v475
    %v549 = vadd.f32 %v547, %v548
    %v550 = vpack.c.bf16 %v549, %v549
    %552 = vrot.lane.b32.xlu0 %v550, 96
    %v553 = vpop.permute.xlu0 %552
    %v555 = vsel %vm239, %v553, 0
    %557 = vmatprep.subr.bf16.mxu0 0
    %558 = vmatpush1.bf16.msra.mxu0 %v316
    %559 = vmatprep.subr.bf16.mxu0 0
    %560 = vmatpush1.bf16.msra.mxu0 %v317
    %561 = vmatprep.subr.bf16.mxu0 0
    %562 = vmatpush1.bf16.msra.mxu0 0
    %563 = vmatprep.subr.bf16.mxu0 0
    %564 = vmatpush1.bf16.msra.mxu0 0
    %565 = vmatprep.subr.bf16.mxu0 0
    %566 = vmatpush1.bf16.msra.mxu0 0
    %567 = vmatprep.subr.bf16.mxu0 0
    %568 = vmatpush1.bf16.msra.mxu0 0
    %569 = vmatprep.subr.bf16.mxu0 0
    %570 = vmatpush1.bf16.msra.mxu0 0
    %571 = vmatprep.subr.bf16.mxu0 0
    %572 = vmatpush1.bf16.msra.mxu0 0
    %573 = vmatprep.subr.bf16.mxu0 0
    %574 = vmatpush1.bf16.msra.mxu0 0
    %575 = vmatprep.subr.bf16.mxu0 0
    %576 = vmatpush1.bf16.msra.mxu0 0
    %577 = vmatprep.subr.bf16.mxu0 0
    %578 = vmatpush1.bf16.msra.mxu0 0
    %579 = vmatprep.subr.bf16.mxu0 0
    %580 = vmatpush1.bf16.msra.mxu0 0
    %581 = vmatprep.subr.bf16.mxu0 0
    %582 = vmatpush1.bf16.msra.mxu0 0
    %583 = vmatprep.subr.bf16.mxu0 0
    %584 = vmatpush1.bf16.msra.mxu0 0
    %585 = vmatprep.subr.bf16.mxu0 0
    %586 = vmatpush1.bf16.msra.mxu0 0
    %587 = vmatprep.subr.bf16.mxu0 0
    %588 = vmatpush1.bf16.msra.mxu0 0
    %589 = vmatprep.mubr.bf16.mxu0 0
    %590 = vmatmul.mubr.bf16.gmra.mrb[0].mxu0 %v555
    %v591 = vpop.f32.mrb[0].mxu0
    %v592 = vadd.f32 0.0, %v591
    %v593 = vpop.f32.mrb[0].mxu0
    %v594 = vpop.f32.mrb[0].mxu0
    %v595 = vpop.f32.mrb[0].mxu0
    %596 = vdwg.mxu0
    %v597 = vadd.f32 %v300, %v592
    %v598 = vxor.u32 %v597, 2147483648
    %v599 = vmul.f32 %v598, 1.442695
    %v600 = vpow.pop %v599
    %v601 = vadd.f32 %v600, 1.0
    %v602 = vrcp.pop %v601
    %v603 = vmul.f32 1.0, %v602
    %v604 = vadd.f32 %v592, %v376
    %606 = vrot.lane.b32.xlu0 %v604, 64
    %v607 = vpop.permute.xlu0 %606
    %v609 = vmul.f32 %v603, %v607
    %611 = vrot.lane.b32.xlu0 %v609, 64
    %v612 = vpop.permute.xlu0 %611
    %v614 = vadd.f32 %v300, %v612
    %v615 = vtanh.pop %v614
    %v616 = vsub.f32 1.0, %v603
    %618 = vrot.lane.b32.xlu0 %v615, 96
    %v619 = vpop.permute.xlu0 %618
    %v621 = vmul.f32 %v616, %v619
    %v622 = vmul.f32 %v603, %v549
    %v623 = vadd.f32 %v621, %v622
    %v624 = vpack.c.bf16 %v623, %v623
    %626 = vrot.lane.b32.xlu0 %v624, 96
    %v627 = vpop.permute.xlu0 %626
    %v629 = vsel %vm239, %v627, 0
    %631 = vmatprep.subr.bf16.mxu0 0
    %632 = vmatpush1.bf16.msra.mxu0 %v316
    %633 = vmatprep.subr.bf16.mxu0 0
    %634 = vmatpush1.bf16.msra.mxu0 %v317
    %635 = vmatprep.subr.bf16.mxu0 0
    %636 = vmatpush1.bf16.msra.mxu0 0
    %637 = vmatprep.subr.bf16.mxu0 0
    %638 = vmatpush1.bf16.msra.mxu0 0
    %639 = vmatprep.subr.bf16.mxu0 0
    %640 = vmatpush1.bf16.msra.mxu0 0
    %641 = vmatprep.subr.bf16.mxu0 0
    %642 = vmatpush1.bf16.msra.mxu0 0
    %643 = vmatprep.subr.bf16.mxu0 0
    %644 = vmatpush1.bf16.msra.mxu0 0
    %645 = vmatprep.subr.bf16.mxu0 0
    %646 = vmatpush1.bf16.msra.mxu0 0
    %647 = vmatprep.subr.bf16.mxu0 0
    %648 = vmatpush1.bf16.msra.mxu0 0
    %649 = vmatprep.subr.bf16.mxu0 0
    %650 = vmatpush1.bf16.msra.mxu0 0
    %651 = vmatprep.subr.bf16.mxu0 0
    %652 = vmatpush1.bf16.msra.mxu0 0
    %653 = vmatprep.subr.bf16.mxu0 0
    %654 = vmatpush1.bf16.msra.mxu0 0
    %655 = vmatprep.subr.bf16.mxu0 0
    %656 = vmatpush1.bf16.msra.mxu0 0
    %657 = vmatprep.subr.bf16.mxu0 0
    %658 = vmatpush1.bf16.msra.mxu0 0
    %659 = vmatprep.subr.bf16.mxu0 0
    %660 = vmatpush1.bf16.msra.mxu0 0
    %661 = vmatprep.subr.bf16.mxu0 0
    %662 = vmatpush1.bf16.msra.mxu0 0
    %663 = vmatprep.mubr.bf16.mxu0 0
    %664 = vmatmul.mubr.bf16.gmra.mrb[0].mxu0 %v629
    %v665 = vpop.f32.mrb[0].mxu0
    %v666 = vadd.f32 0.0, %v665
    %v667 = vpop.f32.mrb[0].mxu0
    %v668 = vpop.f32.mrb[0].mxu0
    %v669 = vpop.f32.mrb[0].mxu0
    %670 = vdwg.mxu0
    %v671 = vadd.f32 %v289, %v666
    %v672 = vxor.u32 %v671, 2147483648
    %v673 = vmul.f32 %v672, 1.442695
    %v674 = vpow.pop %v673
    %v675 = vadd.f32 %v674, 1.0
    %v676 = vrcp.pop %v675
    %v677 = vmul.f32 1.0, %v676
    %v678 = vadd.f32 %v666, %v376
    %680 = vrot.lane.b32.xlu0 %v678, 64
    %v681 = vpop.permute.xlu0 %680
    %v683 = vmul.f32 %v677, %v681
    %685 = vrot.lane.b32.xlu0 %v683, 64
    %v686 = vpop.permute.xlu0 %685
    %v688 = vadd.f32 %v289, %v686
    %v689 = vtanh.pop %v688
    %v690 = vsub.f32 1.0, %v677
    %692 = vrot.lane.b32.xlu0 %v689, 96
    %v693 = vpop.permute.xlu0 %692
    %v695 = vmul.f32 %v690, %v693
    %v696 = vmul.f32 %v677, %v623
    %v697 = vadd.f32 %v695, %v696
    %v698 = vpack.c.bf16 %v697, %v697
    %700 = vrot.lane.b32.xlu0 %v698, 96
    %v701 = vpop.permute.xlu0 %700
    %v703 = vsel %vm239, %v701, 0
    %705 = vmatprep.subr.bf16.mxu0 0
    %706 = vmatpush1.bf16.msra.mxu0 %v316
    %707 = vmatprep.subr.bf16.mxu0 0
    %708 = vmatpush1.bf16.msra.mxu0 %v317
    %709 = vmatprep.subr.bf16.mxu0 0
    %710 = vmatpush1.bf16.msra.mxu0 0
    %711 = vmatprep.subr.bf16.mxu0 0
    %712 = vmatpush1.bf16.msra.mxu0 0
    %713 = vmatprep.subr.bf16.mxu0 0
    %714 = vmatpush1.bf16.msra.mxu0 0
    %715 = vmatprep.subr.bf16.mxu0 0
    %716 = vmatpush1.bf16.msra.mxu0 0
    %717 = vmatprep.subr.bf16.mxu0 0
    %718 = vmatpush1.bf16.msra.mxu0 0
    %719 = vmatprep.subr.bf16.mxu0 0
    %720 = vmatpush1.bf16.msra.mxu0 0
    %721 = vmatprep.subr.bf16.mxu0 0
    %722 = vmatpush1.bf16.msra.mxu0 0
    %723 = vmatprep.subr.bf16.mxu0 0
    %724 = vmatpush1.bf16.msra.mxu0 0
    %725 = vmatprep.subr.bf16.mxu0 0
    %726 = vmatpush1.bf16.msra.mxu0 0
    %727 = vmatprep.subr.bf16.mxu0 0
    %728 = vmatpush1.bf16.msra.mxu0 0
    %729 = vmatprep.subr.bf16.mxu0 0
    %730 = vmatpush1.bf16.msra.mxu0 0
    %731 = vmatprep.subr.bf16.mxu0 0
    %732 = vmatpush1.bf16.msra.mxu0 0
    %733 = vmatprep.subr.bf16.mxu0 0
    %734 = vmatpush1.bf16.msra.mxu0 0
    %735 = vmatprep.subr.bf16.mxu0 0
    %736 = vmatpush1.bf16.msra.mxu0 0
    %737 = vmatprep.mubr.bf16.mxu0 0
    %738 = vmatmul.mubr.bf16.gmra.mrb[0].mxu0 %v703
    %v739 = vpop.f32.mrb[0].mxu0
    %v740 = vadd.f32 0.0, %v739
    %v741 = vpop.f32.mrb[0].mxu0
    %v742 = vpop.f32.mrb[0].mxu0
    %v743 = vpop.f32.mrb[0].mxu0
    %744 = vdwg.mxu0
    %v745 = vadd.f32 %v301, %v740
    %v746 = vxor.u32 %v745, 2147483648
    %v747 = vmul.f32 %v746, 1.442695
    %v748 = vpow.pop %v747
    %v749 = vadd.f32 %v748, 1.0
    %v750 = vrcp.pop %v749
    %v751 = vmul.f32 1.0, %v750
    %v752 = vadd.f32 %v740, %v376
    %754 = vrot.lane.b32.xlu0 %v752, 64
    %v755 = vpop.permute.xlu0 %754
    %v757 = vmul.f32 %v751, %v755
    %759 = vrot.lane.b32.xlu0 %v757, 64
    %v760 = vpop.permute.xlu0 %759
    %v762 = vadd.f32 %v301, %v760
    %v763 = vtanh.pop %v762
    %v764 = vsub.f32 1.0, %v751
    %766 = vrot.lane.b32.xlu0 %v763, 96
    %v767 = vpop.permute.xlu0 %766
    %v769 = vmul.f32 %v764, %v767
    %v770 = vmul.f32 %v751, %v697
    %v771 = vadd.f32 %v769, %v770
    %v772 = vpack.c.bf16 %v771, %v771
    %774 = vrot.lane.b32.xlu0 %v772, 96
    %v775 = vpop.permute.xlu0 %774
    %v777 = vsel %vm239, %v775, 0
    %779 = vmatprep.subr.bf16.mxu0 0
    %780 = vmatpush1.bf16.msra.mxu0 %v316
    %781 = vmatprep.subr.bf16.mxu0 0
    %782 = vmatpush1.bf16.msra.mxu0 %v317
    %783 = vmatprep.subr.bf16.mxu0 0
    %784 = vmatpush1.bf16.msra.mxu0 0
    %785 = vmatprep.subr.bf16.mxu0 0
    %786 = vmatpush1.bf16.msra.mxu0 0
    %787 = vmatprep.subr.bf16.mxu0 0
    %788 = vmatpush1.bf16.msra.mxu0 0
    %789 = vmatprep.subr.bf16.mxu0 0
    %790 = vmatpush1.bf16.msra.mxu0 0
    %791 = vmatprep.subr.bf16.mxu0 0
    %792 = vmatpush1.bf16.msra.mxu0 0
    %793 = vmatprep.subr.bf16.mxu0 0
    %794 = vmatpush1.bf16.msra.mxu0 0
    %795 = vmatprep.subr.bf16.mxu0 0
    %796 = vmatpush1.bf16.msra.mxu0 0
    %797 = vmatprep.subr.bf16.mxu0 0
    %798 = vmatpush1.bf16.msra.mxu0 0
    %799 = vmatprep.subr.bf16.mxu0 0
    %800 = vmatpush1.bf16.msra.mxu0 0
    %801 = vmatprep.subr.bf16.mxu0 0
    %802 = vmatpush1.bf16.msra.mxu0 0
    %803 = vmatprep.subr.bf16.mxu0 0
    %804 = vmatpush1.bf16.msra.mxu0 0
    %805 = vmatprep.subr.bf16.mxu0 0
    %806 = vmatpush1.bf16.msra.mxu0 0
    %807 = vmatprep.subr.bf16.mxu0 0
    %808 = vmatpush1.bf16.msra.mxu0 0
    %809 = vmatprep.subr.bf16.mxu0 0
    %810 = vmatpush1.bf16.msra.mxu0 0
    %811 = vmatprep.mubr.bf16.mxu0 0
    %812 = vmatmul.mubr.bf16.gmra.mrb[0].mxu0 %v777
    %v813 = vpop.f32.mrb[0].mxu0
    %v814 = vadd.f32 0.0, %v813
    %v815 = vpop.f32.mrb[0].mxu0
    %v816 = vpop.f32.mrb[0].mxu0
    %v817 = vpop.f32.mrb[0].mxu0
    %818 = vdwg.mxu0
    %v819 = vadd.f32 %v292, %v814
    %v820 = vxor.u32 %v819, 2147483648
    %v821 = vmul.f32 %v820, 1.442695
    %v822 = vpow.pop %v821
    %v823 = vadd.f32 %v822, 1.0
    %v824 = vrcp.pop %v823
    %v825 = vmul.f32 1.0, %v824
    %v826 = vadd.f32 %v814, %v376
    %828 = vrot.lane.b32.xlu0 %v826, 64
    %v829 = vpop.permute.xlu0 %828
    %v831 = vmul.f32 %v825, %v829
    %833 = vrot.lane.b32.xlu0 %v831, 64
    %v834 = vpop.permute.xlu0 %833
    %v836 = vadd.f32 %v292, %v834
    %v837 = vtanh.pop %v836
    %v838 = vsub.f32 1.0, %v825
    %840 = vrot.lane.b32.xlu0 %v837, 96
    %v841 = vpop.permute.xlu0 %840
    %v843 = vmul.f32 %v838, %v841
    %v844 = vmul.f32 %v825, %v771
    %v845 = vadd.f32 %v843, %v844
    %v846 = vpack.c.bf16 %v845, %v845
    %848 = vrot.lane.b32.xlu0 %v846, 96
    %v849 = vpop.permute.xlu0 %848
    %v851 = vsel %vm239, %v849, 0
    %853 = vmatprep.subr.bf16.mxu0 0
    %854 = vmatpush1.bf16.msra.mxu0 %v316
    %855 = vmatprep.subr.bf16.mxu0 0
    %856 = vmatpush1.bf16.msra.mxu0 %v317
    %857 = vmatprep.subr.bf16.mxu0 0
    %858 = vmatpush1.bf16.msra.mxu0 0
    %859 = vmatprep.subr.bf16.mxu0 0
    %860 = vmatpush1.bf16.msra.mxu0 0
    %861 = vmatprep.subr.bf16.mxu0 0
    %862 = vmatpush1.bf16.msra.mxu0 0
    %863 = vmatprep.subr.bf16.mxu0 0
    %864 = vmatpush1.bf16.msra.mxu0 0
    %865 = vmatprep.subr.bf16.mxu0 0
    %866 = vmatpush1.bf16.msra.mxu0 0
    %867 = vmatprep.subr.bf16.mxu0 0
    %868 = vmatpush1.bf16.msra.mxu0 0
    %869 = vmatprep.subr.bf16.mxu0 0
    %870 = vmatpush1.bf16.msra.mxu0 0
    %871 = vmatprep.subr.bf16.mxu0 0
    %872 = vmatpush1.bf16.msra.mxu0 0
    %873 = vmatprep.subr.bf16.mxu0 0
    %874 = vmatpush1.bf16.msra.mxu0 0
    %875 = vmatprep.subr.bf16.mxu0 0
    %876 = vmatpush1.bf16.msra.mxu0 0
    %877 = vmatprep.subr.bf16.mxu0 0
    %878 = vmatpush1.bf16.msra.mxu0 0
    %879 = vmatprep.subr.bf16.mxu0 0
    %880 = vmatpush1.bf16.msra.mxu0 0
    %881 = vmatprep.subr.bf16.mxu0 0
    %882 = vmatpush1.bf16.msra.mxu0 0
    %883 = vmatprep.subr.bf16.mxu0 0
    %884 = vmatpush1.bf16.msra.mxu0 0
    %885 = vmatprep.mubr.bf16.mxu0 0
    %886 = vmatmul.mubr.bf16.gmra.mrb[0].mxu0 %v851
    %v887 = vpop.f32.mrb[0].mxu0
    %v888 = vadd.f32 0.0, %v887
    %v889 = vpop.f32.mrb[0].mxu0
    %v890 = vpop.f32.mrb[0].mxu0
    %v891 = vpop.f32.mrb[0].mxu0
    %892 = vdwg.mxu0
    %v893 = vadd.f32 %v302, %v888
    %v894 = vxor.u32 %v893, 2147483648
    %v895 = vmul.f32 %v894, 1.442695
    %v896 = vpow.pop %v895
    %v897 = vadd.f32 %v896, 1.0
    %v898 = vrcp.pop %v897
    %v899 = vmul.f32 1.0, %v898
    %v900 = vadd.f32 %v888, %v376
    %902 = vrot.lane.b32.xlu0 %v900, 64
    %v903 = vpop.permute.xlu0 %902
    %v905 = vmul.f32 %v899, %v903
    %907 = vrot.lane.b32.xlu0 %v905, 64
    %v908 = vpop.permute.xlu0 %907
    %v910 = vadd.f32 %v302, %v908
    %v911 = vtanh.pop %v910
    %v912 = vsub.f32 1.0, %v899
    %914 = vrot.lane.b32.xlu0 %v911, 96
    %v915 = vpop.permute.xlu0 %914
    %v917 = vmul.f32 %v912, %v915
    %v918 = vmul.f32 %v899, %v845
    %v919 = vadd.f32 %v917, %v918
    %v928 = vcombine.low %v401, %v475
    %v929 = vcombine.low %v549, %v623
    %v930 = vcombine.low %v697, %v771
    %v931 = vcombine.low %v845, %v919
    %v936 = vpack.c.bf16 %v929, %v928
    %v937 = vpack.c.bf16 %v931, %v930
    %v939 = vlaneseq
    %v940 = vshrl.u32 %v939, 7
    %v941 = vsub.s32 0, %v940
    %v942 = vrot.slane %v115, %v941
    %946 = vrot.lane.b32.xlu0 %v936, 96
    %v947 = vpop.permute.xlu0 %946
    %948 = vrot.lane.b32.xlu0 %v937, 96
    %v949 = vpop.permute.xlu0 %948
    %v954 = vunpack.c.l.b16 %v102
    %v955 = vunpack.c.l.b16 %v103
    %v956 = vunpack.c.l.b16 %v104
    %v957 = vunpack.c.l.b16 %v105
    %v958 = vpack.c.b16 %v955, %v954
    %v959 = vpack.c.b16 %v957, %v956
    %v963 = vsel %vm239, %v947, 0
    %v966 = vsel %vm239, %v949, 0
    %968 = vmatprep.subr.bf16.mxu0 0
    %969 = vmatpush1.bf16.msra.mxu0 %v958
    %970 = vmatprep.subr.bf16.mxu0 0
    %971 = vmatpush1.bf16.msra.mxu0 %v959
    %972 = vmatprep.subr.bf16.mxu0 0
    %973 = vmatpush1.bf16.msra.mxu0 0
    %974 = vmatprep.subr.bf16.mxu0 0
    %975 = vmatpush1.bf16.msra.mxu0 0
    %976 = vmatprep.subr.bf16.mxu0 0
    %977 = vmatpush1.bf16.msra.mxu0 0
    %978 = vmatprep.subr.bf16.mxu0 0
    %979 = vmatpush1.bf16.msra.mxu0 0
    %980 = vmatprep.subr.bf16.mxu0 0
    %981 = vmatpush1.bf16.msra.mxu0 0
    %982 = vmatprep.subr.bf16.mxu0 0
    %983 = vmatpush1.bf16.msra.mxu0 0
    %984 = vmatprep.subr.bf16.mxu0 0
    %985 = vmatpush1.bf16.msra.mxu0 0
    %986 = vmatprep.subr.bf16.mxu0 0
    %987 = vmatpush1.bf16.msra.mxu0 0
    %988 = vmatprep.subr.bf16.mxu0 0
    %989 = vmatpush1.bf16.msra.mxu0 0
    %990 = vmatprep.subr.bf16.mxu0 0
    %991 = vmatpush1.bf16.msra.mxu0 0
    %992 = vmatprep.subr.bf16.mxu0 0
    %993 = vmatpush1.bf16.msra.mxu0 0
    %994 = vmatprep.subr.bf16.mxu0 0
    %995 = vmatpush1.bf16.msra.mxu0 0
    %996 = vmatprep.subr.bf16.mxu0 0
    %997 = vmatpush1.bf16.msra.mxu0 0
    %998 = vmatprep.subr.bf16.mxu0 0
    %999 = vmatpush1.bf16.msra.mxu0 0
    %1000 = vmatprep.mubr.bf16.mxu0 0
    %1001 = vmatmul.mubr.bf16.gmra.mrb[0].mxu0 %v963
    %v1002 = vpop.f32.mrb[0].mxu0
    %v1003 = vadd.f32 %v942, %v1002
    %v1004 = vpop.f32.mrb[0].mxu0
    %v1005 = vpop.f32.mrb[0].mxu0
    %v1006 = vadd.f32 %v942, %v1005
    %v1007 = vpop.f32.mrb[0].mxu0
    %1008 = vmatprep.mubr.bf16.mxu0 0
    %1009 = vmatmul.mubr.bf16.gmra.mrb[0].mxu0 %v966
    %v1010 = vpop.f32.mrb[0].mxu0
    %v1011 = vadd.f32 %v942, %v1010
    %v1012 = vpop.f32.mrb[0].mxu0
    %v1013 = vpop.f32.mrb[0].mxu0
    %v1014 = vadd.f32 %v942, %v1013
    %v1015 = vpop.f32.mrb[0].mxu0
    %1016 = vdwg.mxu0
    %v1021 = vcombine.high %v1003, %v1003
    %v1022 = vcombine.high %v1006, %v1006
    %v1023 = vcombine.high %v1011, %v1011
    %v1024 = vcombine.high %v1014, %v1014
    %v1029 = vpack.c.bf16 %v218, %v218
    %v1034 = vunpack.c.l.b16 %v110
    %v1035 = vunpack.c.l.b16 %v111
    %v1036 = vunpack.c.l.b16 %v112
    %v1037 = vunpack.c.l.b16 %v113
    %v1038 = vpack.c.b16 %v1035, %v1034
    %v1039 = vpack.c.b16 %v1037, %v1036
    %v1043 = vsel %vm239, %v1029, 0
    %1045 = vmatprep.subr.bf16.mxu0 0
    %1046 = vmatpush1.bf16.msra.mxu0 %v1038
    %1047 = vmatprep.subr.bf16.mxu0 0
    %1048 = vmatpush1.bf16.msra.mxu0 %v1039
    %1049 = vmatprep.subr.bf16.mxu0 0
    %1050 = vmatpush1.bf16.msra.mxu0 0
    %1051 = vmatprep.subr.bf16.mxu0 0
    %1052 = vmatpush1.bf16.msra.mxu0 0
    %1053 = vmatprep.subr.bf16.mxu0 0
    %1054 = vmatpush1.bf16.msra.mxu0 0
    %1055 = vmatprep.subr.bf16.mxu0 0
    %1056 = vmatpush1.bf16.msra.mxu0 0
    %1057 = vmatprep.subr.bf16.mxu0 0
    %1058 = vmatpush1.bf16.msra.mxu0 0
    %1059 = vmatprep.subr.bf16.mxu0 0
    %1060 = vmatpush1.bf16.msra.mxu0 0
    %1061 = vmatprep.subr.bf16.mxu0 0
    %1062 = vmatpush1.bf16.msra.mxu0 0
    %1063 = vmatprep.subr.bf16.mxu0 0
    %1064 = vmatpush1.bf16.msra.mxu0 0
    %1065 = vmatprep.subr.bf16.mxu0 0
    %1066 = vmatpush1.bf16.msra.mxu0 0
    %1067 = vmatprep.subr.bf16.mxu0 0
    %1068 = vmatpush1.bf16.msra.mxu0 0
    %1069 = vmatprep.subr.bf16.mxu0 0
    %1070 = vmatpush1.bf16.msra.mxu0 0
    %1071 = vmatprep.subr.bf16.mxu0 0
    %1072 = vmatpush1.bf16.msra.mxu0 0
    %1073 = vmatprep.subr.bf16.mxu0 0
    %1074 = vmatpush1.bf16.msra.mxu0 0
    %1075 = vmatprep.subr.bf16.mxu0 0
    %1076 = vmatpush1.bf16.msra.mxu0 0
    %1077 = vmatprep.mubr.bf16.mxu0 0
    %1078 = vmatmul.mubr.bf16.gmra.mrb[0].mxu0 %v1043
    %v1079 = vpop.f32.mrb[0].mxu0
    %v1080 = vadd.f32 0.0, %v1079
    %v1081 = vpop.f32.mrb[0].mxu0
    %v1082 = vpop.f32.mrb[0].mxu0
    %v1083 = vpop.f32.mrb[0].mxu0
    %1084 = vdwg.mxu0
    %v1085 = vadd.f32 %v1003, %v1080
    %v1086 = vxor.u32 %v1085, 2147483648
    %v1087 = vmul.f32 %v1086, 1.442695
    %v1088 = vpow.pop %v1087
    %v1089 = vadd.f32 %v1088, 1.0
    %v1090 = vrcp.pop %v1089
    %v1091 = vmul.f32 1.0, %v1090
    %v1093 = vlaneseq
    %v1094 = vshrl.u32 %v1093, 7
    %v1095 = vsub.s32 0, %v1094
    %v1096 = vrot.slane %v117, %v1095
    %1097 = vrot.lane.b32.xlu0 %v1096, 64
    %v1098 = vpop.permute.xlu0 %1097
    %v1100 = vadd.f32 %v1080, %v1098
    %1102 = vrot.lane.b32.xlu0 %v1100, 64
    %v1103 = vpop.permute.xlu0 %1102
    %v1105 = vmul.f32 %v1091, %v1103
    %1107 = vrot.lane.b32.xlu0 %v1105, 64
    %v1108 = vpop.permute.xlu0 %1107
    %v1110 = vadd.f32 %v1003, %v1108
    %v1111 = vtanh.pop %v1110
    %v1112 = vsub.f32 1.0, %v1091
    %1114 = vrot.lane.b32.xlu0 %v1111, 96
    %v1115 = vpop.permute.xlu0 %1114
    %v1117 = vmul.f32 %v1112, %v1115
    %1119 = vrot.lane.b32.xlu0 %v218, 32
    %v1120 = vpop.permute.xlu0 %1119
    %v1122 = vmul.f32 %v1091, %v1120
    %v1123 = vadd.f32 %v1117, %v1122
    %v1124 = vpack.c.bf16 %v1123, %v1123
    %1126 = vrot.lane.b32.xlu0 %v1124, 96
    %v1127 = vpop.permute.xlu0 %1126
    %v1129 = vsel %vm239, %v1127, 0
    %1131 = vmatprep.subr.bf16.mxu0 0
    %1132 = vmatpush1.bf16.msra.mxu0 %v1038
    %1133 = vmatprep.subr.bf16.mxu0 0
    %1134 = vmatpush1.bf16.msra.mxu0 %v1039
    %1135 = vmatprep.subr.bf16.mxu0 0
    %1136 = vmatpush1.bf16.msra.mxu0 0
    %1137 = vmatprep.subr.bf16.mxu0 0
    %1138 = vmatpush1.bf16.msra.mxu0 0
    %1139 = vmatprep.subr.bf16.mxu0 0
    %1140 = vmatpush1.bf16.msra.mxu0 0
    %1141 = vmatprep.subr.bf16.mxu0 0
    %1142 = vmatpush1.bf16.msra.mxu0 0
    %1143 = vmatprep.subr.bf16.mxu0 0
    %1144 = vmatpush1.bf16.msra.mxu0 0
    %1145 = vmatprep.subr.bf16.mxu0 0
    %1146 = vmatpush1.bf16.msra.mxu0 0
    %1147 = vmatprep.subr.bf16.mxu0 0
    %1148 = vmatpush1.bf16.msra.mxu0 0
    %1149 = vmatprep.subr.bf16.mxu0 0
    %1150 = vmatpush1.bf16.msra.mxu0 0
    %1151 = vmatprep.subr.bf16.mxu0 0
    %1152 = vmatpush1.bf16.msra.mxu0 0
    %1153 = vmatprep.subr.bf16.mxu0 0
    %1154 = vmatpush1.bf16.msra.mxu0 0
    %1155 = vmatprep.subr.bf16.mxu0 0
    %1156 = vmatpush1.bf16.msra.mxu0 0
    %1157 = vmatprep.subr.bf16.mxu0 0
    %1158 = vmatpush1.bf16.msra.mxu0 0
    %1159 = vmatprep.subr.bf16.mxu0 0
    %1160 = vmatpush1.bf16.msra.mxu0 0
    %1161 = vmatprep.subr.bf16.mxu0 0
    %1162 = vmatpush1.bf16.msra.mxu0 0
    %1163 = vmatprep.mubr.bf16.mxu0 0
    %1164 = vmatmul.mubr.bf16.gmra.mrb[0].mxu0 %v1129
    %v1165 = vpop.f32.mrb[0].mxu0
    %v1166 = vadd.f32 0.0, %v1165
    %v1167 = vpop.f32.mrb[0].mxu0
    %v1168 = vpop.f32.mrb[0].mxu0
    %v1169 = vpop.f32.mrb[0].mxu0
    %1170 = vdwg.mxu0
    %v1171 = vadd.f32 %v1021, %v1166
    %v1172 = vxor.u32 %v1171, 2147483648
    %v1173 = vmul.f32 %v1172, 1.442695
    %v1174 = vpow.pop %v1173
    %v1175 = vadd.f32 %v1174, 1.0
    %v1176 = vrcp.pop %v1175
    %v1177 = vmul.f32 1.0, %v1176
    %v1178 = vadd.f32 %v1166, %v1098
    %1180 = vrot.lane.b32.xlu0 %v1178, 64
    %v1181 = vpop.permute.xlu0 %1180
    %v1183 = vmul.f32 %v1177, %v1181
    %1185 = vrot.lane.b32.xlu0 %v1183, 64
    %v1186 = vpop.permute.xlu0 %1185
    %v1188 = vadd.f32 %v1021, %v1186
    %v1189 = vtanh.pop %v1188
    %v1190 = vsub.f32 1.0, %v1177
    %1192 = vrot.lane.b32.xlu0 %v1189, 96
    %v1193 = vpop.permute.xlu0 %1192
    %v1195 = vmul.f32 %v1190, %v1193
    %v1196 = vmul.f32 %v1177, %v1123
    %v1197 = vadd.f32 %v1195, %v1196
    %v1198 = vpack.c.bf16 %v1197, %v1197
    %1200 = vrot.lane.b32.xlu0 %v1198, 96
    %v1201 = vpop.permute.xlu0 %1200
    %v1203 = vsel %vm239, %v1201, 0
    %1205 = vmatprep.subr.bf16.mxu0 0
    %1206 = vmatpush1.bf16.msra.mxu0 %v1038
    %1207 = vmatprep.subr.bf16.mxu0 0
    %1208 = vmatpush1.bf16.msra.mxu0 %v1039
    %1209 = vmatprep.subr.bf16.mxu0 0
    %1210 = vmatpush1.bf16.msra.mxu0 0
    %1211 = vmatprep.subr.bf16.mxu0 0
    %1212 = vmatpush1.bf16.msra.mxu0 0
    %1213 = vmatprep.subr.bf16.mxu0 0
    %1214 = vmatpush1.bf16.msra.mxu0 0
    %1215 = vmatprep.subr.bf16.mxu0 0
    %1216 = vmatpush1.bf16.msra.mxu0 0
    %1217 = vmatprep.subr.bf16.mxu0 0
    %1218 = vmatpush1.bf16.msra.mxu0 0
    %1219 = vmatprep.subr.bf16.mxu0 0
    %1220 = vmatpush1.bf16.msra.mxu0 0
    %1221 = vmatprep.subr.bf16.mxu0 0
    %1222 = vmatpush1.bf16.msra.mxu0 0
    %1223 = vmatprep.subr.bf16.mxu0 0
    %1224 = vmatpush1.bf16.msra.mxu0 0
    %1225 = vmatprep.subr.bf16.mxu0 0
    %1226 = vmatpush1.bf16.msra.mxu0 0
    %1227 = vmatprep.subr.bf16.mxu0 0
    %1228 = vmatpush1.bf16.msra.mxu0 0
    %1229 = vmatprep.subr.bf16.mxu0 0
    %1230 = vmatpush1.bf16.msra.mxu0 0
    %1231 = vmatprep.subr.bf16.mxu0 0
    %1232 = vmatpush1.bf16.msra.mxu0 0
    %1233 = vmatprep.subr.bf16.mxu0 0
    %1234 = vmatpush1.bf16.msra.mxu0 0
    %1235 = vmatprep.subr.bf16.mxu0 0
    %1236 = vmatpush1.bf16.msra.mxu0 0
    %1237 = vmatprep.mubr.bf16.mxu0 0
    %1238 = vmatmul.mubr.bf16.gmra.mrb[0].mxu0 %v1203
    %v1239 = vpop.f32.mrb[0].mxu0
    %v1240 = vadd.f32 0.0, %v1239
    %v1241 = vpop.f32.mrb[0].mxu0
    %v1242 = vpop.f32.mrb[0].mxu0
    %v1243 = vpop.f32.mrb[0].mxu0
    %1244 = vdwg.mxu0
    %v1245 = vadd.f32 %v1006, %v1240
    %v1246 = vxor.u32 %v1245, 2147483648
    %v1247 = vmul.f32 %v1246, 1.442695
    %v1248 = vpow.pop %v1247
    %v1249 = vadd.f32 %v1248, 1.0
    %v1250 = vrcp.pop %v1249
    %v1251 = vmul.f32 1.0, %v1250
    %v1252 = vadd.f32 %v1240, %v1098
    %1254 = vrot.lane.b32.xlu0 %v1252, 64
    %v1255 = vpop.permute.xlu0 %1254
    %v1257 = vmul.f32 %v1251, %v1255
    %1259 = vrot.lane.b32.xlu0 %v1257, 64
    %v1260 = vpop.permute.xlu0 %1259
    %v1262 = vadd.f32 %v1006, %v1260
    %v1263 = vtanh.pop %v1262
    %v1264 = vsub.f32 1.0, %v1251
    %1266 = vrot.lane.b32.xlu0 %v1263, 96
    %v1267 = vpop.permute.xlu0 %1266
    %v1269 = vmul.f32 %v1264, %v1267
    %v1270 = vmul.f32 %v1251, %v1197
    %v1271 = vadd.f32 %v1269, %v1270
    %v1272 = vpack.c.bf16 %v1271, %v1271
    %1274 = vrot.lane.b32.xlu0 %v1272, 96
    %v1275 = vpop.permute.xlu0 %1274
    %v1277 = vsel %vm239, %v1275, 0
    %1279 = vmatprep.subr.bf16.mxu0 0
    %1280 = vmatpush1.bf16.msra.mxu0 %v1038
    %1281 = vmatprep.subr.bf16.mxu0 0
    %1282 = vmatpush1.bf16.msra.mxu0 %v1039
    %1283 = vmatprep.subr.bf16.mxu0 0
    %1284 = vmatpush1.bf16.msra.mxu0 0
    %1285 = vmatprep.subr.bf16.mxu0 0
    %1286 = vmatpush1.bf16.msra.mxu0 0
    %1287 = vmatprep.subr.bf16.mxu0 0
    %1288 = vmatpush1.bf16.msra.mxu0 0
    %1289 = vmatprep.subr.bf16.mxu0 0
    %1290 = vmatpush1.bf16.msra.mxu0 0
    %1291 = vmatprep.subr.bf16.mxu0 0
    %1292 = vmatpush1.bf16.msra.mxu0 0
    %1293 = vmatprep.subr.bf16.mxu0 0
    %1294 = vmatpush1.bf16.msra.mxu0 0
    %1295 = vmatprep.subr.bf16.mxu0 0
    %1296 = vmatpush1.bf16.msra.mxu0 0
    %1297 = vmatprep.subr.bf16.mxu0 0
    %1298 = vmatpush1.bf16.msra.mxu0 0
    %1299 = vmatprep.subr.bf16.mxu0 0
    %1300 = vmatpush1.bf16.msra.mxu0 0
    %1301 = vmatprep.subr.bf16.mxu0 0
    %1302 = vmatpush1.bf16.msra.mxu0 0
    %1303 = vmatprep.subr.bf16.mxu0 0
    %1304 = vmatpush1.bf16.msra.mxu0 0
    %1305 = vmatprep.subr.bf16.mxu0 0
    %1306 = vmatpush1.bf16.msra.mxu0 0
    %1307 = vmatprep.subr.bf16.mxu0 0
    %1308 = vmatpush1.bf16.msra.mxu0 0
    %1309 = vmatprep.subr.bf16.mxu0 0
    %1310 = vmatpush1.bf16.msra.mxu0 0
    %1311 = vmatprep.mubr.bf16.mxu0 0
    %1312 = vmatmul.mubr.bf16.gmra.mrb[0].mxu0 %v1277
    %v1313 = vpop.f32.mrb[0].mxu0
    %v1314 = vadd.f32 0.0, %v1313
    %v1315 = vpop.f32.mrb[0].mxu0
    %v1316 = vpop.f32.mrb[0].mxu0
    %v1317 = vpop.f32.mrb[0].mxu0
    %1318 = vdwg.mxu0
    %v1319 = vadd.f32 %v1022, %v1314
    %v1320 = vxor.u32 %v1319, 2147483648
    %v1321 = vmul.f32 %v1320, 1.442695
    %v1322 = vpow.pop %v1321
    %v1323 = vadd.f32 %v1322, 1.0
    %v1324 = vrcp.pop %v1323
    %v1325 = vmul.f32 1.0, %v1324
    %v1326 = vadd.f32 %v1314, %v1098
    %1328 = vrot.lane.b32.xlu0 %v1326, 64
    %v1329 = vpop.permute.xlu0 %1328
    %v1331 = vmul.f32 %v1325, %v1329
    %1333 = vrot.lane.b32.xlu0 %v1331, 64
    %v1334 = vpop.permute.xlu0 %1333
    %v1336 = vadd.f32 %v1022, %v1334
    %v1337 = vtanh.pop %v1336
    %v1338 = vsub.f32 1.0, %v1325
    %1340 = vrot.lane.b32.xlu0 %v1337, 96
    %v1341 = vpop.permute.xlu0 %1340
    %v1343 = vmul.f32 %v1338, %v1341
    %v1344 = vmul.f32 %v1325, %v1271
    %v1345 = vadd.f32 %v1343, %v1344
    %v1346 = vpack.c.bf16 %v1345, %v1345
    %1348 = vrot.lane.b32.xlu0 %v1346, 96
    %v1349 = vpop.permute.xlu0 %1348
    %v1351 = vsel %vm239, %v1349, 0
    %1353 = vmatprep.subr.bf16.mxu0 0
    %1354 = vmatpush1.bf16.msra.mxu0 %v1038
    %1355 = vmatprep.subr.bf16.mxu0 0
    %1356 = vmatpush1.bf16.msra.mxu0 %v1039
    %1357 = vmatprep.subr.bf16.mxu0 0
    %1358 = vmatpush1.bf16.msra.mxu0 0
    %1359 = vmatprep.subr.bf16.mxu0 0
    %1360 = vmatpush1.bf16.msra.mxu0 0
    %1361 = vmatprep.subr.bf16.mxu0 0
    %1362 = vmatpush1.bf16.msra.mxu0 0
    %1363 = vmatprep.subr.bf16.mxu0 0
    %1364 = vmatpush1.bf16.msra.mxu0 0
    %1365 = vmatprep.subr.bf16.mxu0 0
    %1366 = vmatpush1.bf16.msra.mxu0 0
    %1367 = vmatprep.subr.bf16.mxu0 0
    %1368 = vmatpush1.bf16.msra.mxu0 0
    %1369 = vmatprep.subr.bf16.mxu0 0
    %1370 = vmatpush1.bf16.msra.mxu0 0
    %1371 = vmatprep.subr.bf16.mxu0 0
    %1372 = vmatpush1.bf16.msra.mxu0 0
    %1373 = vmatprep.subr.bf16.mxu0 0
    %1374 = vmatpush1.bf16.msra.mxu0 0
    %1375 = vmatprep.subr.bf16.mxu0 0
    %1376 = vmatpush1.bf16.msra.mxu0 0
    %1377 = vmatprep.subr.bf16.mxu0 0
    %1378 = vmatpush1.bf16.msra.mxu0 0
    %1379 = vmatprep.subr.bf16.mxu0 0
    %1380 = vmatpush1.bf16.msra.mxu0 0
    %1381 = vmatprep.subr.bf16.mxu0 0
    %1382 = vmatpush1.bf16.msra.mxu0 0
    %1383 = vmatprep.subr.bf16.mxu0 0
    %1384 = vmatpush1.bf16.msra.mxu0 0
    %1385 = vmatprep.mubr.bf16.mxu0 0
    %1386 = vmatmul.mubr.bf16.gmra.mrb[0].mxu0 %v1351
    %v1387 = vpop.f32.mrb[0].mxu0
    %v1388 = vadd.f32 0.0, %v1387
    %v1389 = vpop.f32.mrb[0].mxu0
    %v1390 = vpop.f32.mrb[0].mxu0
    %v1391 = vpop.f32.mrb[0].mxu0
    %1392 = vdwg.mxu0
    %v1393 = vadd.f32 %v1011, %v1388
    %v1394 = vxor.u32 %v1393, 2147483648
    %v1395 = vmul.f32 %v1394, 1.442695
    %v1396 = vpow.pop %v1395
    %v1397 = vadd.f32 %v1396, 1.0
    %v1398 = vrcp.pop %v1397
    %v1399 = vmul.f32 1.0, %v1398
    %v1400 = vadd.f32 %v1388, %v1098
    %1402 = vrot.lane.b32.xlu0 %v1400, 64
    %v1403 = vpop.permute.xlu0 %1402
    %v1405 = vmul.f32 %v1399, %v1403
    %1407 = vrot.lane.b32.xlu0 %v1405, 64
    %v1408 = vpop.permute.xlu0 %1407
    %v1410 = vadd.f32 %v1011, %v1408
    %v1411 = vtanh.pop %v1410
    %v1412 = vsub.f32 1.0, %v1399
    %1414 = vrot.lane.b32.xlu0 %v1411, 96
    %v1415 = vpop.permute.xlu0 %1414
    %v1417 = vmul.f32 %v1412, %v1415
    %v1418 = vmul.f32 %v1399, %v1345
    %v1419 = vadd.f32 %v1417, %v1418
    %v1420 = vpack.c.bf16 %v1419, %v1419
    %1422 = vrot.lane.b32.xlu0 %v1420, 96
    %v1423 = vpop.permute.xlu0 %1422
    %v1425 = vsel %vm239, %v1423, 0
    %1427 = vmatprep.subr.bf16.mxu0 0
    %1428 = vmatpush1.bf16.msra.mxu0 %v1038
    %1429 = vmatprep.subr.bf16.mxu0 0
    %1430 = vmatpush1.bf16.msra.mxu0 %v1039
    %1431 = vmatprep.subr.bf16.mxu0 0
    %1432 = vmatpush1.bf16.msra.mxu0 0
    %1433 = vmatprep.subr.bf16.mxu0 0
    %1434 = vmatpush1.bf16.msra.mxu0 0
    %1435 = vmatprep.subr.bf16.mxu0 0
    %1436 = vmatpush1.bf16.msra.mxu0 0
    %1437 = vmatprep.subr.bf16.mxu0 0
    %1438 = vmatpush1.bf16.msra.mxu0 0
    %1439 = vmatprep.subr.bf16.mxu0 0
    %1440 = vmatpush1.bf16.msra.mxu0 0
    %1441 = vmatprep.subr.bf16.mxu0 0
    %1442 = vmatpush1.bf16.msra.mxu0 0
    %1443 = vmatprep.subr.bf16.mxu0 0
    %1444 = vmatpush1.bf16.msra.mxu0 0
    %1445 = vmatprep.subr.bf16.mxu0 0
    %1446 = vmatpush1.bf16.msra.mxu0 0
    %1447 = vmatprep.subr.bf16.mxu0 0
    %1448 = vmatpush1.bf16.msra.mxu0 0
    %1449 = vmatprep.subr.bf16.mxu0 0
    %1450 = vmatpush1.bf16.msra.mxu0 0
    %1451 = vmatprep.subr.bf16.mxu0 0
    %1452 = vmatpush1.bf16.msra.mxu0 0
    %1453 = vmatprep.subr.bf16.mxu0 0
    %1454 = vmatpush1.bf16.msra.mxu0 0
    %1455 = vmatprep.subr.bf16.mxu0 0
    %1456 = vmatpush1.bf16.msra.mxu0 0
    %1457 = vmatprep.subr.bf16.mxu0 0
    %1458 = vmatpush1.bf16.msra.mxu0 0
    %1459 = vmatprep.mubr.bf16.mxu0 0
    %1460 = vmatmul.mubr.bf16.gmra.mrb[0].mxu0 %v1425
    %v1461 = vpop.f32.mrb[0].mxu0
    %v1462 = vadd.f32 0.0, %v1461
    %v1463 = vpop.f32.mrb[0].mxu0
    %v1464 = vpop.f32.mrb[0].mxu0
    %v1465 = vpop.f32.mrb[0].mxu0
    %1466 = vdwg.mxu0
    %v1467 = vadd.f32 %v1023, %v1462
    %v1468 = vxor.u32 %v1467, 2147483648
    %v1469 = vmul.f32 %v1468, 1.442695
    %v1470 = vpow.pop %v1469
    %v1471 = vadd.f32 %v1470, 1.0
    %v1472 = vrcp.pop %v1471
    %v1473 = vmul.f32 1.0, %v1472
    %v1474 = vadd.f32 %v1462, %v1098
    %1476 = vrot.lane.b32.xlu0 %v1474, 64
    %v1477 = vpop.permute.xlu0 %1476
    %v1479 = vmul.f32 %v1473, %v1477
    %1481 = vrot.lane.b32.xlu0 %v1479, 64
    %v1482 = vpop.permute.xlu0 %1481
    %v1484 = vadd.f32 %v1023, %v1482
    %v1485 = vtanh.pop %v1484
    %v1486 = vsub.f32 1.0, %v1473
    %1488 = vrot.lane.b32.xlu0 %v1485, 96
    %v1489 = vpop.permute.xlu0 %1488
    %v1491 = vmul.f32 %v1486, %v1489
    %v1492 = vmul.f32 %v1473, %v1419
    %v1493 = vadd.f32 %v1491, %v1492
    %v1494 = vpack.c.bf16 %v1493, %v1493
    %1496 = vrot.lane.b32.xlu0 %v1494, 96
    %v1497 = vpop.permute.xlu0 %1496
    %v1499 = vsel %vm239, %v1497, 0
    %1501 = vmatprep.subr.bf16.mxu0 0
    %1502 = vmatpush1.bf16.msra.mxu0 %v1038
    %1503 = vmatprep.subr.bf16.mxu0 0
    %1504 = vmatpush1.bf16.msra.mxu0 %v1039
    %1505 = vmatprep.subr.bf16.mxu0 0
    %1506 = vmatpush1.bf16.msra.mxu0 0
    %1507 = vmatprep.subr.bf16.mxu0 0
    %1508 = vmatpush1.bf16.msra.mxu0 0
    %1509 = vmatprep.subr.bf16.mxu0 0
    %1510 = vmatpush1.bf16.msra.mxu0 0
    %1511 = vmatprep.subr.bf16.mxu0 0
    %1512 = vmatpush1.bf16.msra.mxu0 0
    %1513 = vmatprep.subr.bf16.mxu0 0
    %1514 = vmatpush1.bf16.msra.mxu0 0
    %1515 = vmatprep.subr.bf16.mxu0 0
    %1516 = vmatpush1.bf16.msra.mxu0 0
    %1517 = vmatprep.subr.bf16.mxu0 0
    %1518 = vmatpush1.bf16.msra.mxu0 0
    %1519 = vmatprep.subr.bf16.mxu0 0
    %1520 = vmatpush1.bf16.msra.mxu0 0
    %1521 = vmatprep.subr.bf16.mxu0 0
    %1522 = vmatpush1.bf16.msra.mxu0 0
    %1523 = vmatprep.subr.bf16.mxu0 0
    %1524 = vmatpush1.bf16.msra.mxu0 0
    %1525 = vmatprep.subr.bf16.mxu0 0
    %1526 = vmatpush1.bf16.msra.mxu0 0
    %1527 = vmatprep.subr.bf16.mxu0 0
    %1528 = vmatpush1.bf16.msra.mxu0 0
    %1529 = vmatprep.subr.bf16.mxu0 0
    %1530 = vmatpush1.bf16.msra.mxu0 0
    %1531 = vmatprep.subr.bf16.mxu0 0
    %1532 = vmatpush1.bf16.msra.mxu0 0
    %1533 = vmatprep.mubr.bf16.mxu0 0
    %1534 = vmatmul.mubr.bf16.gmra.mrb[0].mxu0 %v1499
    %v1535 = vpop.f32.mrb[0].mxu0
    %v1536 = vadd.f32 0.0, %v1535
    %v1537 = vpop.f32.mrb[0].mxu0
    %v1538 = vpop.f32.mrb[0].mxu0
    %v1539 = vpop.f32.mrb[0].mxu0
    %1540 = vdwg.mxu0
    %v1541 = vadd.f32 %v1014, %v1536
    %v1542 = vxor.u32 %v1541, 2147483648
    %v1543 = vmul.f32 %v1542, 1.442695
    %v1544 = vpow.pop %v1543
    %v1545 = vadd.f32 %v1544, 1.0
    %v1546 = vrcp.pop %v1545
    %v1547 = vmul.f32 1.0, %v1546
    %v1548 = vadd.f32 %v1536, %v1098
    %1550 = vrot.lane.b32.xlu0 %v1548, 64
    %v1551 = vpop.permute.xlu0 %1550
    %v1553 = vmul.f32 %v1547, %v1551
    %1555 = vrot.lane.b32.xlu0 %v1553, 64
    %v1556 = vpop.permute.xlu0 %1555
    %v1558 = vadd.f32 %v1014, %v1556
    %v1559 = vtanh.pop %v1558
    %v1560 = vsub.f32 1.0, %v1547
    %1562 = vrot.lane.b32.xlu0 %v1559, 96
    %v1563 = vpop.permute.xlu0 %1562
    %v1565 = vmul.f32 %v1560, %v1563
    %v1566 = vmul.f32 %v1547, %v1493
    %v1567 = vadd.f32 %v1565, %v1566
    %v1568 = vpack.c.bf16 %v1567, %v1567
    %1570 = vrot.lane.b32.xlu0 %v1568, 96
    %v1571 = vpop.permute.xlu0 %1570
    %v1573 = vsel %vm239, %v1571, 0
    %1575 = vmatprep.subr.bf16.mxu0 0
    %1576 = vmatpush1.bf16.msra.mxu0 %v1038
    %1577 = vmatprep.subr.bf16.mxu0 0
    %1578 = vmatpush1.bf16.msra.mxu0 %v1039
    %1579 = vmatprep.subr.bf16.mxu0 0
    %1580 = vmatpush1.bf16.msra.mxu0 0
    %1581 = vmatprep.subr.bf16.mxu0 0
    %1582 = vmatpush1.bf16.msra.mxu0 0
    %1583 = vmatprep.subr.bf16.mxu0 0
    %1584 = vmatpush1.bf16.msra.mxu0 0
    %1585 = vmatprep.subr.bf16.mxu0 0
    %1586 = vmatpush1.bf16.msra.mxu0 0
    %1587 = vmatprep.subr.bf16.mxu0 0
    %1588 = vmatpush1.bf16.msra.mxu0 0
    %1589 = vmatprep.subr.bf16.mxu0 0
    %1590 = vmatpush1.bf16.msra.mxu0 0
    %1591 = vmatprep.subr.bf16.mxu0 0
    %1592 = vmatpush1.bf16.msra.mxu0 0
    %1593 = vmatprep.subr.bf16.mxu0 0
    %1594 = vmatpush1.bf16.msra.mxu0 0
    %1595 = vmatprep.subr.bf16.mxu0 0
    %1596 = vmatpush1.bf16.msra.mxu0 0
    %1597 = vmatprep.subr.bf16.mxu0 0
    %1598 = vmatpush1.bf16.msra.mxu0 0
    %1599 = vmatprep.subr.bf16.mxu0 0
    %1600 = vmatpush1.bf16.msra.mxu0 0
    %1601 = vmatprep.subr.bf16.mxu0 0
    %1602 = vmatpush1.bf16.msra.mxu0 0
    %1603 = vmatprep.subr.bf16.mxu0 0
    %1604 = vmatpush1.bf16.msra.mxu0 0
    %1605 = vmatprep.subr.bf16.mxu0 0
    %1606 = vmatpush1.bf16.msra.mxu0 0
    %1607 = vmatprep.mubr.bf16.mxu0 0
    %1608 = vmatmul.mubr.bf16.gmra.mrb[0].mxu0 %v1573
    %v1609 = vpop.f32.mrb[0].mxu0
    %v1610 = vadd.f32 0.0, %v1609
    %v1611 = vpop.f32.mrb[0].mxu0
    %v1612 = vpop.f32.mrb[0].mxu0
    %v1613 = vpop.f32.mrb[0].mxu0
    %1614 = vdwg.mxu0
    %v1615 = vadd.f32 %v1024, %v1610
    %v1616 = vxor.u32 %v1615, 2147483648
    %v1617 = vmul.f32 %v1616, 1.442695
    %v1618 = vpow.pop %v1617
    %v1619 = vadd.f32 %v1618, 1.0
    %v1620 = vrcp.pop %v1619
    %v1621 = vmul.f32 1.0, %v1620
    %v1622 = vadd.f32 %v1610, %v1098
    %1624 = vrot.lane.b32.xlu0 %v1622, 64
    %v1625 = vpop.permute.xlu0 %1624
    %v1627 = vmul.f32 %v1621, %v1625
    %1629 = vrot.lane.b32.xlu0 %v1627, 64
    %v1630 = vpop.permute.xlu0 %1629
    %v1632 = vadd.f32 %v1024, %v1630
    %v1633 = vtanh.pop %v1632
    %v1634 = vsub.f32 1.0, %v1621
    %1636 = vrot.lane.b32.xlu0 %v1633, 96
    %v1637 = vpop.permute.xlu0 %1636
    %v1639 = vmul.f32 %v1634, %v1637
    %v1640 = vmul.f32 %v1621, %v1567
    %v1641 = vadd.f32 %v1639, %v1640
    %v1650 = vcombine.low %v1123, %v1197
    %v1651 = vcombine.low %v1271, %v1345
    %v1652 = vcombine.low %v1419, %v1493
    %v1653 = vcombine.low %v1567, %v1641
    %v1658 = vpack.c.bf16 %v1651, %v1650
    %v1659 = vpack.c.bf16 %v1653, %v1652
    %v1660 = vld [vmem:[%s8] sm:$0xf]
    %v1661 = vld [vmem:[%s8 + $0x4] sm:$0xf]
    %v1662 = vld [vmem:[%s8 + $0x8] sm:$0xf]
    %v1663 = vld [vmem:[%s8 + $0xc] sm:$0xf]
    %v1664 = vld [vmem:[#allocation9] sm:$0x1]
    %v1666 = vlaneseq
    %v1667 = vshrl.u32 %v1666, 7
    %v1668 = vsub.s32 0, %v1667
    %v1669 = vrot.slane %v1664, %v1668
    %1673 = vrot.lane.b32.xlu0 %v1658, 96
    %v1674 = vpop.permute.xlu0 %1673
    %1675 = vrot.lane.b32.xlu0 %v1659, 96
    %v1676 = vpop.permute.xlu0 %1675
    %v1681 = vunpack.c.l.b16 %v1660
    %v1682 = vunpack.c.l.b16 %v1661
    %v1683 = vunpack.c.l.b16 %v1662
    %v1684 = vunpack.c.l.b16 %v1663
    %v1685 = vpack.c.b16 %v1682, %v1681
    %v1686 = vpack.c.b16 %v1684, %v1683
    %v1690 = vsel %vm239, %v1674, 0
    %v1693 = vsel %vm239, %v1676, 0
    %1695 = vmatprep.subr.bf16.mxu0 0
    %1696 = vmatpush1.bf16.msra.mxu0 %v1685
    %1697 = vmatprep.subr.bf16.mxu0 0
    %1698 = vmatpush1.bf16.msra.mxu0 %v1686
    %1699 = vmatprep.subr.bf16.mxu0 0
    %1700 = vmatpush1.bf16.msra.mxu0 0
    %1701 = vmatprep.subr.bf16.mxu0 0
    %1702 = vmatpush1.bf16.msra.mxu0 0
    %1703 = vmatprep.subr.bf16.mxu0 0
    %1704 = vmatpush1.bf16.msra.mxu0 0
    %1705 = vmatprep.subr.bf16.mxu0 0
    %1706 = vmatpush1.bf16.msra.mxu0 0
    %1707 = vmatprep.subr.bf16.mxu0 0
    %1708 = vmatpush1.bf16.msra.mxu0 0
    %1709 = vmatprep.subr.bf16.mxu0 0
    %1710 = vmatpush1.bf16.msra.mxu0 0
    %1711 = vmatprep.subr.bf16.mxu0 0
    %1712 = vmatpush1.bf16.msra.mxu0 0
    %1713 = vmatprep.subr.bf16.mxu0 0
    %1714 = vmatpush1.bf16.msra.mxu0 0
    %1715 = vmatprep.subr.bf16.mxu0 0
    %1716 = vmatpush1.bf16.msra.mxu0 0
    %1717 = vmatprep.subr.bf16.mxu0 0
    %1718 = vmatpush1.bf16.msra.mxu0 0
    %1719 = vmatprep.subr.bf16.mxu0 0
    %1720 = vmatpush1.bf16.msra.mxu0 0
    %1721 = vmatprep.subr.bf16.mxu0 0
    %1722 = vmatpush1.bf16.msra.mxu0 0
    %1723 = vmatprep.subr.bf16.mxu0 0
    %1724 = vmatpush1.bf16.msra.mxu0 0
    %1725 = vmatprep.subr.bf16.mxu0 0
    %1726 = vmatpush1.bf16.msra.mxu0 0
    %1727 = vmatprep.mubr.bf16.mxu0 0
    %1728 = vmatmul.mubr.bf16.gmra.mrb[0].mxu0 %v1690
    %v1729 = vpop.f32.mrb[0].mxu0
    %v1730 = vadd.f32 %v1669, %v1729
    %v1731 = vpop.f32.mrb[0].mxu0
    %v1732 = vpop.f32.mrb[0].mxu0
    %v1733 = vadd.f32 %v1669, %v1732
    %v1734 = vpop.f32.mrb[0].mxu0
    %1735 = vmatprep.mubr.bf16.mxu0 0
    %1736 = vmatmul.mubr.bf16.gmra.mrb[0].mxu0 %v1693
    %v1737 = vpop.f32.mrb[0].mxu0
    %v1738 = vadd.f32 %v1669, %v1737
    %v1739 = vpop.f32.mrb[0].mxu0
    %v1740 = vpop.f32.mrb[0].mxu0
    %v1741 = vadd.f32 %v1669, %v1740
    %v1742 = vpop.f32.mrb[0].mxu0
    %1743 = vdwg.mxu0
    %v1744 = vxor.u32 %v1730, 2147483648
    %v1745 = vxor.u32 %v1733, 2147483648
    %v1746 = vxor.u32 %v1738, 2147483648
    %v1747 = vxor.u32 %v1741, 2147483648
    %v1748 = vmul.f32 %v1744, 1.442695
    %v1749 = vpow.pop %v1748
    %v1750 = vmul.f32 %v1745, 1.442695
    %v1751 = vpow.pop %v1750
    %v1752 = vmul.f32 %v1746, 1.442695
    %v1753 = vpow.pop %v1752
    %v1754 = vmul.f32 %v1747, 1.442695
    %v1755 = vpow.pop %v1754
    %v1756 = vadd.f32 %v1749, 1.0
    %v1757 = vadd.f32 %v1751, 1.0
    %v1758 = vadd.f32 %v1753, 1.0
    %v1759 = vadd.f32 %v1755, 1.0
    %v1760 = vrcp.pop %v1756
    %v1761 = vmul.f32 1.0, %v1760
    %v1762 = vrcp.pop %v1757
    %v1763 = vmul.f32 1.0, %v1762
    %v1764 = vrcp.pop %v1758
    %v1765 = vmul.f32 1.0, %v1764
    %v1766 = vrcp.pop %v1759
    %v1767 = vmul.f32 1.0, %v1766
    %v1768 = vadd.f32 %v1761, %v209
    %v1769 = vadd.f32 %v1763, %v211
    %v1770 = vadd.f32 %v1765, %v213
    %v1771 = vadd.f32 %v1767, %v215
    %v1772 = vpack.c.bf16 %v1769, %v1768
    %v1773 = vpack.c.bf16 %v1771, %v1770
    %v1775 = vsel %vm239, %v1772, 0
    %v1778 = vsel %vm239, %v1773, 0
    %1780 = vmatprep.subr.bf16.mxu0 0
    %1781 = vmatpush1.bf16.msra.mxu0 %v235
    %1782 = vmatprep.subr.bf16.mxu0 0
    %1783 = vmatpush1.bf16.msra.mxu0 %v236
    %1784 = vmatprep.subr.bf16.mxu0 0
    %1785 = vmatpush1.bf16.msra.mxu0 0
    %1786 = vmatprep.subr.bf16.mxu0 0
    %1787 = vmatpush1.bf16.msra.mxu0 0
    %1788 = vmatprep.subr.bf16.mxu0 0
    %1789 = vmatpush1.bf16.msra.mxu0 0
    %1790 = vmatprep.subr.bf16.mxu0 0
    %1791 = vmatpush1.bf16.msra.mxu0 0
    %1792 = vmatprep.subr.bf16.mxu0 0
    %1793 = vmatpush1.bf16.msra.mxu0 0
    %1794 = vmatprep.subr.bf16.mxu0 0
    %1795 = vmatpush1.bf16.msra.mxu0 0
    %1796 = vmatprep.subr.bf16.mxu0 0
    %1797 = vmatpush1.bf16.msra.mxu0 0
    %1798 = vmatprep.subr.bf16.mxu0 0
    %1799 = vmatpush1.bf16.msra.mxu0 0
    %1800 = vmatprep.subr.bf16.mxu0 0
    %1801 = vmatpush1.bf16.msra.mxu0 0
    %1802 = vmatprep.subr.bf16.mxu0 0
    %1803 = vmatpush1.bf16.msra.mxu0 0
    %1804 = vmatprep.subr.bf16.mxu0 0
    %1805 = vmatpush1.bf16.msra.mxu0 0
    %1806 = vmatprep.subr.bf16.mxu0 0
    %1807 = vmatpush1.bf16.msra.mxu0 0
    %1808 = vmatprep.subr.bf16.mxu0 0
    %1809 = vmatpush1.bf16.msra.mxu0 0
    %1810 = vmatprep.subr.bf16.mxu0 0
    %1811 = vmatpush1.bf16.msra.mxu0 0
    %1812 = vmatprep.mubr.bf16.mxu0 0
    %1813 = vmatmul.mubr.bf16.gmra.mrb[0].mxu0 %v1775
    %v1814 = vpop.f32.mrb[0].mxu0
    %v1815 = vadd.f32 %v225, %v1814
    %v1816 = vpop.f32.mrb[0].mxu0
    %v1817 = vpop.f32.mrb[0].mxu0
    %v1818 = vadd.f32 %v225, %v1817
    %v1819 = vpop.f32.mrb[0].mxu0
    %1820 = vmatprep.mubr.bf16.mxu0 0
    %1821 = vmatmul.mubr.bf16.gmra.mrb[0].mxu0 %v1778
    %v1822 = vpop.f32.mrb[0].mxu0
    %v1823 = vadd.f32 %v225, %v1822
    %v1824 = vpop.f32.mrb[0].mxu0
    %v1825 = vpop.f32.mrb[0].mxu0
    %v1826 = vadd.f32 %v225, %v1825
    %v1827 = vpop.f32.mrb[0].mxu0
    %1828 = vdwg.mxu0
    %v1833 = vcombine.high %v1815, %v1815
    %v1834 = vcombine.high %v1818, %v1818
    %v1835 = vcombine.high %v1823, %v1823
    %v1836 = vcombine.high %v1826, %v1826
    %v1841 = vpack.c.bf16 %v919, %v919
    %1843 = vrot.lane.b32.xlu0 %v1841, 96
    %v1844 = vpop.permute.xlu0 %1843
    %v1846 = vsel %vm239, %v1844, 0
    %1848 = vmatprep.subr.bf16.mxu0 0
    %1849 = vmatpush1.bf16.msra.mxu0 %v316
    %1850 = vmatprep.subr.bf16.mxu0 0
    %1851 = vmatpush1.bf16.msra.mxu0 %v317
    %1852 = vmatprep.subr.bf16.mxu0 0
    %1853 = vmatpush1.bf16.msra.mxu0 0
    %1854 = vmatprep.subr.bf16.mxu0 0
    %1855 = vmatpush1.bf16.msra.mxu0 0
    %1856 = vmatprep.subr.bf16.mxu0 0
    %1857 = vmatpush1.bf16.msra.mxu0 0
    %1858 = vmatprep.subr.bf16.mxu0 0
    %1859 = vmatpush1.bf16.msra.mxu0 0
    %1860 = vmatprep.subr.bf16.mxu0 0
    %1861 = vmatpush1.bf16.msra.mxu0 0
    %1862 = vmatprep.subr.bf16.mxu0 0
    %1863 = vmatpush1.bf16.msra.mxu0 0
    %1864 = vmatprep.subr.bf16.mxu0 0
    %1865 = vmatpush1.bf16.msra.mxu0 0
    %1866 = vmatprep.subr.bf16.mxu0 0
    %1867 = vmatpush1.bf16.msra.mxu0 0
    %1868 = vmatprep.subr.bf16.mxu0 0
    %1869 = vmatpush1.bf16.msra.mxu0 0
    %1870 = vmatprep.subr.bf16.mxu0 0
    %1871 = vmatpush1.bf16.msra.mxu0 0
    %1872 = vmatprep.subr.bf16.mxu0 0
    %1873 = vmatpush1.bf16.msra.mxu0 0
    %1874 = vmatprep.subr.bf16.mxu0 0
    %1875 = vmatpush1.bf16.msra.mxu0 0
    %1876 = vmatprep.subr.bf16.mxu0 0
    %1877 = vmatpush1.bf16.msra.mxu0 0
    %1878 = vmatprep.subr.bf16.mxu0 0
    %1879 = vmatpush1.bf16.msra.mxu0 0
    %1880 = vmatprep.mubr.bf16.mxu0 0
    %1881 = vmatmul.mubr.bf16.gmra.mrb[0].mxu0 %v1846
    %v1882 = vpop.f32.mrb[0].mxu0
    %v1883 = vadd.f32 0.0, %v1882
    %v1884 = vpop.f32.mrb[0].mxu0
    %v1885 = vpop.f32.mrb[0].mxu0
    %v1886 = vpop.f32.mrb[0].mxu0
    %1887 = vdwg.mxu0
    %v1888 = vadd.f32 %v1815, %v1883
    %v1889 = vxor.u32 %v1888, 2147483648
    %v1890 = vmul.f32 %v1889, 1.442695
    %v1891 = vpow.pop %v1890
    %v1892 = vadd.f32 %v1891, 1.0
    %v1893 = vrcp.pop %v1892
    %v1894 = vmul.f32 1.0, %v1893
    %v1895 = vadd.f32 %v1883, %v376
    %1897 = vrot.lane.b32.xlu0 %v1895, 64
    %v1898 = vpop.permute.xlu0 %1897
    %v1900 = vmul.f32 %v1894, %v1898
    %1902 = vrot.lane.b32.xlu0 %v1900, 64
    %v1903 = vpop.permute.xlu0 %1902
    %v1905 = vadd.f32 %v1815, %v1903
    %v1906 = vtanh.pop %v1905
    %v1907 = vsub.f32 1.0, %v1894
    %1909 = vrot.lane.b32.xlu0 %v1906, 96
    %v1910 = vpop.permute.xlu0 %1909
    %v1912 = vmul.f32 %v1907, %v1910
    %v1913 = vmul.f32 %v1894, %v919
    %v1914 = vadd.f32 %v1912, %v1913
    %v1915 = vpack.c.bf16 %v1914, %v1914
    %1917 = vrot.lane.b32.xlu0 %v1915, 96
    %v1918 = vpop.permute.xlu0 %1917
    %v1920 = vsel %vm239, %v1918, 0
    %1922 = vmatprep.subr.bf16.mxu0 0
    %1923 = vmatpush1.bf16.msra.mxu0 %v316
    %1924 = vmatprep.subr.bf16.mxu0 0
    %1925 = vmatpush1.bf16.msra.mxu0 %v317
    %1926 = vmatprep.subr.bf16.mxu0 0
    %1927 = vmatpush1.bf16.msra.mxu0 0
    %1928 = vmatprep.subr.bf16.mxu0 0
    %1929 = vmatpush1.bf16.msra.mxu0 0
    %1930 = vmatprep.subr.bf16.mxu0 0
    %1931 = vmatpush1.bf16.msra.mxu0 0
    %1932 = vmatprep.subr.bf16.mxu0 0
    %1933 = vmatpush1.bf16.msra.mxu0 0
    %1934 = vmatprep.subr.bf16.mxu0 0
    %1935 = vmatpush1.bf16.msra.mxu0 0
    %1936 = vmatprep.subr.bf16.mxu0 0
    %1937 = vmatpush1.bf16.msra.mxu0 0
    %1938 = vmatprep.subr.bf16.mxu0 0
    %1939 = vmatpush1.bf16.msra.mxu0 0
    %1940 = vmatprep.subr.bf16.mxu0 0
    %1941 = vmatpush1.bf16.msra.mxu0 0
    %1942 = vmatprep.subr.bf16.mxu0 0
    %1943 = vmatpush1.bf16.msra.mxu0 0
    %1944 = vmatprep.subr.bf16.mxu0 0
    %1945 = vmatpush1.bf16.msra.mxu0 0
    %1946 = vmatprep.subr.bf16.mxu0 0
    %1947 = vmatpush1.bf16.msra.mxu0 0
    %1948 = vmatprep.subr.bf16.mxu0 0
    %1949 = vmatpush1.bf16.msra.mxu0 0
    %1950 = vmatprep.subr.bf16.mxu0 0
    %1951 = vmatpush1.bf16.msra.mxu0 0
    %1952 = vmatprep.subr.bf16.mxu0 0
    %1953 = vmatpush1.bf16.msra.mxu0 0
    %1954 = vmatprep.mubr.bf16.mxu0 0
    %1955 = vmatmul.mubr.bf16.gmra.mrb[0].mxu0 %v1920
    %v1956 = vpop.f32.mrb[0].mxu0
    %v1957 = vadd.f32 0.0, %v1956
    %v1958 = vpop.f32.mrb[0].mxu0
    %v1959 = vpop.f32.mrb[0].mxu0
    %v1960 = vpop.f32.mrb[0].mxu0
    %1961 = vdwg.mxu0
    %v1962 = vadd.f32 %v1833, %v1957
    %v1963 = vxor.u32 %v1962, 2147483648
    %v1964 = vmul.f32 %v1963, 1.442695
    %v1965 = vpow.pop %v1964
    %v1966 = vadd.f32 %v1965, 1.0
    %v1967 = vrcp.pop %v1966
    %v1968 = vmul.f32 1.0, %v1967
    %v1969 = vadd.f32 %v1957, %v376
    %1971 = vrot.lane.b32.xlu0 %v1969, 64
    %v1972 = vpop.permute.xlu0 %1971
    %v1974 = vmul.f32 %v1968, %v1972
    %1976 = vrot.lane.b32.xlu0 %v1974, 64
    %v1977 = vpop.permute.xlu0 %1976
    %v1979 = vadd.f32 %v1833, %v1977
    %v1980 = vtanh.pop %v1979
    %v1981 = vsub.f32 1.0, %v1968
    %1983 = vrot.lane.b32.xlu0 %v1980, 96
    %v1984 = vpop.permute.xlu0 %1983
    %v1986 = vmul.f32 %v1981, %v1984
    %v1987 = vmul.f32 %v1968, %v1914
    %v1988 = vadd.f32 %v1986, %v1987
    %v1989 = vpack.c.bf16 %v1988, %v1988
    %1991 = vrot.lane.b32.xlu0 %v1989, 96
    %v1992 = vpop.permute.xlu0 %1991
    %v1994 = vsel %vm239, %v1992, 0
    %1996 = vmatprep.subr.bf16.mxu0 0
    %1997 = vmatpush1.bf16.msra.mxu0 %v316
    %1998 = vmatprep.subr.bf16.mxu0 0
    %1999 = vmatpush1.bf16.msra.mxu0 %v317
    %2000 = vmatprep.subr.bf16.mxu0 0
    %2001 = vmatpush1.bf16.msra.mxu0 0
    %2002 = vmatprep.subr.bf16.mxu0 0
    %2003 = vmatpush1.bf16.msra.mxu0 0
    %2004 = vmatprep.subr.bf16.mxu0 0
    %2005 = vmatpush1.bf16.msra.mxu0 0
    %2006 = vmatprep.subr.bf16.mxu0 0
    %2007 = vmatpush1.bf16.msra.mxu0 0
    %2008 = vmatprep.subr.bf16.mxu0 0
    %2009 = vmatpush1.bf16.msra.mxu0 0
    %2010 = vmatprep.subr.bf16.mxu0 0
    %2011 = vmatpush1.bf16.msra.mxu0 0
    %2012 = vmatprep.subr.bf16.mxu0 0
    %2013 = vmatpush1.bf16.msra.mxu0 0
    %2014 = vmatprep.subr.bf16.mxu0 0
    %2015 = vmatpush1.bf16.msra.mxu0 0
    %2016 = vmatprep.subr.bf16.mxu0 0
    %2017 = vmatpush1.bf16.msra.mxu0 0
    %2018 = vmatprep.subr.bf16.mxu0 0
    %2019 = vmatpush1.bf16.msra.mxu0 0
    %2020 = vmatprep.subr.bf16.mxu0 0
    %2021 = vmatpush1.bf16.msra.mxu0 0
    %2022 = vmatprep.subr.bf16.mxu0 0
    %2023 = vmatpush1.bf16.msra.mxu0 0
    %2024 = vmatprep.subr.bf16.mxu0 0
    %2025 = vmatpush1.bf16.msra.mxu0 0
    %2026 = vmatprep.subr.bf16.mxu0 0
    %2027 = vmatpush1.bf16.msra.mxu0 0
    %2028 = vmatprep.mubr.bf16.mxu0 0
    %2029 = vmatmul.mubr.bf16.gmra.mrb[0].mxu0 %v1994
    %v2030 = vpop.f32.mrb[0].mxu0
    %v2031 = vadd.f32 0.0, %v2030
    %v2032 = vpop.f32.mrb[0].mxu0
    %v2033 = vpop.f32.mrb[0].mxu0
    %v2034 = vpop.f32.mrb[0].mxu0
    %2035 = vdwg.mxu0
    %v2036 = vadd.f32 %v1818, %v2031
    %v2037 = vxor.u32 %v2036, 2147483648
    %v2038 = vmul.f32 %v2037, 1.442695
    %v2039 = vpow.pop %v2038
    %v2040 = vadd.f32 %v2039, 1.0
    %v2041 = vrcp.pop %v2040
    %v2042 = vmul.f32 1.0, %v2041
    %v2043 = vadd.f32 %v2031, %v376
    %2045 = vrot.lane.b32.xlu0 %v2043, 64
    %v2046 = vpop.permute.xlu0 %2045
    %v2048 = vmul.f32 %v2042, %v2046
    %2050 = vrot.lane.b32.xlu0 %v2048, 64
    %v2051 = vpop.permute.xlu0 %2050
    %v2053 = vadd.f32 %v1818, %v2051
    %v2054 = vtanh.pop %v2053
    %v2055 = vsub.f32 1.0, %v2042
    %2057 = vrot.lane.b32.xlu0 %v2054, 96
    %v2058 = vpop.permute.xlu0 %2057
    %v2060 = vmul.f32 %v2055, %v2058
    %v2061 = vmul.f32 %v2042, %v1988
    %v2062 = vadd.f32 %v2060, %v2061
    %v2063 = vpack.c.bf16 %v2062, %v2062
    %2065 = vrot.lane.b32.xlu0 %v2063, 96
    %v2066 = vpop.permute.xlu0 %2065
    %v2068 = vsel %vm239, %v2066, 0
    %2070 = vmatprep.subr.bf16.mxu0 0
    %2071 = vmatpush1.bf16.msra.mxu0 %v316
    %2072 = vmatprep.subr.bf16.mxu0 0
    %2073 = vmatpush1.bf16.msra.mxu0 %v317
    %2074 = vmatprep.subr.bf16.mxu0 0
    %2075 = vmatpush1.bf16.msra.mxu0 0
    %2076 = vmatprep.subr.bf16.mxu0 0
    %2077 = vmatpush1.bf16.msra.mxu0 0
    %2078 = vmatprep.subr.bf16.mxu0 0
    %2079 = vmatpush1.bf16.msra.mxu0 0
    %2080 = vmatprep.subr.bf16.mxu0 0
    %2081 = vmatpush1.bf16.msra.mxu0 0
    %2082 = vmatprep.subr.bf16.mxu0 0
    %2083 = vmatpush1.bf16.msra.mxu0 0
    %2084 = vmatprep.subr.bf16.mxu0 0
    %2085 = vmatpush1.bf16.msra.mxu0 0
    %2086 = vmatprep.subr.bf16.mxu0 0
    %2087 = vmatpush1.bf16.msra.mxu0 0
    %2088 = vmatprep.subr.bf16.mxu0 0
    %2089 = vmatpush1.bf16.msra.mxu0 0
    %2090 = vmatprep.subr.bf16.mxu0 0
    %2091 = vmatpush1.bf16.msra.mxu0 0
    %2092 = vmatprep.subr.bf16.mxu0 0
    %2093 = vmatpush1.bf16.msra.mxu0 0
    %2094 = vmatprep.subr.bf16.mxu0 0
    %2095 = vmatpush1.bf16.msra.mxu0 0
    %2096 = vmatprep.subr.bf16.mxu0 0
    %2097 = vmatpush1.bf16.msra.mxu0 0
    %2098 = vmatprep.subr.bf16.mxu0 0
    %2099 = vmatpush1.bf16.msra.mxu0 0
    %2100 = vmatprep.subr.bf16.mxu0 0
    %2101 = vmatpush1.bf16.msra.mxu0 0
    %2102 = vmatprep.mubr.bf16.mxu0 0
    %2103 = vmatmul.mubr.bf16.gmra.mrb[0].mxu0 %v2068
    %v2104 = vpop.f32.mrb[0].mxu0
    %v2105 = vadd.f32 0.0, %v2104
    %v2106 = vpop.f32.mrb[0].mxu0
    %v2107 = vpop.f32.mrb[0].mxu0
    %v2108 = vpop.f32.mrb[0].mxu0
    %2109 = vdwg.mxu0
    %v2110 = vadd.f32 %v1834, %v2105
    %v2111 = vxor.u32 %v2110, 2147483648
    %v2112 = vmul.f32 %v2111, 1.442695
    %v2113 = vpow.pop %v2112
    %v2114 = vadd.f32 %v2113, 1.0
    %v2115 = vrcp.pop %v2114
    %v2116 = vmul.f32 1.0, %v2115
    %v2117 = vadd.f32 %v2105, %v376
    %2119 = vrot.lane.b32.xlu0 %v2117, 64
    %v2120 = vpop.permute.xlu0 %2119
    %v2122 = vmul.f32 %v2116, %v2120
    %2124 = vrot.lane.b32.xlu0 %v2122, 64
    %v2125 = vpop.permute.xlu0 %2124
    %v2127 = vadd.f32 %v1834, %v2125
    %v2128 = vtanh.pop %v2127
    %v2129 = vsub.f32 1.0, %v2116
    %2131 = vrot.lane.b32.xlu0 %v2128, 96
    %v2132 = vpop.permute.xlu0 %2131
    %v2134 = vmul.f32 %v2129, %v2132
    %v2135 = vmul.f32 %v2116, %v2062
    %v2136 = vadd.f32 %v2134, %v2135
    %v2137 = vpack.c.bf16 %v2136, %v2136
    %2139 = vrot.lane.b32.xlu0 %v2137, 96
    %v2140 = vpop.permute.xlu0 %2139
    %v2142 = vsel %vm239, %v2140, 0
    %2144 = vmatprep.subr.bf16.mxu0 0
    %2145 = vmatpush1.bf16.msra.mxu0 %v316
    %2146 = vmatprep.subr.bf16.mxu0 0
    %2147 = vmatpush1.bf16.msra.mxu0 %v317
    %2148 = vmatprep.subr.bf16.mxu0 0
    %2149 = vmatpush1.bf16.msra.mxu0 0
    %2150 = vmatprep.subr.bf16.mxu0 0
    %2151 = vmatpush1.bf16.msra.mxu0 0
    %2152 = vmatprep.subr.bf16.mxu0 0
    %2153 = vmatpush1.bf16.msra.mxu0 0
    %2154 = vmatprep.subr.bf16.mxu0 0
    %2155 = vmatpush1.bf16.msra.mxu0 0
    %2156 = vmatprep.subr.bf16.mxu0 0
    %2157 = vmatpush1.bf16.msra.mxu0 0
    %2158 = vmatprep.subr.bf16.mxu0 0
    %2159 = vmatpush1.bf16.msra.mxu0 0
    %2160 = vmatprep.subr.bf16.mxu0 0
    %2161 = vmatpush1.bf16.msra.mxu0 0
    %2162 = vmatprep.subr.bf16.mxu0 0
    %2163 = vmatpush1.bf16.msra.mxu0 0
    %2164 = vmatprep.subr.bf16.mxu0 0
    %2165 = vmatpush1.bf16.msra.mxu0 0
    %2166 = vmatprep.subr.bf16.mxu0 0
    %2167 = vmatpush1.bf16.msra.mxu0 0
    %2168 = vmatprep.subr.bf16.mxu0 0
    %2169 = vmatpush1.bf16.msra.mxu0 0
    %2170 = vmatprep.subr.bf16.mxu0 0
    %2171 = vmatpush1.bf16.msra.mxu0 0
    %2172 = vmatprep.subr.bf16.mxu0 0
    %2173 = vmatpush1.bf16.msra.mxu0 0
    %2174 = vmatprep.subr.bf16.mxu0 0
    %2175 = vmatpush1.bf16.msra.mxu0 0
    %2176 = vmatprep.mubr.bf16.mxu0 0
    %2177 = vmatmul.mubr.bf16.gmra.mrb[0].mxu0 %v2142
    %v2178 = vpop.f32.mrb[0].mxu0
    %v2179 = vadd.f32 0.0, %v2178
    %v2180 = vpop.f32.mrb[0].mxu0
    %v2181 = vpop.f32.mrb[0].mxu0
    %v2182 = vpop.f32.mrb[0].mxu0
    %2183 = vdwg.mxu0
    %v2184 = vadd.f32 %v1823, %v2179
    %v2185 = vxor.u32 %v2184, 2147483648
    %v2186 = vmul.f32 %v2185, 1.442695
    %v2187 = vpow.pop %v2186
    %v2188 = vadd.f32 %v2187, 1.0
    %v2189 = vrcp.pop %v2188
    %v2190 = vmul.f32 1.0, %v2189
    %v2191 = vadd.f32 %v2179, %v376
    %2193 = vrot.lane.b32.xlu0 %v2191, 64
    %v2194 = vpop.permute.xlu0 %2193
    %v2196 = vmul.f32 %v2190, %v2194
    %2198 = vrot.lane.b32.xlu0 %v2196, 64
    %v2199 = vpop.permute.xlu0 %2198
    %v2201 = vadd.f32 %v1823, %v2199
    %v2202 = vtanh.pop %v2201
    %v2203 = vsub.f32 1.0, %v2190
    %2205 = vrot.lane.b32.xlu0 %v2202, 96
    %v2206 = vpop.permute.xlu0 %2205
    %v2208 = vmul.f32 %v2203, %v2206
    %v2209 = vmul.f32 %v2190, %v2136
    %v2210 = vadd.f32 %v2208, %v2209
    %v2211 = vpack.c.bf16 %v2210, %v2210
    %2213 = vrot.lane.b32.xlu0 %v2211, 96
    %v2214 = vpop.permute.xlu0 %2213
    %v2216 = vsel %vm239, %v2214, 0
    %2218 = vmatprep.subr.bf16.mxu0 0
    %2219 = vmatpush1.bf16.msra.mxu0 %v316
    %2220 = vmatprep.subr.bf16.mxu0 0
    %2221 = vmatpush1.bf16.msra.mxu0 %v317
    %2222 = vmatprep.subr.bf16.mxu0 0
    %2223 = vmatpush1.bf16.msra.mxu0 0
    %2224 = vmatprep.subr.bf16.mxu0 0
    %2225 = vmatpush1.bf16.msra.mxu0 0
    %2226 = vmatprep.subr.bf16.mxu0 0
    %2227 = vmatpush1.bf16.msra.mxu0 0
    %2228 = vmatprep.subr.bf16.mxu0 0
    %2229 = vmatpush1.bf16.msra.mxu0 0
    %2230 = vmatprep.subr.bf16.mxu0 0
    %2231 = vmatpush1.bf16.msra.mxu0 0
    %2232 = vmatprep.subr.bf16.mxu0 0
    %2233 = vmatpush1.bf16.msra.mxu0 0
    %2234 = vmatprep.subr.bf16.mxu0 0
    %2235 = vmatpush1.bf16.msra.mxu0 0
    %2236 = vmatprep.subr.bf16.mxu0 0
    %2237 = vmatpush1.bf16.msra.mxu0 0
    %2238 = vmatprep.subr.bf16.mxu0 0
    %2239 = vmatpush1.bf16.msra.mxu0 0
    %2240 = vmatprep.subr.bf16.mxu0 0
    %2241 = vmatpush1.bf16.msra.mxu0 0
    %2242 = vmatprep.subr.bf16.mxu0 0
    %2243 = vmatpush1.bf16.msra.mxu0 0
    %2244 = vmatprep.subr.bf16.mxu0 0
    %2245 = vmatpush1.bf16.msra.mxu0 0
    %2246 = vmatprep.subr.bf16.mxu0 0
    %2247 = vmatpush1.bf16.msra.mxu0 0
    %2248 = vmatprep.subr.bf16.mxu0 0
    %2249 = vmatpush1.bf16.msra.mxu0 0
    %2250 = vmatprep.mubr.bf16.mxu0 0
    %2251 = vmatmul.mubr.bf16.gmra.mrb[0].mxu0 %v2216
    %v2252 = vpop.f32.mrb[0].mxu0
    %v2253 = vadd.f32 0.0, %v2252
    %v2254 = vpop.f32.mrb[0].mxu0
    %v2255 = vpop.f32.mrb[0].mxu0
    %v2256 = vpop.f32.mrb[0].mxu0
    %2257 = vdwg.mxu0
    %v2258 = vadd.f32 %v1835, %v2253
    %v2259 = vxor.u32 %v2258, 2147483648
    %v2260 = vmul.f32 %v2259, 1.442695
    %v2261 = vpow.pop %v2260
    %v2262 = vadd.f32 %v2261, 1.0
    %v2263 = vrcp.pop %v2262
    %v2264 = vmul.f32 1.0, %v2263
    %v2265 = vadd.f32 %v2253, %v376
    %2267 = vrot.lane.b32.xlu0 %v2265, 64
    %v2268 = vpop.permute.xlu0 %2267
    %v2270 = vmul.f32 %v2264, %v2268
    %2272 = vrot.lane.b32.xlu0 %v2270, 64
    %v2273 = vpop.permute.xlu0 %2272
    %v2275 = vadd.f32 %v1835, %v2273
    %v2276 = vtanh.pop %v2275
    %v2277 = vsub.f32 1.0, %v2264
    %2279 = vrot.lane.b32.xlu0 %v2276, 96
    %v2280 = vpop.permute.xlu0 %2279
    %v2282 = vmul.f32 %v2277, %v2280
    %v2283 = vmul.f32 %v2264, %v2210
    %v2284 = vadd.f32 %v2282, %v2283
    %v2285 = vpack.c.bf16 %v2284, %v2284
    %2287 = vrot.lane.b32.xlu0 %v2285, 96
    %v2288 = vpop.permute.xlu0 %2287
    %v2290 = vsel %vm239, %v2288, 0
    %2292 = vmatprep.subr.bf16.mxu0 0
    %2293 = vmatpush1.bf16.msra.mxu0 %v316
    %2294 = vmatprep.subr.bf16.mxu0 0
    %2295 = vmatpush1.bf16.msra.mxu0 %v317
    %2296 = vmatprep.subr.bf16.mxu0 0
    %2297 = vmatpush1.bf16.msra.mxu0 0
    %2298 = vmatprep.subr.bf16.mxu0 0
    %2299 = vmatpush1.bf16.msra.mxu0 0
    %2300 = vmatprep.subr.bf16.mxu0 0
    %2301 = vmatpush1.bf16.msra.mxu0 0
    %2302 = vmatprep.subr.bf16.mxu0 0
    %2303 = vmatpush1.bf16.msra.mxu0 0
    %2304 = vmatprep.subr.bf16.mxu0 0
    %2305 = vmatpush1.bf16.msra.mxu0 0
    %2306 = vmatprep.subr.bf16.mxu0 0
    %2307 = vmatpush1.bf16.msra.mxu0 0
    %2308 = vmatprep.subr.bf16.mxu0 0
    %2309 = vmatpush1.bf16.msra.mxu0 0
    %2310 = vmatprep.subr.bf16.mxu0 0
    %2311 = vmatpush1.bf16.msra.mxu0 0
    %2312 = vmatprep.subr.bf16.mxu0 0
    %2313 = vmatpush1.bf16.msra.mxu0 0
    %2314 = vmatprep.subr.bf16.mxu0 0
    %2315 = vmatpush1.bf16.msra.mxu0 0
    %2316 = vmatprep.subr.bf16.mxu0 0
    %2317 = vmatpush1.bf16.msra.mxu0 0
    %2318 = vmatprep.subr.bf16.mxu0 0
    %2319 = vmatpush1.bf16.msra.mxu0 0
    %2320 = vmatprep.subr.bf16.mxu0 0
    %2321 = vmatpush1.bf16.msra.mxu0 0
    %2322 = vmatprep.subr.bf16.mxu0 0
    %2323 = vmatpush1.bf16.msra.mxu0 0
    %2324 = vmatprep.mubr.bf16.mxu0 0
    %2325 = vmatmul.mubr.bf16.gmra.mrb[0].mxu0 %v2290
    %v2326 = vpop.f32.mrb[0].mxu0
    %v2327 = vadd.f32 0.0, %v2326
    %v2328 = vpop.f32.mrb[0].mxu0
    %v2329 = vpop.f32.mrb[0].mxu0
    %v2330 = vpop.f32.mrb[0].mxu0
    %2331 = vdwg.mxu0
    %v2332 = vadd.f32 %v1826, %v2327
    %v2333 = vxor.u32 %v2332, 2147483648
    %v2334 = vmul.f32 %v2333, 1.442695
    %v2335 = vpow.pop %v2334
    %v2336 = vadd.f32 %v2335, 1.0
    %v2337 = vrcp.pop %v2336
    %v2338 = vmul.f32 1.0, %v2337
    %v2339 = vadd.f32 %v2327, %v376
    %2341 = vrot.lane.b32.xlu0 %v2339, 64
    %v2342 = vpop.permute.xlu0 %2341
    %v2344 = vmul.f32 %v2338, %v2342
    %2346 = vrot.lane.b32.xlu0 %v2344, 64
    %v2347 = vpop.permute.xlu0 %2346
    %v2349 = vadd.f32 %v1826, %v2347
    %v2350 = vtanh.pop %v2349
    %v2351 = vsub.f32 1.0, %v2338
    %2353 = vrot.lane.b32.xlu0 %v2350, 96
    %v2354 = vpop.permute.xlu0 %2353
    %v2356 = vmul.f32 %v2351, %v2354
    %v2357 = vmul.f32 %v2338, %v2284
    %v2358 = vadd.f32 %v2356, %v2357
    %v2359 = vpack.c.bf16 %v2358, %v2358
    %2361 = vrot.lane.b32.xlu0 %v2359, 96
    %v2362 = vpop.permute.xlu0 %2361
    %v2364 = vsel %vm239, %v2362, 0
    %2366 = vmatprep.subr.bf16.mxu0 0
    %2367 = vmatpush1.bf16.msra.mxu0 %v316
    %2368 = vmatprep.subr.bf16.mxu0 0
    %2369 = vmatpush1.bf16.msra.mxu0 %v317
    %2370 = vmatprep.subr.bf16.mxu0 0
    %2371 = vmatpush1.bf16.msra.mxu0 0
    %2372 = vmatprep.subr.bf16.mxu0 0
    %2373 = vmatpush1.bf16.msra.mxu0 0
    %2374 = vmatprep.subr.bf16.mxu0 0
    %2375 = vmatpush1.bf16.msra.mxu0 0
    %2376 = vmatprep.subr.bf16.mxu0 0
    %2377 = vmatpush1.bf16.msra.mxu0 0
    %2378 = vmatprep.subr.bf16.mxu0 0
    %2379 = vmatpush1.bf16.msra.mxu0 0
    %2380 = vmatprep.subr.bf16.mxu0 0
    %2381 = vmatpush1.bf16.msra.mxu0 0
    %2382 = vmatprep.subr.bf16.mxu0 0
    %2383 = vmatpush1.bf16.msra.mxu0 0
    %2384 = vmatprep.subr.bf16.mxu0 0
    %2385 = vmatpush1.bf16.msra.mxu0 0
    %2386 = vmatprep.subr.bf16.mxu0 0
    %2387 = vmatpush1.bf16.msra.mxu0 0
    %2388 = vmatprep.subr.bf16.mxu0 0
    %2389 = vmatpush1.bf16.msra.mxu0 0
    %2390 = vmatprep.subr.bf16.mxu0 0
    %2391 = vmatpush1.bf16.msra.mxu0 0
    %2392 = vmatprep.subr.bf16.mxu0 0
    %2393 = vmatpush1.bf16.msra.mxu0 0
    %2394 = vmatprep.subr.bf16.mxu0 0
    %2395 = vmatpush1.bf16.msra.mxu0 0
    %2396 = vmatprep.subr.bf16.mxu0 0
    %2397 = vmatpush1.bf16.msra.mxu0 0
    %2398 = vmatprep.mubr.bf16.mxu0 0
    %2399 = vmatmul.mubr.bf16.gmra.mrb[0].mxu0 %v2364
    %v2400 = vpop.f32.mrb[0].mxu0
    %v2401 = vadd.f32 0.0, %v2400
    %v2402 = vpop.f32.mrb[0].mxu0
    %v2403 = vpop.f32.mrb[0].mxu0
    %v2404 = vpop.f32.mrb[0].mxu0
    %2405 = vdwg.mxu0
    %v2406 = vadd.f32 %v1836, %v2401
    %v2407 = vxor.u32 %v2406, 2147483648
    %v2408 = vmul.f32 %v2407, 1.442695
    %v2409 = vpow.pop %v2408
    %v2410 = vadd.f32 %v2409, 1.0
    %v2411 = vrcp.pop %v2410
    %v2412 = vmul.f32 1.0, %v2411
    %v2413 = vadd.f32 %v2401, %v376
    %2415 = vrot.lane.b32.xlu0 %v2413, 64
    %v2416 = vpop.permute.xlu0 %2415
    %v2418 = vmul.f32 %v2412, %v2416
    %2420 = vrot.lane.b32.xlu0 %v2418, 64
    %v2421 = vpop.permute.xlu0 %2420
    %v2423 = vadd.f32 %v1836, %v2421
    %v2424 = vtanh.pop %v2423
    %v2425 = vsub.f32 1.0, %v2412
    %2427 = vrot.lane.b32.xlu0 %v2424, 96
    %v2428 = vpop.permute.xlu0 %2427
    %v2430 = vmul.f32 %v2425, %v2428
    %v2431 = vmul.f32 %v2412, %v2358
    %v2432 = vadd.f32 %v2430, %v2431
    %v2441 = vcombine.low %v1914, %v1988
    %v2442 = vcombine.low %v2062, %v2136
    %v2443 = vcombine.low %v2210, %v2284
    %v2444 = vcombine.low %v2358, %v2432
    %v2449 = vpack.c.bf16 %v2442, %v2441
    %v2450 = vpack.c.bf16 %v2444, %v2443
    %2453 = vrot.lane.b32.xlu0 %v2449, 96
    %v2454 = vpop.permute.xlu0 %2453
    %2455 = vrot.lane.b32.xlu0 %v2450, 96
    %v2456 = vpop.permute.xlu0 %2455
    %v2458 = vsel %vm239, %v2454, 0
    %v2461 = vsel %vm239, %v2456, 0
    %2463 = vmatprep.subr.bf16.mxu0 0
    %2464 = vmatpush1.bf16.msra.mxu0 %v958
    %2465 = vmatprep.subr.bf16.mxu0 0
    %2466 = vmatpush1.bf16.msra.mxu0 %v959
    %2467 = vmatprep.subr.bf16.mxu0 0
    %2468 = vmatpush1.bf16.msra.mxu0 0
    %2469 = vmatprep.subr.bf16.mxu0 0
    %2470 = vmatpush1.bf16.msra.mxu0 0
    %2471 = vmatprep.subr.bf16.mxu0 0
    %2472 = vmatpush1.bf16.msra.mxu0 0
    %2473 = vmatprep.subr.bf16.mxu0 0
    %2474 = vmatpush1.bf16.msra.mxu0 0
    %2475 = vmatprep.subr.bf16.mxu0 0
    %2476 = vmatpush1.bf16.msra.mxu0 0
    %2477 = vmatprep.subr.bf16.mxu0 0
    %2478 = vmatpush1.bf16.msra.mxu0 0
    %2479 = vmatprep.subr.bf16.mxu0 0
    %2480 = vmatpush1.bf16.msra.mxu0 0
    %2481 = vmatprep.subr.bf16.mxu0 0
    %2482 = vmatpush1.bf16.msra.mxu0 0
    %2483 = vmatprep.subr.bf16.mxu0 0
    %2484 = vmatpush1.bf16.msra.mxu0 0
    %2485 = vmatprep.subr.bf16.mxu0 0
    %2486 = vmatpush1.bf16.msra.mxu0 0
    %2487 = vmatprep.subr.bf16.mxu0 0
    %2488 = vmatpush1.bf16.msra.mxu0 0
    %2489 = vmatprep.subr.bf16.mxu0 0
    %2490 = vmatpush1.bf16.msra.mxu0 0
    %2491 = vmatprep.subr.bf16.mxu0 0
    %2492 = vmatpush1.bf16.msra.mxu0 0
    %2493 = vmatprep.subr.bf16.mxu0 0
    %2494 = vmatpush1.bf16.msra.mxu0 0
    %2495 = vmatprep.mubr.bf16.mxu0 0
    %2496 = vmatmul.mubr.bf16.gmra.mrb[0].mxu0 %v2458
    %v2497 = vpop.f32.mrb[0].mxu0
    %v2498 = vadd.f32 %v942, %v2497
    %v2499 = vpop.f32.mrb[0].mxu0
    %v2500 = vpop.f32.mrb[0].mxu0
    %v2501 = vadd.f32 %v942, %v2500
    %v2502 = vpop.f32.mrb[0].mxu0
    %2503 = vmatprep.mubr.bf16.mxu0 0
    %2504 = vmatmul.mubr.bf16.gmra.mrb[0].mxu0 %v2461
    %v2505 = vpop.f32.mrb[0].mxu0
    %v2506 = vadd.f32 %v942, %v2505
    %v2507 = vpop.f32.mrb[0].mxu0
    %v2508 = vpop.f32.mrb[0].mxu0
    %v2509 = vadd.f32 %v942, %v2508
    %v2510 = vpop.f32.mrb[0].mxu0
    %2511 = vdwg.mxu0
    %v2516 = vcombine.high %v2498, %v2498
    %v2517 = vcombine.high %v2501, %v2501
    %v2518 = vcombine.high %v2506, %v2506
    %v2519 = vcombine.high %v2509, %v2509
    %v2524 = vpack.c.bf16 %v1641, %v1641
    %2526 = vrot.lane.b32.xlu0 %v2524, 96
    %v2527 = vpop.permute.xlu0 %2526
    %v2529 = vsel %vm239, %v2527, 0
    %2531 = vmatprep.subr.bf16.mxu0 0
    %2532 = vmatpush1.bf16.msra.mxu0 %v1038
    %2533 = vmatprep.subr.bf16.mxu0 0
    %2534 = vmatpush1.bf16.msra.mxu0 %v1039
    %2535 = vmatprep.subr.bf16.mxu0 0
    %2536 = vmatpush1.bf16.msra.mxu0 0
    %2537 = vmatprep.subr.bf16.mxu0 0
    %2538 = vmatpush1.bf16.msra.mxu0 0
    %2539 = vmatprep.subr.bf16.mxu0 0
    %2540 = vmatpush1.bf16.msra.mxu0 0
    %2541 = vmatprep.subr.bf16.mxu0 0
    %2542 = vmatpush1.bf16.msra.mxu0 0
    %2543 = vmatprep.subr.bf16.mxu0 0
    %2544 = vmatpush1.bf16.msra.mxu0 0
    %2545 = vmatprep.subr.bf16.mxu0 0
    %2546 = vmatpush1.bf16.msra.mxu0 0
    %2547 = vmatprep.subr.bf16.mxu0 0
    %2548 = vmatpush1.bf16.msra.mxu0 0
    %2549 = vmatprep.subr.bf16.mxu0 0
    %2550 = vmatpush1.bf16.msra.mxu0 0
    %2551 = vmatprep.subr.bf16.mxu0 0
    %2552 = vmatpush1.bf16.msra.mxu0 0
    %2553 = vmatprep.subr.bf16.mxu0 0
    %2554 = vmatpush1.bf16.msra.mxu0 0
    %2555 = vmatprep.subr.bf16.mxu0 0
    %2556 = vmatpush1.bf16.msra.mxu0 0
    %2557 = vmatprep.subr.bf16.mxu0 0
    %2558 = vmatpush1.bf16.msra.mxu0 0
    %2559 = vmatprep.subr.bf16.mxu0 0
    %2560 = vmatpush1.bf16.msra.mxu0 0
    %2561 = vmatprep.subr.bf16.mxu0 0
    %2562 = vmatpush1.bf16.msra.mxu0 0
    %2563 = vmatprep.mubr.bf16.mxu0 0
    %2564 = vmatmul.mubr.bf16.gmra.mrb[0].mxu0 %v2529
    %v2565 = vpop.f32.mrb[0].mxu0
    %v2566 = vadd.f32 0.0, %v2565
    %v2567 = vpop.f32.mrb[0].mxu0
    %v2568 = vpop.f32.mrb[0].mxu0
    %v2569 = vpop.f32.mrb[0].mxu0
    %2570 = vdwg.mxu0
    %v2571 = vadd.f32 %v2498, %v2566
    %v2572 = vxor.u32 %v2571, 2147483648
    %v2573 = vmul.f32 %v2572, 1.442695
    %v2574 = vpow.pop %v2573
    %v2575 = vadd.f32 %v2574, 1.0
    %v2576 = vrcp.pop %v2575
    %v2577 = vmul.f32 1.0, %v2576
    %v2578 = vadd.f32 %v2566, %v1098
    %2580 = vrot.lane.b32.xlu0 %v2578, 64
    %v2581 = vpop.permute.xlu0 %2580
    %v2583 = vmul.f32 %v2577, %v2581
    %2585 = vrot.lane.b32.xlu0 %v2583, 64
    %v2586 = vpop.permute.xlu0 %2585
    %v2588 = vadd.f32 %v2498, %v2586
    %v2589 = vtanh.pop %v2588
    %v2590 = vsub.f32 1.0, %v2577
    %2592 = vrot.lane.b32.xlu0 %v2589, 96
    %v2593 = vpop.permute.xlu0 %2592
    %v2595 = vmul.f32 %v2590, %v2593
    %v2596 = vmul.f32 %v2577, %v1641
    %v2597 = vadd.f32 %v2595, %v2596
    %v2598 = vpack.c.bf16 %v2597, %v2597
    %2600 = vrot.lane.b32.xlu0 %v2598, 96
    %v2601 = vpop.permute.xlu0 %2600
    %v2603 = vsel %vm239, %v2601, 0
    %2605 = vmatprep.subr.bf16.mxu0 0
    %2606 = vmatpush1.bf16.msra.mxu0 %v1038
    %2607 = vmatprep.subr.bf16.mxu0 0
    %2608 = vmatpush1.bf16.msra.mxu0 %v1039
    %2609 = vmatprep.subr.bf16.mxu0 0
    %2610 = vmatpush1.bf16.msra.mxu0 0
    %2611 = vmatprep.subr.bf16.mxu0 0
    %2612 = vmatpush1.bf16.msra.mxu0 0
    %2613 = vmatprep.subr.bf16.mxu0 0
    %2614 = vmatpush1.bf16.msra.mxu0 0
    %2615 = vmatprep.subr.bf16.mxu0 0
    %2616 = vmatpush1.bf16.msra.mxu0 0
    %2617 = vmatprep.subr.bf16.mxu0 0
    %2618 = vmatpush1.bf16.msra.mxu0 0
    %2619 = vmatprep.subr.bf16.mxu0 0
    %2620 = vmatpush1.bf16.msra.mxu0 0
    %2621 = vmatprep.subr.bf16.mxu0 0
    %2622 = vmatpush1.bf16.msra.mxu0 0
    %2623 = vmatprep.subr.bf16.mxu0 0
    %2624 = vmatpush1.bf16.msra.mxu0 0
    %2625 = vmatprep.subr.bf16.mxu0 0
    %2626 = vmatpush1.bf16.msra.mxu0 0
    %2627 = vmatprep.subr.bf16.mxu0 0
    %2628 = vmatpush1.bf16.msra.mxu0 0
    %2629 = vmatprep.subr.bf16.mxu0 0
    %2630 = vmatpush1.bf16.msra.mxu0 0
    %2631 = vmatprep.subr.bf16.mxu0 0
    %2632 = vmatpush1.bf16.msra.mxu0 0
    %2633 = vmatprep.subr.bf16.mxu0 0
    %2634 = vmatpush1.bf16.msra.mxu0 0
    %2635 = vmatprep.subr.bf16.mxu0 0
    %2636 = vmatpush1.bf16.msra.mxu0 0
    %2637 = vmatprep.mubr.bf16.mxu0 0
    %2638 = vmatmul.mubr.bf16.gmra.mrb[0].mxu0 %v2603
    %v2639 = vpop.f32.mrb[0].mxu0
    %v2640 = vadd.f32 0.0, %v2639
    %v2641 = vpop.f32.mrb[0].mxu0
    %v2642 = vpop.f32.mrb[0].mxu0
    %v2643 = vpop.f32.mrb[0].mxu0
    %2644 = vdwg.mxu0
    %v2645 = vadd.f32 %v2516, %v2640
    %v2646 = vxor.u32 %v2645, 2147483648
    %v2647 = vmul.f32 %v2646, 1.442695
    %v2648 = vpow.pop %v2647
    %v2649 = vadd.f32 %v2648, 1.0
    %v2650 = vrcp.pop %v2649
    %v2651 = vmul.f32 1.0, %v2650
    %v2652 = vadd.f32 %v2640, %v1098
    %2654 = vrot.lane.b32.xlu0 %v2652, 64
    %v2655 = vpop.permute.xlu0 %2654
    %v2657 = vmul.f32 %v2651, %v2655
    %2659 = vrot.lane.b32.xlu0 %v2657, 64
    %v2660 = vpop.permute.xlu0 %2659
    %v2662 = vadd.f32 %v2516, %v2660
    %v2663 = vtanh.pop %v2662
    %v2664 = vsub.f32 1.0, %v2651
    %2666 = vrot.lane.b32.xlu0 %v2663, 96
    %v2667 = vpop.permute.xlu0 %2666
    %v2669 = vmul.f32 %v2664, %v2667
    %v2670 = vmul.f32 %v2651, %v2597
    %v2671 = vadd.f32 %v2669, %v2670
    %v2672 = vpack.c.bf16 %v2671, %v2671
    %2674 = vrot.lane.b32.xlu0 %v2672, 96
    %v2675 = vpop.permute.xlu0 %2674
    %v2677 = vsel %vm239, %v2675, 0
    %2679 = vmatprep.subr.bf16.mxu0 0
    %2680 = vmatpush1.bf16.msra.mxu0 %v1038
    %2681 = vmatprep.subr.bf16.mxu0 0
    %2682 = vmatpush1.bf16.msra.mxu0 %v1039
    %2683 = vmatprep.subr.bf16.mxu0 0
    %2684 = vmatpush1.bf16.msra.mxu0 0
    %2685 = vmatprep.subr.bf16.mxu0 0
    %2686 = vmatpush1.bf16.msra.mxu0 0
    %2687 = vmatprep.subr.bf16.mxu0 0
    %2688 = vmatpush1.bf16.msra.mxu0 0
    %2689 = vmatprep.subr.bf16.mxu0 0
    %2690 = vmatpush1.bf16.msra.mxu0 0
    %2691 = vmatprep.subr.bf16.mxu0 0
    %2692 = vmatpush1.bf16.msra.mxu0 0
    %2693 = vmatprep.subr.bf16.mxu0 0
    %2694 = vmatpush1.bf16.msra.mxu0 0
    %2695 = vmatprep.subr.bf16.mxu0 0
    %2696 = vmatpush1.bf16.msra.mxu0 0
    %2697 = vmatprep.subr.bf16.mxu0 0
    %2698 = vmatpush1.bf16.msra.mxu0 0
    %2699 = vmatprep.subr.bf16.mxu0 0
    %2700 = vmatpush1.bf16.msra.mxu0 0
    %2701 = vmatprep.subr.bf16.mxu0 0
    %2702 = vmatpush1.bf16.msra.mxu0 0
    %2703 = vmatprep.subr.bf16.mxu0 0
    %2704 = vmatpush1.bf16.msra.mxu0 0
    %2705 = vmatprep.subr.bf16.mxu0 0
    %2706 = vmatpush1.bf16.msra.mxu0 0
    %2707 = vmatprep.subr.bf16.mxu0 0
    %2708 = vmatpush1.bf16.msra.mxu0 0
    %2709 = vmatprep.subr.bf16.mxu0 0
    %2710 = vmatpush1.bf16.msra.mxu0 0
    %2711 = vmatprep.mubr.bf16.mxu0 0
    %2712 = vmatmul.mubr.bf16.gmra.mrb[0].mxu0 %v2677
    %v2713 = vpop.f32.mrb[0].mxu0
    %v2714 = vadd.f32 0.0, %v2713
    %v2715 = vpop.f32.mrb[0].mxu0
    %v2716 = vpop.f32.mrb[0].mxu0
    %v2717 = vpop.f32.mrb[0].mxu0
    %2718 = vdwg.mxu0
    %v2719 = vadd.f32 %v2501, %v2714
    %v2720 = vxor.u32 %v2719, 2147483648
    %v2721 = vmul.f32 %v2720, 1.442695
    %v2722 = vpow.pop %v2721
    %v2723 = vadd.f32 %v2722, 1.0
    %v2724 = vrcp.pop %v2723
    %v2725 = vmul.f32 1.0, %v2724
    %v2726 = vadd.f32 %v2714, %v1098
    %2728 = vrot.lane.b32.xlu0 %v2726, 64
    %v2729 = vpop.permute.xlu0 %2728
    %v2731 = vmul.f32 %v2725, %v2729
    %2733 = vrot.lane.b32.xlu0 %v2731, 64
    %v2734 = vpop.permute.xlu0 %2733
    %v2736 = vadd.f32 %v2501, %v2734
    %v2737 = vtanh.pop %v2736
    %v2738 = vsub.f32 1.0, %v2725
    %2740 = vrot.lane.b32.xlu0 %v2737, 96
    %v2741 = vpop.permute.xlu0 %2740
    %v2743 = vmul.f32 %v2738, %v2741
    %v2744 = vmul.f32 %v2725, %v2671
    %v2745 = vadd.f32 %v2743, %v2744
    %v2746 = vpack.c.bf16 %v2745, %v2745
    %2748 = vrot.lane.b32.xlu0 %v2746, 96
    %v2749 = vpop.permute.xlu0 %2748
    %v2751 = vsel %vm239, %v2749, 0
    %2753 = vmatprep.subr.bf16.mxu0 0
    %2754 = vmatpush1.bf16.msra.mxu0 %v1038
    %2755 = vmatprep.subr.bf16.mxu0 0
    %2756 = vmatpush1.bf16.msra.mxu0 %v1039
    %2757 = vmatprep.subr.bf16.mxu0 0
    %2758 = vmatpush1.bf16.msra.mxu0 0
    %2759 = vmatprep.subr.bf16.mxu0 0
    %2760 = vmatpush1.bf16.msra.mxu0 0
    %2761 = vmatprep.subr.bf16.mxu0 0
    %2762 = vmatpush1.bf16.msra.mxu0 0
    %2763 = vmatprep.subr.bf16.mxu0 0
    %2764 = vmatpush1.bf16.msra.mxu0 0
    %2765 = vmatprep.subr.bf16.mxu0 0
    %2766 = vmatpush1.bf16.msra.mxu0 0
    %2767 = vmatprep.subr.bf16.mxu0 0
    %2768 = vmatpush1.bf16.msra.mxu0 0
    %2769 = vmatprep.subr.bf16.mxu0 0
    %2770 = vmatpush1.bf16.msra.mxu0 0
    %2771 = vmatprep.subr.bf16.mxu0 0
    %2772 = vmatpush1.bf16.msra.mxu0 0
    %2773 = vmatprep.subr.bf16.mxu0 0
    %2774 = vmatpush1.bf16.msra.mxu0 0
    %2775 = vmatprep.subr.bf16.mxu0 0
    %2776 = vmatpush1.bf16.msra.mxu0 0
    %2777 = vmatprep.subr.bf16.mxu0 0
    %2778 = vmatpush1.bf16.msra.mxu0 0
    %2779 = vmatprep.subr.bf16.mxu0 0
    %2780 = vmatpush1.bf16.msra.mxu0 0
    %2781 = vmatprep.subr.bf16.mxu0 0
    %2782 = vmatpush1.bf16.msra.mxu0 0
    %2783 = vmatprep.subr.bf16.mxu0 0
    %2784 = vmatpush1.bf16.msra.mxu0 0
    %2785 = vmatprep.mubr.bf16.mxu0 0
    %2786 = vmatmul.mubr.bf16.gmra.mrb[0].mxu0 %v2751
    %v2787 = vpop.f32.mrb[0].mxu0
    %v2788 = vadd.f32 0.0, %v2787
    %v2789 = vpop.f32.mrb[0].mxu0
    %v2790 = vpop.f32.mrb[0].mxu0
    %v2791 = vpop.f32.mrb[0].mxu0
    %2792 = vdwg.mxu0
    %v2793 = vadd.f32 %v2517, %v2788
    %v2794 = vxor.u32 %v2793, 2147483648
    %v2795 = vmul.f32 %v2794, 1.442695
    %v2796 = vpow.pop %v2795
    %v2797 = vadd.f32 %v2796, 1.0
    %v2798 = vrcp.pop %v2797
    %v2799 = vmul.f32 1.0, %v2798
    %v2800 = vadd.f32 %v2788, %v1098
    %2802 = vrot.lane.b32.xlu0 %v2800, 64
    %v2803 = vpop.permute.xlu0 %2802
    %v2805 = vmul.f32 %v2799, %v2803
    %2807 = vrot.lane.b32.xlu0 %v2805, 64
    %v2808 = vpop.permute.xlu0 %2807
    %v2810 = vadd.f32 %v2517, %v2808
    %v2811 = vtanh.pop %v2810
    %v2812 = vsub.f32 1.0, %v2799
    %2814 = vrot.lane.b32.xlu0 %v2811, 96
    %v2815 = vpop.permute.xlu0 %2814
    %v2817 = vmul.f32 %v2812, %v2815
    %v2818 = vmul.f32 %v2799, %v2745
    %v2819 = vadd.f32 %v2817, %v2818
    %v2820 = vpack.c.bf16 %v2819, %v2819
    %2822 = vrot.lane.b32.xlu0 %v2820, 96
    %v2823 = vpop.permute.xlu0 %2822
    %v2825 = vsel %vm239, %v2823, 0
    %2827 = vmatprep.subr.bf16.mxu0 0
    %2828 = vmatpush1.bf16.msra.mxu0 %v1038
    %2829 = vmatprep.subr.bf16.mxu0 0
    %2830 = vmatpush1.bf16.msra.mxu0 %v1039
    %2831 = vmatprep.subr.bf16.mxu0 0
    %2832 = vmatpush1.bf16.msra.mxu0 0
    %2833 = vmatprep.subr.bf16.mxu0 0
    %2834 = vmatpush1.bf16.msra.mxu0 0
    %2835 = vmatprep.subr.bf16.mxu0 0
    %2836 = vmatpush1.bf16.msra.mxu0 0
    %2837 = vmatprep.subr.bf16.mxu0 0
    %2838 = vmatpush1.bf16.msra.mxu0 0
    %2839 = vmatprep.subr.bf16.mxu0 0
    %2840 = vmatpush1.bf16.msra.mxu0 0
    %2841 = vmatprep.subr.bf16.mxu0 0
    %2842 = vmatpush1.bf16.msra.mxu0 0
    %2843 = vmatprep.subr.bf16.mxu0 0
    %2844 = vmatpush1.bf16.msra.mxu0 0
    %2845 = vmatprep.subr.bf16.mxu0 0
    %2846 = vmatpush1.bf16.msra.mxu0 0
    %2847 = vmatprep.subr.bf16.mxu0 0
    %2848 = vmatpush1.bf16.msra.mxu0 0
    %2849 = vmatprep.subr.bf16.mxu0 0
    %2850 = vmatpush1.bf16.msra.mxu0 0
    %2851 = vmatprep.subr.bf16.mxu0 0
    %2852 = vmatpush1.bf16.msra.mxu0 0
    %2853 = vmatprep.subr.bf16.mxu0 0
    %2854 = vmatpush1.bf16.msra.mxu0 0
    %2855 = vmatprep.subr.bf16.mxu0 0
    %2856 = vmatpush1.bf16.msra.mxu0 0
    %2857 = vmatprep.subr.bf16.mxu0 0
    %2858 = vmatpush1.bf16.msra.mxu0 0
    %2859 = vmatprep.mubr.bf16.mxu0 0
    %2860 = vmatmul.mubr.bf16.gmra.mrb[0].mxu0 %v2825
    %v2861 = vpop.f32.mrb[0].mxu0
    %v2862 = vadd.f32 0.0, %v2861
    %v2863 = vpop.f32.mrb[0].mxu0
    %v2864 = vpop.f32.mrb[0].mxu0
    %v2865 = vpop.f32.mrb[0].mxu0
    %2866 = vdwg.mxu0
    %v2867 = vadd.f32 %v2506, %v2862
    %v2868 = vxor.u32 %v2867, 2147483648
    %v2869 = vmul.f32 %v2868, 1.442695
    %v2870 = vpow.pop %v2869
    %v2871 = vadd.f32 %v2870, 1.0
    %v2872 = vrcp.pop %v2871
    %v2873 = vmul.f32 1.0, %v2872
    %v2874 = vadd.f32 %v2862, %v1098
    %2876 = vrot.lane.b32.xlu0 %v2874, 64
    %v2877 = vpop.permute.xlu0 %2876
    %v2879 = vmul.f32 %v2873, %v2877
    %2881 = vrot.lane.b32.xlu0 %v2879, 64
    %v2882 = vpop.permute.xlu0 %2881
    %v2884 = vadd.f32 %v2506, %v2882
    %v2885 = vtanh.pop %v2884
    %v2886 = vsub.f32 1.0, %v2873
    %2888 = vrot.lane.b32.xlu0 %v2885, 96
    %v2889 = vpop.permute.xlu0 %2888
    %v2891 = vmul.f32 %v2886, %v2889
    %v2892 = vmul.f32 %v2873, %v2819
    %v2893 = vadd.f32 %v2891, %v2892
    %v2894 = vpack.c.bf16 %v2893, %v2893
    %2896 = vrot.lane.b32.xlu0 %v2894, 96
    %v2897 = vpop.permute.xlu0 %2896
    %v2899 = vsel %vm239, %v2897, 0
    %2901 = vmatprep.subr.bf16.mxu0 0
    %2902 = vmatpush1.bf16.msra.mxu0 %v1038
    %2903 = vmatprep.subr.bf16.mxu0 0
    %2904 = vmatpush1.bf16.msra.mxu0 %v1039
    %2905 = vmatprep.subr.bf16.mxu0 0
    %2906 = vmatpush1.bf16.msra.mxu0 0
    %2907 = vmatprep.subr.bf16.mxu0 0
    %2908 = vmatpush1.bf16.msra.mxu0 0
    %2909 = vmatprep.subr.bf16.mxu0 0
    %2910 = vmatpush1.bf16.msra.mxu0 0
    %2911 = vmatprep.subr.bf16.mxu0 0
    %2912 = vmatpush1.bf16.msra.mxu0 0
    %2913 = vmatprep.subr.bf16.mxu0 0
    %2914 = vmatpush1.bf16.msra.mxu0 0
    %2915 = vmatprep.subr.bf16.mxu0 0
    %2916 = vmatpush1.bf16.msra.mxu0 0
    %2917 = vmatprep.subr.bf16.mxu0 0
    %2918 = vmatpush1.bf16.msra.mxu0 0
    %2919 = vmatprep.subr.bf16.mxu0 0
    %2920 = vmatpush1.bf16.msra.mxu0 0
    %2921 = vmatprep.subr.bf16.mxu0 0
    %2922 = vmatpush1.bf16.msra.mxu0 0
    %2923 = vmatprep.subr.bf16.mxu0 0
    %2924 = vmatpush1.bf16.msra.mxu0 0
    %2925 = vmatprep.subr.bf16.mxu0 0
    %2926 = vmatpush1.bf16.msra.mxu0 0
    %2927 = vmatprep.subr.bf16.mxu0 0
    %2928 = vmatpush1.bf16.msra.mxu0 0
    %2929 = vmatprep.subr.bf16.mxu0 0
    %2930 = vmatpush1.bf16.msra.mxu0 0
    %2931 = vmatprep.subr.bf16.mxu0 0
    %2932 = vmatpush1.bf16.msra.mxu0 0
    %2933 = vmatprep.mubr.bf16.mxu0 0
    %2934 = vmatmul.mubr.bf16.gmra.mrb[0].mxu0 %v2899
    %v2935 = vpop.f32.mrb[0].mxu0
    %v2936 = vadd.f32 0.0, %v2935
    %v2937 = vpop.f32.mrb[0].mxu0
    %v2938 = vpop.f32.mrb[0].mxu0
    %v2939 = vpop.f32.mrb[0].mxu0
    %2940 = vdwg.mxu0
    %v2941 = vadd.f32 %v2518, %v2936
    %v2942 = vxor.u32 %v2941, 2147483648
    %v2943 = vmul.f32 %v2942, 1.442695
    %v2944 = vpow.pop %v2943
    %v2945 = vadd.f32 %v2944, 1.0
    %v2946 = vrcp.pop %v2945
    %v2947 = vmul.f32 1.0, %v2946
    %v2948 = vadd.f32 %v2936, %v1098
    %2950 = vrot.lane.b32.xlu0 %v2948, 64
    %v2951 = vpop.permute.xlu0 %2950
    %v2953 = vmul.f32 %v2947, %v2951
    %2955 = vrot.lane.b32.xlu0 %v2953, 64
    %v2956 = vpop.permute.xlu0 %2955
    %v2958 = vadd.f32 %v2518, %v2956
    %v2959 = vtanh.pop %v2958
    %v2960 = vsub.f32 1.0, %v2947
    %2962 = vrot.lane.b32.xlu0 %v2959, 96
    %v2963 = vpop.permute.xlu0 %2962
    %v2965 = vmul.f32 %v2960, %v2963
    %v2966 = vmul.f32 %v2947, %v2893
    %v2967 = vadd.f32 %v2965, %v2966
    %v2968 = vpack.c.bf16 %v2967, %v2967
    %2970 = vrot.lane.b32.xlu0 %v2968, 96
    %v2971 = vpop.permute.xlu0 %2970
    %v2973 = vsel %vm239, %v2971, 0
    %2975 = vmatprep.subr.bf16.mxu0 0
    %2976 = vmatpush1.bf16.msra.mxu0 %v1038
    %2977 = vmatprep.subr.bf16.mxu0 0
    %2978 = vmatpush1.bf16.msra.mxu0 %v1039
    %2979 = vmatprep.subr.bf16.mxu0 0
    %2980 = vmatpush1.bf16.msra.mxu0 0
    %2981 = vmatprep.subr.bf16.mxu0 0
    %2982 = vmatpush1.bf16.msra.mxu0 0
    %2983 = vmatprep.subr.bf16.mxu0 0
    %2984 = vmatpush1.bf16.msra.mxu0 0
    %2985 = vmatprep.subr.bf16.mxu0 0
    %2986 = vmatpush1.bf16.msra.mxu0 0
    %2987 = vmatprep.subr.bf16.mxu0 0
    %2988 = vmatpush1.bf16.msra.mxu0 0
    %2989 = vmatprep.subr.bf16.mxu0 0
    %2990 = vmatpush1.bf16.msra.mxu0 0
    %2991 = vmatprep.subr.bf16.mxu0 0
    %2992 = vmatpush1.bf16.msra.mxu0 0
    %2993 = vmatprep.subr.bf16.mxu0 0
    %2994 = vmatpush1.bf16.msra.mxu0 0
    %2995 = vmatprep.subr.bf16.mxu0 0
    %2996 = vmatpush1.bf16.msra.mxu0 0
    %2997 = vmatprep.subr.bf16.mxu0 0
    %2998 = vmatpush1.bf16.msra.mxu0 0
    %2999 = vmatprep.subr.bf16.mxu0 0
    %3000 = vmatpush1.bf16.msra.mxu0 0
    %3001 = vmatprep.subr.bf16.mxu0 0
    %3002 = vmatpush1.bf16.msra.mxu0 0
    %3003 = vmatprep.subr.bf16.mxu0 0
    %3004 = vmatpush1.bf16.msra.mxu0 0
    %3005 = vmatprep.subr.bf16.mxu0 0
    %3006 = vmatpush1.bf16.msra.mxu0 0
    %3007 = vmatprep.mubr.bf16.mxu0 0
    %3008 = vmatmul.mubr.bf16.gmra.mrb[0].mxu0 %v2973
    %v3009 = vpop.f32.mrb[0].mxu0
    %v3010 = vadd.f32 0.0, %v3009
    %v3011 = vpop.f32.mrb[0].mxu0
    %v3012 = vpop.f32.mrb[0].mxu0
    %v3013 = vpop.f32.mrb[0].mxu0
    %3014 = vdwg.mxu0
    %v3015 = vadd.f32 %v2509, %v3010
    %v3016 = vxor.u32 %v3015, 2147483648
    %v3017 = vmul.f32 %v3016, 1.442695
    %v3018 = vpow.pop %v3017
    %v3019 = vadd.f32 %v3018, 1.0
    %v3020 = vrcp.pop %v3019
    %v3021 = vmul.f32 1.0, %v3020
    %v3022 = vadd.f32 %v3010, %v1098
    %3024 = vrot.lane.b32.xlu0 %v3022, 64
    %v3025 = vpop.permute.xlu0 %3024
    %v3027 = vmul.f32 %v3021, %v3025
    %3029 = vrot.lane.b32.xlu0 %v3027, 64
    %v3030 = vpop.permute.xlu0 %3029
    %v3032 = vadd.f32 %v2509, %v3030
    %v3033 = vtanh.pop %v3032
    %v3034 = vsub.f32 1.0, %v3021
    %3036 = vrot.lane.b32.xlu0 %v3033, 96
    %v3037 = vpop.permute.xlu0 %3036
    %v3039 = vmul.f32 %v3034, %v3037
    %v3040 = vmul.f32 %v3021, %v2967
    %v3041 = vadd.f32 %v3039, %v3040
    %v3042 = vpack.c.bf16 %v3041, %v3041
    %3044 = vrot.lane.b32.xlu0 %v3042, 96
    %v3045 = vpop.permute.xlu0 %3044
    %v3047 = vsel %vm239, %v3045, 0
    %3049 = vmatprep.subr.bf16.mxu0 0
    %3050 = vmatpush1.bf16.msra.mxu0 %v1038
    %3051 = vmatprep.subr.bf16.mxu0 0
    %3052 = vmatpush1.bf16.msra.mxu0 %v1039
    %3053 = vmatprep.subr.bf16.mxu0 0
    %3054 = vmatpush1.bf16.msra.mxu0 0
    %3055 = vmatprep.subr.bf16.mxu0 0
    %3056 = vmatpush1.bf16.msra.mxu0 0
    %3057 = vmatprep.subr.bf16.mxu0 0
    %3058 = vmatpush1.bf16.msra.mxu0 0
    %3059 = vmatprep.subr.bf16.mxu0 0
    %3060 = vmatpush1.bf16.msra.mxu0 0
    %3061 = vmatprep.subr.bf16.mxu0 0
    %3062 = vmatpush1.bf16.msra.mxu0 0
    %3063 = vmatprep.subr.bf16.mxu0 0
    %3064 = vmatpush1.bf16.msra.mxu0 0
    %3065 = vmatprep.subr.bf16.mxu0 0
    %3066 = vmatpush1.bf16.msra.mxu0 0
    %3067 = vmatprep.subr.bf16.mxu0 0
    %3068 = vmatpush1.bf16.msra.mxu0 0
    %3069 = vmatprep.subr.bf16.mxu0 0
    %3070 = vmatpush1.bf16.msra.mxu0 0
    %3071 = vmatprep.subr.bf16.mxu0 0
    %3072 = vmatpush1.bf16.msra.mxu0 0
    %3073 = vmatprep.subr.bf16.mxu0 0
    %3074 = vmatpush1.bf16.msra.mxu0 0
    %3075 = vmatprep.subr.bf16.mxu0 0
    %3076 = vmatpush1.bf16.msra.mxu0 0
    %3077 = vmatprep.subr.bf16.mxu0 0
    %3078 = vmatpush1.bf16.msra.mxu0 0
    %3079 = vmatprep.subr.bf16.mxu0 0
    %3080 = vmatpush1.bf16.msra.mxu0 0
    %3081 = vmatprep.mubr.bf16.mxu0 0
    %3082 = vmatmul.mubr.bf16.gmra.mrb[0].mxu0 %v3047
    %v3083 = vpop.f32.mrb[0].mxu0
    %v3084 = vadd.f32 0.0, %v3083
    %v3085 = vpop.f32.mrb[0].mxu0
    %v3086 = vpop.f32.mrb[0].mxu0
    %v3087 = vpop.f32.mrb[0].mxu0
    %3088 = vdwg.mxu0
    %v3089 = vadd.f32 %v2519, %v3084
    %v3090 = vxor.u32 %v3089, 2147483648
    %v3091 = vmul.f32 %v3090, 1.442695
    %v3092 = vpow.pop %v3091
    %v3093 = vadd.f32 %v3092, 1.0
    %v3094 = vrcp.pop %v3093
    %v3095 = vmul.f32 1.0, %v3094
    %v3096 = vadd.f32 %v3084, %v1098
    %3098 = vrot.lane.b32.xlu0 %v3096, 64
    %v3099 = vpop.permute.xlu0 %3098
    %v3101 = vmul.f32 %v3095, %v3099
    %3103 = vrot.lane.b32.xlu0 %v3101, 64
    %v3104 = vpop.permute.xlu0 %3103
    %v3106 = vadd.f32 %v2519, %v3104
    %v3107 = vtanh.pop %v3106
    %v3108 = vsub.f32 1.0, %v3095
    %3110 = vrot.lane.b32.xlu0 %v3107, 96
    %v3111 = vpop.permute.xlu0 %3110
    %v3113 = vmul.f32 %v3108, %v3111
    %v3114 = vmul.f32 %v3095, %v3041
    %v3115 = vadd.f32 %v3113, %v3114
    %3116 = vrot.lane.b32.xlu0 %v2432, 96
    %v3117 = vpop.permute.xlu0 %3116
    %vm3119 = vcmask 257024
    %3120 = vst.msk [vmem:[#allocation11] sm:$0xf] %vm3119, %v3117
    %3122 = vrot.lane.b32.xlu0 %v3115, 96
    %v3123 = vpop.permute.xlu0 %3122
    %s3125 = scalar_lea.vmem [#allocation11], 4
    %3126 = vst.msk [vmem:[%s3125] sm:$0xf] %vm3119, %v3123
    %v3127 = vld [vmem:[%s10] sm:$0x1]
    %v3128 = vld [vmem:[%s10 + $0x1] sm:$0x1]
    %v3129 = vld [vmem:[%s10 + $0x2] sm:$0x1]
    %v3130 = vld [vmem:[%s10 + $0x3] sm:$0x1]
    %v3131 = vld [vmem:[%s10 + $0x4] sm:$0x1]
    %v3132 = vld [vmem:[%s10 + $0x5] sm:$0x1]
    %v3133 = vld [vmem:[%s10 + $0x6] sm:$0x1]
    %v3134 = vld [vmem:[%s10 + $0x7] sm:$0x1]
    %v3135 = vtanh.pop %v2597
    %v3137 = vlaneseq
    %v3138 = vshrl.u32 %v3137, 7
    %v3139 = vsub.s32 0, %v3138
    %v3140 = vrot.slane %v3127, %v3139
    %3141 = vrot.lane.b32.xlu0 %v3140, 32
    %v3142 = vpop.permute.xlu0 %3141
    %v3144 = vmul.f32 %v3135, %v3142
    %v3145 = vadd.f32 %v3144, 0.0
    %v3146 = vtanh.pop %v2671
    %v3148 = vlaneseq
    %v3149 = vshrl.u32 %v3148, 7
    %v3150 = vsub.s32 0, %v3149
    %v3151 = vrot.slane %v3128, %v3150
    %3152 = vrot.lane.b32.xlu0 %v3151, 32
    %v3153 = vpop.permute.xlu0 %3152
    %v3155 = vmul.f32 %v3146, %v3153
    %v3156 = vadd.f32 %v3145, %v3155
    %v3157 = vtanh.pop %v2745
    %v3159 = vlaneseq
    %v3160 = vshrl.u32 %v3159, 7
    %v3161 = vsub.s32 0, %v3160
    %v3162 = vrot.slane %v3129, %v3161
    %3163 = vrot.lane.b32.xlu0 %v3162, 32
    %v3164 = vpop.permute.xlu0 %3163
    %v3166 = vmul.f32 %v3157, %v3164
    %v3167 = vadd.f32 %v3156, %v3166
    %v3168 = vtanh.pop %v2819
    %v3170 = vlaneseq
    %v3171 = vshrl.u32 %v3170, 7
    %v3172 = vsub.s32 0, %v3171
    %v3173 = vrot.slane %v3130, %v3172
    %3174 = vrot.lane.b32.xlu0 %v3173, 32
    %v3175 = vpop.permute.xlu0 %3174
    %v3177 = vmul.f32 %v3168, %v3175
    %v3178 = vadd.f32 %v3167, %v3177
    %v3179 = vtanh.pop %v2893
    %v3181 = vlaneseq
    %v3182 = vshrl.u32 %v3181, 7
    %v3183 = vsub.s32 0, %v3182
    %v3184 = vrot.slane %v3131, %v3183
    %3185 = vrot.lane.b32.xlu0 %v3184, 32
    %v3186 = vpop.permute.xlu0 %3185
    %v3188 = vmul.f32 %v3179, %v3186
    %v3189 = vadd.f32 %v3178, %v3188
    %v3190 = vtanh.pop %v2967
    %v3192 = vlaneseq
    %v3193 = vshrl.u32 %v3192, 7
    %v3194 = vsub.s32 0, %v3193
    %v3195 = vrot.slane %v3132, %v3194
    %3196 = vrot.lane.b32.xlu0 %v3195, 32
    %v3197 = vpop.permute.xlu0 %3196
    %v3199 = vmul.f32 %v3190, %v3197
    %v3200 = vadd.f32 %v3189, %v3199
    %v3201 = vtanh.pop %v3041
    %v3203 = vlaneseq
    %v3204 = vshrl.u32 %v3203, 7
    %v3205 = vsub.s32 0, %v3204
    %v3206 = vrot.slane %v3133, %v3205
    %3207 = vrot.lane.b32.xlu0 %v3206, 32
    %v3208 = vpop.permute.xlu0 %3207
    %v3210 = vmul.f32 %v3201, %v3208
    %v3211 = vadd.f32 %v3200, %v3210
    %v3212 = vtanh.pop %v3115
    %v3214 = vlaneseq
    %v3215 = vshrl.u32 %v3214, 7
    %v3216 = vsub.s32 0, %v3215
    %v3217 = vrot.slane %v3134, %v3216
    %3218 = vrot.lane.b32.xlu0 %v3217, 32
    %v3219 = vpop.permute.xlu0 %3218
    %v3221 = vmul.f32 %v3212, %v3219
    %v3222 = vadd.f32 %v3211, %v3221
    %3224 = vrot.lane.b32.xlu0 %v3222, 96
    %v3225 = vpop.permute.xlu0 %3224
    %v3227 = vsel %vm3119, %v3225, 0.0
    %3228 = vadd.xlane.f32.xlu0 %v3227
    %v3229 = vpop.xlane.xlu0 %3228
    %v3230 = vld [vmem:[#allocation2] sm:$0x1]
    %v3232 = vlaneseq
    %v3233 = vshrl.u32 %v3232, 7
    %v3234 = vsub.s32 0, %v3233
    %v3235 = vrot.slane %v3230, %v3234
    %v3237 = vadd.f32 %v3229, %v3235
    %vm3238 = vcmask 3072
    %3239 = vst.msk [vmem:[%s12] sm:$0xf] %vm3238, %v3237
    // Predicated region
    $region66: #{embedder_forward.1} parent=1 // pred_check
      _
    $region67: #{embedder_forward.1} parent=1 // pred_check_branch
      %3241 = sbr.rel (0) target = $region69
    $region68: #{embedder_forward.1} parent=1 // pred_region
      _
    $region69: #{embedder_forward.1} parent=1 // pred_fallthru
      _
    // Predicated region
    $region70: #{embedder_forward.1} parent=1 // pred_check
      _
    $region71: #{embedder_forward.1} parent=1 // pred_check_branch
      %3243 = sbr.rel (0) target = $region73
    $region72: #{embedder_forward.1} parent=1 // pred_region
      %s3245 = ssub.s32 128, 128
      %3246 = vsyncadd [#allocation5], %s3245
      %s3247 = sshll.u32 [#allocation11], 4
      %s3248 = int_to_ptr.vmem [resolvable:$true] %s3247
      %3253 = dma.vmem_to_hbm [thread:$0]  %s3248, 128, %s13, [#allocation5], 64, 64, 4
    $region73: #{embedder_forward.1} parent=1 // pred_fallthru
      _
    // Predicated region
    $region74: #{embedder_forward.1} parent=1 // pred_check
      _
    $region75: #{embedder_forward.1} parent=1 // pred_check_branch
      %3255 = sbr.rel (0) target = $region77
    $region76: #{embedder_forward.1} parent=1 // pred_region
      _
    $region77: #{embedder_forward.1} parent=1 // pred_fallthru
      _
    // Predicated region
    $region78: #{embedder_forward.1} parent=1 // pred_check
      _
    $region79: #{embedder_forward.1} parent=1 // pred_check_branch
      %3257 = sbr.rel (0) target = $region81
    $region80: #{embedder_forward.1} parent=1 // pred_region
      %3258 = dma.done [#allocation5], 128
    $region81: #{embedder_forward.1} parent=1 // pred_fallthru
      _
    %3259 = vsyncpa [#allocation4], 1
    %3260 = vsyncpa [#allocation7], 1
    %3261 = vsyncpa [#allocation10], 1
    %3262 = vsyncpa [#allocation5], 1

</llo_original>
